<compile_context>
chip_gen: v6e
topology: v6e:2x2x1
jax: 0.10.0
libtpu: 0.0.40
codegen_flags: <defaults>
</compile_context>

<pallas_src>
import functools

import jax
import jax.numpy as jnp
from jax.experimental import pallas as pl
from jax.experimental.pallas import tpu as pltpu

CPAD = 128  # lane width: all feature channels are padded to this


def _round_up(x, m):
    return ((x + m - 1) // m) * m


def _pad_last(a, to):
    return jnp.pad(a, [(0, 0)] * (a.ndim - 1) + [(0, to - a.shape[-1])])


# ----------------------------- Pallas kernels ------------------------------

def _conv3x3_bn_relu_kernel(x_ref, w_ref, s_ref, b_ref, o_ref, *, pool):
    # x_ref: (1, H, W, C)    NHWC activation tile, C = CPAD (lane-dense), f32
    # w_ref: (9*C, Cout)     bf16 weights, row order (ky, kx, cin)
    # s_ref, b_ref: (1, Cout) folded BatchNorm scale / bias (f32)
    # o_ref: (1, H, W, Cout) or (1, H//2, W//2, Cout) when pool=True
    _, H, W, C = x_ref.shape
    Cout = o_ref.shape[-1]
    x = x_ref[0]                                             # (H, W, C) f32

    # Fold the 3 kx taps into the channel (lane) axis.  Edge handling replaces
    # the wrapper-side jnp.pad halo (zero columns built in-register).
    zcol = jnp.zeros((H, 1, C), x.dtype)
    xl = jnp.concatenate([zcol, x[:, :W - 1, :]], axis=1)    # column w-1 (kx=0)
    xr = jnp.concatenate([x[:, 1:, :], zcol], axis=1)        # column w+1 (kx=2)
    xw = jnp.concatenate([xl, x, xr], axis=-1)               # (H, W, 3C)

    # Fold the 3 ky taps as well (H slices are major-dim -> cheap).
    zrow = jnp.zeros((1, W, 3 * C), x.dtype)
    xu = jnp.concatenate([zrow, xw[:H - 1]], axis=0)         # row h-1 (ky=0)
    xd = jnp.concatenate([xw[1:], zrow], axis=0)             # row h+1 (ky=2)
    xfull = jnp.concatenate([xu, xw, xd], axis=-1)           # (H, W, 9C)

    # One MXU contraction with K = 9*C (bf16 operands, f32 accumulation).
    patches = xfull.reshape(H * W, 9 * C).astype(jnp.bfloat16)
    acc = jnp.dot(patches, w_ref[...], preferred_element_type=jnp.float32)

    # Fused inference BatchNorm + ReLU epilogue (kept in f32 for v5e VPU).
    y = jnp.maximum(acc * s_ref[...] + b_ref[...], 0.0)
    y = y.reshape(H, W, Cout)

    if pool:  # fused 2x2/2 maxpool epilogue
        y = y.reshape(H, W // 2, 2, Cout).max(axis=2)
        y = y.reshape(H // 2, 2, W // 2, Cout).max(axis=1)

    o_ref[0] = y.astype(o_ref.dtype)


def conv3x3_bn_relu(x_nhwc, w, scale, bias, pool=False):
    N, H, W, C = x_nhwc.shape
    Cout = w.shape[-1]
    Ho, Wo = (H // 2, W // 2) if pool else (H, W)
    # TODO(synk): for real VGG-sized feature maps, add a row-tiled grid with an
    # H-halo so tiles stay within v7x's 64 MiB VMEM; whole-image blocks are
    # fine at these tiny shapes.
    return pl.pallas_call(
        functools.partial(_conv3x3_bn_relu_kernel, pool=pool),
        out_shape=jax.ShapeDtypeStruct((N, Ho, Wo, Cout), jnp.float32),
        grid=(N,),
        in_specs=[
            pl.BlockSpec((1, H, W, C), lambda n: (n, 0, 0, 0)),
            pl.BlockSpec((9 * C, Cout), lambda n: (0, 0)),
            pl.BlockSpec((1, Cout), lambda n: (0, 0)),
            pl.BlockSpec((1, Cout), lambda n: (0, 0)),
        ],
        out_specs=pl.BlockSpec((1, Ho, Wo, Cout), lambda n: (n, 0, 0, 0)),
        compiler_params=pltpu.CompilerParams(
            dimension_semantics=("parallel",)),
    )(x_nhwc, w, scale, bias)


def _maxpool2x2_kernel(x_ref, o_ref):
    # Fallback (unfused) maxpool: in-kernel reshape+max, no wrapper transposes.
    _, H, W, C = x_ref.shape
    y = x_ref[0]
    y = y.reshape(H, W // 2, 2, C).max(axis=2)
    y = y.reshape(H // 2, 2, W // 2, C).max(axis=1)
    o_ref[0] = y


def maxpool2x2(x_nhwc):
    N, H, W, C = x_nhwc.shape
    return pl.pallas_call(
        _maxpool2x2_kernel,
        out_shape=jax.ShapeDtypeStruct((N, H // 2, W // 2, C), jnp.float32),
        grid=(N,),
        in_specs=[pl.BlockSpec((1, H, W, C), lambda n: (n, 0, 0, 0))],
        out_specs=pl.BlockSpec((1, H // 2, W // 2, C), lambda n: (n, 0, 0, 0)),
        compiler_params=pltpu.CompilerParams(
            dimension_semantics=("parallel",)),
    )(x_nhwc)


def _linear_kernel(x_ref, w_ref, b_ref, o_ref, acc_ref, *, relu):
    k = pl.program_id(0)

    @pl.when(k == 0)
    def _():
        acc_ref[...] = jnp.zeros_like(acc_ref)

    acc_ref[...] += jnp.dot(x_ref[...].astype(jnp.bfloat16), w_ref[...],
                            preferred_element_type=jnp.float32)

    @pl.when(k == pl.num_programs(0) - 1)
    def _():
        y = acc_ref[...] + b_ref[...]
        if relu:
            y = jnp.maximum(y, 0.0)
        o_ref[...] = y.astype(o_ref.dtype)


def linear(x, w, b, relu=False, tk=512):
    # K-tiled linear: f32 VMEM accumulator, bf16 MXU operands, fused bias/ReLU.
    N, K = x.shape
    Dout = w.shape[1]
    tk = min(tk, K)
    assert K % tk == 0
    return pl.pallas_call(
        functools.partial(_linear_kernel, relu=relu),
        out_shape=jax.ShapeDtypeStruct((N, Dout), jnp.float32),
        grid=(K // tk,),
        in_specs=[
            pl.BlockSpec((N, tk), lambda k: (0, k)),
            pl.BlockSpec((tk, Dout), lambda k: (k, 0)),
            pl.BlockSpec((1, Dout), lambda k: (0, 0)),
        ],
        out_specs=pl.BlockSpec((N, Dout), lambda k: (0, 0)),
        scratch_shapes=[pltpu.VMEM((N, Dout), jnp.float32)],
        compiler_params=pltpu.CompilerParams(
            dimension_semantics=("arbitrary",)),
    )(x, w, b.reshape(1, Dout))


def _relu_kernel(x_ref, o_ref):
    o_ref[...] = jnp.maximum(x_ref[...], 0.0)


def relu_standalone(x):  # fallback only; ReLUs after Linear are fused
    return pl.pallas_call(
        _relu_kernel, out_shape=jax.ShapeDtypeStruct(x.shape, x.dtype))(x)


# ------------------------- VGG params / forward ----------------------------

CFG = {
    # small synthetic config consistent with the module's _make_layers
    "TINY": {"features": [8, "M", 16, "M"], "classifier": [32, "R", 10]},
}


def init_params(key, input_dims, cfg, eps=1e-5):
    """Deterministic synthetic parameters (shapes follow _make_layers),
    pre-padded / permuted once on the host for the lane-dense kernels."""
    in_c, in_w, in_h = input_dims
    feats = []
    k = key
    for item in cfg["features"]:
        if item == "M":
            feats.append({"type": "maxpool"})
            in_w //= 2
            in_h //= 2
        else:
            out_c = int(item)
            k, kw, kg, kb, km, kv = jax.random.split(k, 6)
            # conv weight (3,3,Cin,Cout) == torch (Cout,Cin,3,3).permute(2,3,1,0)
            w = 0.1 * jax.random.normal(kw, (3, 3, in_c, out_c), jnp.float32)
            gamma = 1.0 + 0.1 * jax.random.normal(kg, (out_c,), jnp.float32)
            beta = 0.05 * jax.random.normal(kb, (out_c,), jnp.float32)
            rmean = 0.02 * jax.random.normal(km, (out_c,), jnp.float32)
            rvar = 1.0 + 0.1 * jnp.abs(jax.random.normal(kv, (out_c,), jnp.float32))
            scale = gamma / jnp.sqrt(rvar + eps)      # folded (inference) BN
            bias = beta - rmean * scale
            # zero-pad channels to CPAD; padded out-channels have scale=bias=0
            # so they stay exactly zero through ReLU and downstream layers.
            wp = jnp.zeros((3, 3, CPAD, CPAD), jnp.float32)
            wp = wp.at[:, :, :in_c, :out_c].set(w)
            feats.append({
                "type": "conv_bn_relu",
                "w": wp.reshape(9 * CPAD, CPAD).astype(jnp.bfloat16),
                "scale": _pad_last(scale, CPAD).reshape(1, CPAD),
                "bias": _pad_last(bias, CPAD).reshape(1, CPAD),
            })
            in_c = out_c
    # nn.AvgPool2d(kernel_size=1, stride=1) appended by the module is identity.

    cls = []
    din_real = int(in_c * in_w * in_h)      # torch linear_input_dims (CHW order)
    din_pad = in_h * in_w * CPAD            # our NHWC-padded flatten width
    first_linear = True
    num_classes = None
    for item in cfg["classifier"]:
        if item == "R":
            cls.append({"type": "relu"})
        elif item == "D":
            # TODO(synk): nn.Dropout treated as identity (inference semantics)
            cls.append({"type": "identity"})
        else:
            dout = int(item)
            dout_pad = _round_up(dout, 128)
            k, kw, kb = jax.random.split(k, 3)
            # weight stored as (Din, Dout) == torch Linear weight (Dout, Din).T
            w = 0.05 * jax.random.normal(kw, (din_real, dout), jnp.float32)
            b = 0.05 * jax.random.normal(kb, (dout,), jnp.float32)
            if first_linear:
                # One-time host-side row permutation: torch flattens NCHW as
                # (c, h, w); we flatten NHWC-padded as (h, w, c_pad).  Reorder
                # + zero-pad the weight rows so no runtime transpose is needed.
                w = w.reshape(in_c, in_h, in_w, dout)
                w = jnp.transpose(w, (1, 2, 0, 3))            # (h, w, c, dout)
                w = jnp.pad(w, ((0, 0), (0, 0), (0, CPAD - in_c), (0, 0)))
                w = w.reshape(in_h * in_w * CPAD, dout)
                first_linear = False
            wpad = jnp.zeros((din_pad, dout_pad), jnp.float32)
            wpad = wpad.at[:w.shape[0], :dout].set(w)
            cls.append({"type": "linear",
                        "w": wpad.astype(jnp.bfloat16),
                        "b": _pad_last(b, dout_pad)})
            din_real = dout
            din_pad = dout_pad
            num_classes = dout
    return {"features": feats, "classifier": cls,
            "feat_out_dims": (in_c, in_h, in_w), "num_classes": num_classes}


def vgg_forward(params, x_nchw):
    """Mirrors VGG.forward with mode=None: returns (out, [f0], None)."""
    x = jnp.transpose(x_nchw, (0, 2, 3, 1))       # NCHW -> NHWC for kernels
    x = _pad_last(x, CPAD)                        # one-time channel pad (tiny)

    feats = params["features"]
    i = 0
    while i < len(feats):
        layer = feats[i]
        if layer["type"] == "conv_bn_relu":
            fuse_pool = (i + 1 < len(feats) and feats[i + 1]["type"] == "maxpool")
            x = conv3x3_bn_relu(x, layer["w"], layer["scale"], layer["bias"],
                                pool=fuse_pool)
            i += 2 if fuse_pool else 1
        else:  # standalone maxpool (not hit when fused with a preceding conv)
            x = maxpool2x2(x)
            i += 1

    # With this small cfg, features[:44] covers all feature layers, so f0 is
    # the final feature map (same slicing semantics as the torch module).
    c_real, _, _ = params["feat_out_dims"]
    f0 = jnp.transpose(x[..., :c_real], (0, 3, 1, 2))   # NCHW view for return

    # Classifier path flattens NHWC-padded directly (weight rows pre-permuted).
    out = x.reshape(x.shape[0], -1)
    cls = params["classifier"]
    j = 0
    while j < len(cls):
        layer = cls[j]
        if layer["type"] == "linear":
            fuse_relu = (j + 1 < len(cls) and cls[j + 1]["type"] == "relu")
            out = linear(out, layer["w"], layer["b"], relu=fuse_relu)
            j += 2 if fuse_relu else 1
        elif layer["type"] == "relu":
            out = relu_standalone(out)
            j += 1
        else:  # identity (Dropout, inference)
            j += 1

    out = out[:, :params["num_classes"]]          # strip lane padding of logits
    return out, [f0], None


# ---------------------------------- main ------------------------------------

if __name__ == "__main__":
    key = jax.random.PRNGKey(0)
    kp, kx = jax.random.split(key)

    input_dims = (4, 16, 16)                      # (C, W, H) as in the module
    params = init_params(kp, input_dims, CFG["TINY"])

    x = jax.random.normal(kx, (2, 4, 16, 16), dtype=jnp.float32)  # NCHW input

    out, feats, grad_out = vgg_forward(params, x)
    jax.block_until_ready(out)
    jax.block_until_ready(feats[0])

    assert out.shape == (2, 10)
    assert feats[0].shape == (2, 16, 4, 4)
    print("KERNEL_OK")
</pallas_src>

<mosaic_0001>
module attributes {stable_mosaic.version = 11 : i64} {
  func.func @_conv3x3_bn_relu_kernel(%arg0: i32, %arg1: memref<1x16x16x128xf32, #tpu.memory_space<vmem>>, %arg2: memref<1152x128xbf16, #tpu.memory_space<vmem>>, %arg3: memref<1x128xf32, #tpu.memory_space<vmem>>, %arg4: memref<1x128xf32, #tpu.memory_space<vmem>>, %arg5: memref<1x8x8x128xf32, #tpu.memory_space<vmem>>) attributes {dimension_semantics = [#tpu.dimension_semantics<parallel>], iteration_bounds = array<i64: 2>, scalar_prefetch = 0 : i64, scratch_operands = 0 : i64, tpu.core_type = #tpu.core_type<tc>, window_params = [{transform_indices = @transform_0, window_bounds = array<i64: 1, 16, 16, 128>}, {pipeline_mode = #tpu.pipeline_mode<synchronous>, transform_indices = @transform_1, window_bounds = array<i64: 1152, 128>}, {pipeline_mode = #tpu.pipeline_mode<synchronous>, transform_indices = @transform_2, window_bounds = array<i64: 1, 128>}, {pipeline_mode = #tpu.pipeline_mode<synchronous>, transform_indices = @transform_3, window_bounds = array<i64: 1, 128>}, {transform_indices = @transform_4, window_bounds = array<i64: 1, 8, 8, 128>}]} {
    %c0 = arith.constant 0 : index
    %c0_0 = arith.constant 0 : index
    %c0_1 = arith.constant 0 : index
    %c0_2 = arith.constant 0 : index
    %0 = vector.load %arg1[%c0, %c0_0, %c0_1, %c0_2] : memref<1x16x16x128xf32, #tpu.memory_space<vmem>>, vector<1x16x16x128xf32>
    %1 = vector.shape_cast %0 : vector<1x16x16x128xf32> to vector<16x16x128xf32>
    %cst = arith.constant 0.000000e+00 : f32
    %2 = vector.broadcast %cst : f32 to vector<16x1x128xf32>
    %3 = vector.extract_strided_slice %1 {offsets = [0, 0, 0], sizes = [16, 15, 128], strides = [1, 1, 1]} : vector<16x16x128xf32> to vector<16x15x128xf32>
    %4 = tpu.concatenate %2, %3 in 1 : vector<16x1x128xf32>, vector<16x15x128xf32> -> vector<16x16x128xf32>
    %5 = vector.extract_strided_slice %1 {offsets = [0, 1, 0], sizes = [16, 15, 128], strides = [1, 1, 1]} : vector<16x16x128xf32> to vector<16x15x128xf32>
    %6 = tpu.concatenate %5, %2 in 1 : vector<16x15x128xf32>, vector<16x1x128xf32> -> vector<16x16x128xf32>
    %7 = tpu.concatenate %4, %1, %6 in 2 : vector<16x16x128xf32>, vector<16x16x128xf32>, vector<16x16x128xf32> -> vector<16x16x384xf32>
    %cst_3 = arith.constant 0.000000e+00 : f32
    %8 = vector.broadcast %cst_3 : f32 to vector<1x16x384xf32>
    %9 = vector.extract_strided_slice %7 {offsets = [0, 0, 0], sizes = [15, 16, 384], strides = [1, 1, 1]} : vector<16x16x384xf32> to vector<15x16x384xf32>
    %10 = tpu.concatenate %8, %9 in 0 : vector<1x16x384xf32>, vector<15x16x384xf32> -> vector<16x16x384xf32>
    %11 = vector.extract_strided_slice %7 {offsets = [1, 0, 0], sizes = [15, 16, 384], strides = [1, 1, 1]} : vector<16x16x384xf32> to vector<15x16x384xf32>
    %12 = tpu.concatenate %11, %8 in 0 : vector<15x16x384xf32>, vector<1x16x384xf32> -> vector<16x16x384xf32>
    %13 = tpu.concatenate %10, %7, %12 in 2 : vector<16x16x384xf32>, vector<16x16x384xf32>, vector<16x16x384xf32> -> vector<16x16x1152xf32>
    %14 = vector.shape_cast %13 : vector<16x16x1152xf32> to vector<256x1152xf32>
    %15 = arith.truncf %14 : vector<256x1152xf32> to vector<256x1152xbf16>
    %c0_4 = arith.constant 0 : index
    %c0_5 = arith.constant 0 : index
    %16 = vector.load %arg2[%c0_4, %c0_5] : memref<1152x128xbf16, #tpu.memory_space<vmem>>, vector<1152x128xbf16>
    %cst_6 = arith.constant dense<0.000000e+00> : vector<256x128xf32>
    %17 = tpu.matmul %15, %16, %cst_6 {dimension_numbers = #tpu.dot_dimension_numbers<[1], [0], [0], [1], [0, 0, 1, 1], [], []>} : vector<256x1152xbf16>, vector<1152x128xbf16>, vector<256x128xf32> -> vector<256x128xf32>
    %c0_7 = arith.constant 0 : index
    %c0_8 = arith.constant 0 : index
    %18 = vector.load %arg3[%c0_7, %c0_8] : memref<1x128xf32, #tpu.memory_space<vmem>>, vector<1x128xf32>
    %19 = vector.broadcast %18 : vector<1x128xf32> to vector<256x128xf32>
    %20 = arith.mulf %17, %19 : vector<256x128xf32>
    %c0_9 = arith.constant 0 : index
    %c0_10 = arith.constant 0 : index
    %21 = vector.load %arg4[%c0_9, %c0_10] : memref<1x128xf32, #tpu.memory_space<vmem>>, vector<1x128xf32>
    %22 = vector.broadcast %21 : vector<1x128xf32> to vector<256x128xf32>
    %23 = arith.addf %20, %22 : vector<256x128xf32>
    %cst_11 = arith.constant 0.000000e+00 : f32
    %24 = vector.broadcast %cst_11 : f32 to vector<256x128xf32>
    %25 = arith.maximumf %23, %24 : vector<256x128xf32>
    %26 = vector.shape_cast %25 : vector<256x128xf32> to vector<16x16x128xf32>
    %27 = vector.shape_cast %26 : vector<16x16x128xf32> to vector<16x8x2x128xf32>
    %cst_12 = arith.constant dense<0xFF800000> : vector<16x8x128xf32>
    %28 = vector.multi_reduction <maximumf>, %27, %cst_12 [2] : vector<16x8x2x128xf32> to vector<16x8x128xf32>
    %29 = vector.shape_cast %28 : vector<16x8x128xf32> to vector<8x2x8x128xf32>
    %cst_13 = arith.constant dense<0xFF800000> : vector<8x8x128xf32>
    %30 = vector.multi_reduction <maximumf>, %29, %cst_13 [1] : vector<8x2x8x128xf32> to vector<8x8x128xf32>
    %c0_14 = arith.constant 0 : index
    %c0_15 = arith.constant 0 : index
    %c0_16 = arith.constant 0 : index
    %c0_17 = arith.constant 0 : index
    %31 = vector.load %arg5[%c0_14, %c0_15, %c0_16, %c0_17] : memref<1x8x8x128xf32, #tpu.memory_space<vmem>>, vector<1x8x8x128xf32>
    %32 = vector.shape_cast %31 : vector<1x8x8x128xf32> to vector<8x8x128xf32>
    %33 = vector.shape_cast %30 : vector<8x8x128xf32> to vector<1x8x8x128xf32>
    tpu.vector_store %arg5[%c0_14, %c0_15, %c0_16, %c0_17], %33 {strides = array<i32>} : memref<1x8x8x128xf32, #tpu.memory_space<vmem>>, vector<1x8x8x128xf32>,
    return
  }
  func.func @transform_0(%arg0: i32) -> (i32, i32, i32, i32) {
    %c0_i32 = arith.constant 0 : i32
    %c0_i32_0 = arith.constant 0 : i32
    %c0_i32_1 = arith.constant 0 : i32
    %c0_i32_2 = arith.constant 0 : i32
    return %arg0, %c0_i32, %c0_i32_0, %c0_i32_1 : i32, i32, i32, i32
  }
  func.func @transform_1(%arg0: i32) -> (i32, i32) {
    %c0_i32 = arith.constant 0 : i32
    %c0_i32_0 = arith.constant 0 : i32
    %c0_i32_1 = arith.constant 0 : i32
    return %c0_i32, %c0_i32_0 : i32, i32
  }
  func.func @transform_2(%arg0: i32) -> (i32, i32) {
    %c0_i32 = arith.constant 0 : i32
    %c0_i32_0 = arith.constant 0 : i32
    %c0_i32_1 = arith.constant 0 : i32
    return %c0_i32, %c0_i32_0 : i32, i32
  }
  func.func @transform_3(%arg0: i32) -> (i32, i32) {
    %c0_i32 = arith.constant 0 : i32
    %c0_i32_0 = arith.constant 0 : i32
    %c0_i32_1 = arith.constant 0 : i32
    return %c0_i32, %c0_i32_0 : i32, i32
  }
  func.func @transform_4(%arg0: i32) -> (i32, i32, i32, i32) {
    %c0_i32 = arith.constant 0 : i32
    %c0_i32_0 = arith.constant 0 : i32
    %c0_i32_1 = arith.constant 0 : i32
    %c0_i32_2 = arith.constant 0 : i32
    return %arg0, %c0_i32, %c0_i32_0, %c0_i32_1 : i32, i32, i32, i32
  }
}

</mosaic_0001>

<llo_original>
// kernel: tpu_custom_call.1
$region0: #{tpu_custom_call.1}
  #allocation0 [shape = 'u32[]', space=smem, size = 0x4, offset = 0x4, fixed_abs, tag = 'smem constant byte address 0x4 - core index']
  #allocation1 [shape = 'u32[144,128]{1,0:T(1,128)}', space=vmem, size = 0x12000, scoped, tag = 'internal scratch']
  %s0 = inlined_call_operand.hbm [shape: f32[2,16,16,128], index: 0, kind: input, shape index: {}]
  %s1 = inlined_call_operand.hbm [shape: bf16[1152,128], index: 1, kind: input, shape index: {}]
  %s2 = inlined_call_operand.vmem [shape: f32[1,128], index: 2, kind: input, shape index: {}]
  %s3 = inlined_call_operand.vmem [shape: f32[1,128], index: 3, kind: input, shape index: {}]
  %s4 = inlined_call_operand.hbm [shape: f32[2,8,8,128], index: 4, kind: output, shape index: {}]
  %s5 = sld [smem:[#allocation0]]
  $region57: #{tpu_custom_call.1} parent=0
    _
  %s7 = ssub.s32 1, %s5
  %s8 = scalar_select 0, %s7, %s5
  $region1: #{tpu_custom_call.1} parent=0
    #allocation2 [shape = 'u8[262144]{0}', space=vmem, size = 0x40000, scoped, tag = 'input window, operand 0']
    #allocation3 [shape = 's32[2]{0}', space=sflag, size = 0x8, scoped, tag = 'scoped memory for tpu_custom_call.1']
    #allocation4 [shape = 's32[2]{0}', space=sflag, size = 0x8, scoped, tag = 'scoped memory for tpu_custom_call.1']
    #allocation5 [shape = 'u8[294912]{0}', space=vmem, size = 0x48000, scoped, tag = 'input window, operand 1, single buffered']
    #allocation6 [shape = 's32[1]{0}', space=sflag, size = 0x4, scoped, tag = 'scoped memory for tpu_custom_call.1']
    #allocation7 [shape = 'u8[65536]{0}', space=vmem, size = 0x10000, scoped, tag = 'output window, operand 0']
    %9 = vsyncpa [#allocation3], 0
    %s10 = scalar_lea.sflag [#allocation3], 1
    %11 = vsyncpa %s10, 0
    %12 = vsyncpa [#allocation6], 0
    %13 = vsyncpa [#allocation4], 0
    %s14 = scalar_lea.sflag [#allocation4], 1
    %15 = vsyncpa %s14, 0
    loop: start=0, step=1, limit=4
    $region2: #{tpu_custom_call.1} parent=1 // loop_pre_header
      _
    $region3: #{tpu_custom_call.1} parent=1 // loop_header
      %s17 = sphi 0, %s21
      %p18 = scmp.ge.s32.totalorder %s17, 4
      %s27 = sphi 0, %s29
      %s30 = sphi 0, %s27
      %s31 = sphi 0, %s30
      %s47 = sphi 0, %s31
      %s51 = sphi 0, %s51
      %s53 = sphi 0, %s51
      %s54 = sphi 0, %s53
      %s68 = sphi 0, %s54
      %s72 = sphi 0, %s72
      %s74 = sphi 0, %s72
      %s75 = sphi 0, %s74
      %s89 = sphi 0, %s75
      %s93 = sphi 0, %s93
      %s95 = sphi 0, %s93
      %s96 = sphi 0, %s95
      %s110 = sphi 0, %s96
      %s116 = sphi 0, %s118
      %s119 = sphi 0, %s116
      %s120 = sphi 0, %s119
      %s136 = sphi 0, %s120
    $region4: #{tpu_custom_call.1} parent=1 // loop_header_branch
      %20 = sbr.rel (%p18) target = $region8
    $region5: #{tpu_custom_call.1} parent=1 // loop_body
      %s22 = ssub.s32 %s17, 1
      %s23 = ssub.s32 %s17, 2
      %s24 = sadd.s32 %s17, 1
      %s25 = ssub.s32 %s17, %s24
      %p26 = scmp.eq.s32.totalorder %s25, 0
      %s28 = sadd.s32 %s27, 1
      %s29 = scalar_select %p26, %s27, %s28
      %p32 = pneg %p26
      %p33 = scmp.eq.s32.totalorder %s17, 1
      %p34 = por %p32, %p33
      %p35 = scmp.ne.s32.totalorder %s27, %s30
      %p36 = scmp.eq.s32.totalorder %s17, 0
      %p37 = por %p35, %p36
      %p38 = scmp.ne.s32.totalorder %s27, %s30
      %p39 = scmp.eq.s32.totalorder %s22, 1
      %p40 = por %p38, %p39
      %p41 = scmp.ne.s32.totalorder %s30, %s31
      %p42 = scmp.eq.s32.totalorder %s22, 0
      %p43 = por %p41, %p42
      %p44 = scmp.ne.s32.totalorder %s30, %s31
      %p45 = scmp.eq.s32.totalorder %s23, 1
      %p46 = por %p44, %p45
      %p48 = scmp.ne.s32.totalorder %s31, %s47
      %p49 = scmp.eq.s32.totalorder %s23, 0
      %p50 = por %p48, %p49
      %s52 = sadd.s32 %s51, 1
      %p55 = scmp.eq.s32.totalorder %s17, 1
      %p56 = scmp.ne.s32.totalorder %s51, %s53
      %p57 = scmp.eq.s32.totalorder %s17, 0
      %p58 = por %p56, %p57
      %p59 = scmp.ne.s32.totalorder %s51, %s53
      %p60 = scmp.eq.s32.totalorder %s22, 1
      %p61 = por %p59, %p60
      %p62 = scmp.ne.s32.totalorder %s53, %s54
      %p63 = scmp.eq.s32.totalorder %s22, 0
      %p64 = por %p62, %p63
      %p65 = scmp.ne.s32.totalorder %s53, %s54
      %p66 = scmp.eq.s32.totalorder %s23, 1
      %p67 = por %p65, %p66
      %p69 = scmp.ne.s32.totalorder %s54, %s68
      %p70 = scmp.eq.s32.totalorder %s23, 0
      %p71 = por %p69, %p70
      %s73 = sadd.s32 %s72, 1
      %p76 = scmp.eq.s32.totalorder %s17, 1
      %p77 = scmp.ne.s32.totalorder %s72, %s74
      %p78 = scmp.eq.s32.totalorder %s17, 0
      %p79 = por %p77, %p78
      %p80 = scmp.ne.s32.totalorder %s72, %s74
      %p81 = scmp.eq.s32.totalorder %s22, 1
      %p82 = por %p80, %p81
      %p83 = scmp.ne.s32.totalorder %s74, %s75
      %p84 = scmp.eq.s32.totalorder %s22, 0
      %p85 = por %p83, %p84
      %p86 = scmp.ne.s32.totalorder %s74, %s75
      %p87 = scmp.eq.s32.totalorder %s23, 1
      %p88 = por %p86, %p87
      %p90 = scmp.ne.s32.totalorder %s75, %s89
      %p91 = scmp.eq.s32.totalorder %s23, 0
      %p92 = por %p90, %p91
      %s94 = sadd.s32 %s93, 1
      %p97 = scmp.eq.s32.totalorder %s17, 1
      %p98 = scmp.ne.s32.totalorder %s93, %s95
      %p99 = scmp.eq.s32.totalorder %s17, 0
      %p100 = por %p98, %p99
      %p101 = scmp.ne.s32.totalorder %s93, %s95
      %p102 = scmp.eq.s32.totalorder %s22, 1
      %p103 = por %p101, %p102
      %p104 = scmp.ne.s32.totalorder %s95, %s96
      %p105 = scmp.eq.s32.totalorder %s22, 0
      %p106 = por %p104, %p105
      %p107 = scmp.ne.s32.totalorder %s95, %s96
      %p108 = scmp.eq.s32.totalorder %s23, 1
      %p109 = por %p107, %p108
      %p111 = scmp.ne.s32.totalorder %s96, %s110
      %p112 = scmp.eq.s32.totalorder %s23, 0
      %p113 = por %p111, %p112
      %s114 = ssub.s32 %s17, %s24
      %p115 = scmp.eq.s32.totalorder %s114, 0
      %s117 = sadd.s32 %s116, 1
      %s118 = scalar_select %p115, %s116, %s117
      %p121 = pneg %p115
      %p122 = scmp.eq.s32.totalorder %s17, 1
      %p123 = por %p121, %p122
      %p124 = scmp.ne.s32.totalorder %s116, %s119
      %p125 = scmp.eq.s32.totalorder %s17, 0
      %p126 = por %p124, %p125
      %p127 = scmp.ne.s32.totalorder %s116, %s119
      %p128 = scmp.eq.s32.totalorder %s22, 1
      %p129 = por %p127, %p128
      %p130 = scmp.ne.s32.totalorder %s119, %s120
      %p131 = scmp.eq.s32.totalorder %s22, 0
      %p132 = por %p130, %p131
      %p133 = scmp.ne.s32.totalorder %s119, %s120
      %p134 = scmp.eq.s32.totalorder %s23, 1
      %p135 = por %p133, %p134
      %p137 = scmp.ne.s32.totalorder %s120, %s136
      %p138 = scmp.eq.s32.totalorder %s23, 0
      %p139 = por %p137, %p138
      %p140 = scmp.le.s32.totalorder 1, %s17
      %p141 = scmp.lt.s32.totalorder %s17, 3
      %p142 = pnand %p140, %p141
      %p143 = pneg %p142
      // Predicated region
      $region9: #{tpu_custom_call.1} parent=5 // pred_check
        _
      $region10: #{tpu_custom_call.1} parent=5 // pred_check_branch
        %145 = sbr.rel (%p142) target = $region12
      $region11: #{tpu_custom_call.1} parent=5 // pred_region
        %s146 = ssub.s32 %s17, 1
        // Predicated region
        $region13: #{tpu_custom_call.1} parent=11 // pred_check
          %p147 = pneg %p64
        $region14: #{tpu_custom_call.1} parent=11 // pred_check_branch
          %149 = sbr.rel (%p147) target = $region16
        $region15: #{tpu_custom_call.1} parent=11 // pred_region
          %s151 = ssub.s32 9216, 9216
          %152 = vsyncadd [#allocation6], %s151
          %s153 = sshll.u32 [#allocation5], 4
          %s154 = int_to_ptr.vmem [resolvable:$true] %s153
          %159 = dma.hbm_to_vmem [thread:$0]  %s1, 9216, %s154, [#allocation6], 64, 64, 4
        $region16: #{tpu_custom_call.1} parent=11 // pred_fallthru
          _
        // Predicated region
        $region17: #{tpu_custom_call.1} parent=11 // pred_check
          %p160 = pneg %p85
        $region18: #{tpu_custom_call.1} parent=11 // pred_check_branch
          %162 = sbr.rel (%p160) target = $region20
        $region19: #{tpu_custom_call.1} parent=11 // pred_region
          _
        $region20: #{tpu_custom_call.1} parent=11 // pred_fallthru
          _
        // Predicated region
        $region21: #{tpu_custom_call.1} parent=11 // pred_check
          %p163 = pneg %p106
        $region22: #{tpu_custom_call.1} parent=11 // pred_check_branch
          %165 = sbr.rel (%p163) target = $region24
        $region23: #{tpu_custom_call.1} parent=11 // pred_region
          _
        $region24: #{tpu_custom_call.1} parent=11 // pred_fallthru
          _
      $region12: #{tpu_custom_call.1} parent=5 // pred_fallthru
        _
      %p166 = scmp.lt.s32.totalorder %s17, 2
      // Predicated region
      $region25: #{tpu_custom_call.1} parent=5 // pred_check
        %p167 = pneg %p166
      $region26: #{tpu_custom_call.1} parent=5 // pred_check_branch
        %169 = sbr.rel (%p167) target = $region28
      $region27: #{tpu_custom_call.1} parent=5 // pred_region
        // Predicated region
        $region29: #{tpu_custom_call.1} parent=27 // pred_check
          %p170 = pneg %p37
        $region30: #{tpu_custom_call.1} parent=27 // pred_check_branch
          %172 = sbr.rel (%p170) target = $region32
        $region31: #{tpu_custom_call.1} parent=27 // pred_region
          %s173 = sand.u32 %s27, 1
          %s174 = scalar_lea.sflag [#allocation3], %s173
          %s175 = sand.u32 %s27, 1
          %s176 = smul.addr %s175, 256
          %s177 = scalar_lea.vmem [#allocation2], %s176
          %s179 = ssub.s32 4096, 4096
          %180 = vsyncadd %s174, %s179
          %s181 = smul.addr %s17, 32
          %s182 = smul.addr %s181, 128
          %s183 = scalar_lea.hbm %s0, %s182
          %s184 = sshll.u32 %s177, 4
          %s185 = int_to_ptr.vmem [resolvable:$true] %s184
          %190 = dma.hbm_to_vmem [thread:$0]  %s183, 4096, %s185, %s174, 128, 128, 8
        $region32: #{tpu_custom_call.1} parent=27 // pred_fallthru
          _
      $region28: #{tpu_custom_call.1} parent=5 // pred_fallthru
        _
      %p191 = scmp.le.s32.totalorder 1, %s17
      %p192 = scmp.lt.s32.totalorder %s17, 3
      %p193 = pnand %p191, %p192
      %p194 = pneg %p193
      // Predicated region
      $region33: #{tpu_custom_call.1} parent=5 // pred_check
        _
      $region34: #{tpu_custom_call.1} parent=5 // pred_check_branch
        %196 = sbr.rel (%p193) target = $region36
      $region35: #{tpu_custom_call.1} parent=5 // pred_region
        %s197 = ssub.s32 %s17, 1
        %s198 = sand.u32 %s30, 1
        %s199 = scalar_lea.sflag [#allocation3], %s198
        %s200 = sand.u32 %s30, 1
        %s201 = smul.addr %s200, 256
        %s202 = scalar_lea.vmem [#allocation2], %s201
        // Predicated region
        $region37: #{tpu_custom_call.1} parent=35 // pred_check
          %p203 = pneg %p43
        $region38: #{tpu_custom_call.1} parent=35 // pred_check_branch
          %205 = sbr.rel (%p203) target = $region40
        $region39: #{tpu_custom_call.1} parent=35 // pred_region
          %206 = dma.done %s199, 4096
        $region40: #{tpu_custom_call.1} parent=35 // pred_fallthru
          _
        // Predicated region
        $region41: #{tpu_custom_call.1} parent=35 // pred_check
          %p207 = pneg %p64
        $region42: #{tpu_custom_call.1} parent=35 // pred_check_branch
          %209 = sbr.rel (%p207) target = $region44
        $region43: #{tpu_custom_call.1} parent=35 // pred_region
          %210 = dma.done [#allocation6], 9216
        $region44: #{tpu_custom_call.1} parent=35 // pred_fallthru
          _
        %s211 = sand.u32 %s30, 1
        %s212 = scalar_lea.sflag [#allocation3], %s211
        %s213 = sand.u32 %s30, 1
        %s214 = smul.addr %s213, 256
        %s215 = scalar_lea.vmem [#allocation2], %s214
        %p216 = pneg %p43
        %p217 = pneg %p40
        %p218 = pneg %p64
        %p219 = pneg %p61
        %p220 = pneg %p85
        %p221 = pneg %p82
        %p222 = pneg %p106
        %p223 = pneg %p103
        %p224 = pneg %p132
        %p225 = pneg %p129
        %s226 = sand.u32 %s119, 1
        %s227 = scalar_lea.sflag [#allocation4], %s226
        %s228 = sand.u32 %s119, 1
        %s229 = smul.addr %s228, 64
        %s230 = scalar_lea.vmem [#allocation7], %s229
        %v232 = vld [vmem:[%s202] sm:$0xff]
        %v233 = vld [vmem:[%s202 + $0x8] sm:$0xff]
        %v234 = vld [vmem:[%s202 + $0x10] sm:$0xff]
        %v235 = vld [vmem:[%s202 + $0x18] sm:$0xff]
        %v236 = vld [vmem:[%s202 + $0x20] sm:$0xff]
        %v237 = vld [vmem:[%s202 + $0x28] sm:$0xff]
        %v238 = vld [vmem:[%s202 + $0x30] sm:$0xff]
        %v239 = vld [vmem:[%s202 + $0x38] sm:$0xff]
        %v240 = vld [vmem:[%s202 + $0x40] sm:$0xff]
        %v241 = vld [vmem:[%s202 + $0x48] sm:$0xff]
        %v242 = vld [vmem:[%s202 + $0x50] sm:$0xff]
        %v243 = vld [vmem:[%s202 + $0x58] sm:$0xff]
        %v244 = vld [vmem:[%s202 + $0x60] sm:$0xff]
        %v245 = vld [vmem:[%s202 + $0x68] sm:$0xff]
        %v246 = vld [vmem:[%s202 + $0x70] sm:$0xff]
        %v247 = vld [vmem:[%s202 + $0x78] sm:$0xff]
        %v248 = vld [vmem:[%s202 + $0x80] sm:$0xff]
        %v249 = vld [vmem:[%s202 + $0x88] sm:$0xff]
        %v250 = vld [vmem:[%s202 + $0x90] sm:$0xff]
        %v251 = vld [vmem:[%s202 + $0x98] sm:$0xff]
        %v252 = vld [vmem:[%s202 + $0xa0] sm:$0xff]
        %v253 = vld [vmem:[%s202 + $0xa8] sm:$0xff]
        %v254 = vld [vmem:[%s202 + $0xb0] sm:$0xff]
        %v255 = vld [vmem:[%s202 + $0xb8] sm:$0xff]
        %v256 = vld [vmem:[%s202 + $0xc0] sm:$0xff]
        %v257 = vld [vmem:[%s202 + $0xc8] sm:$0xff]
        %v258 = vld [vmem:[%s202 + $0xd0] sm:$0xff]
        %v259 = vld [vmem:[%s202 + $0xd8] sm:$0xff]
        %v260 = vld [vmem:[%s202 + $0xe0] sm:$0xff]
        %v261 = vld [vmem:[%s202 + $0xe8] sm:$0xff]
        %v262 = vld [vmem:[%s202 + $0xf0] sm:$0xff]
        %v263 = vld [vmem:[%s202 + $0xf8] sm:$0xff]
        %vm296 = vcmask 1040384
        %v297 = vrot.slane %v232, 7
        %v298 = vrot.slane %v233, 7
        %v299 = vsel %vm296, %v297, %v298
        %v300 = vrot.slane %v234, 7
        %v301 = vrot.slane %v235, 7
        %v302 = vsel %vm296, %v300, %v301
        %v303 = vrot.slane %v236, 7
        %v304 = vrot.slane %v237, 7
        %v305 = vsel %vm296, %v303, %v304
        %v306 = vrot.slane %v238, 7
        %v307 = vrot.slane %v239, 7
        %v308 = vsel %vm296, %v306, %v307
        %v309 = vrot.slane %v240, 7
        %v310 = vrot.slane %v241, 7
        %v311 = vsel %vm296, %v309, %v310
        %v312 = vrot.slane %v242, 7
        %v313 = vrot.slane %v243, 7
        %v314 = vsel %vm296, %v312, %v313
        %v315 = vrot.slane %v244, 7
        %v316 = vrot.slane %v245, 7
        %v317 = vsel %vm296, %v315, %v316
        %v318 = vrot.slane %v246, 7
        %v319 = vrot.slane %v247, 7
        %v320 = vsel %vm296, %v318, %v319
        %v321 = vrot.slane %v248, 7
        %v322 = vrot.slane %v249, 7
        %v323 = vsel %vm296, %v321, %v322
        %v324 = vrot.slane %v250, 7
        %v325 = vrot.slane %v251, 7
        %v326 = vsel %vm296, %v324, %v325
        %v327 = vrot.slane %v252, 7
        %v328 = vrot.slane %v253, 7
        %v329 = vsel %vm296, %v327, %v328
        %v330 = vrot.slane %v254, 7
        %v331 = vrot.slane %v255, 7
        %v332 = vsel %vm296, %v330, %v331
        %v333 = vrot.slane %v256, 7
        %v334 = vrot.slane %v257, 7
        %v335 = vsel %vm296, %v333, %v334
        %v336 = vrot.slane %v258, 7
        %v337 = vrot.slane %v259, 7
        %v338 = vsel %vm296, %v336, %v337
        %v339 = vrot.slane %v260, 7
        %v340 = vrot.slane %v261, 7
        %v341 = vsel %vm296, %v339, %v340
        %v342 = vrot.slane %v262, 7
        %v343 = vrot.slane %v263, 7
        %v344 = vsel %vm296, %v342, %v343
        %v377 = vsel %vm296, 0.0, %v297
        %v378 = vsel %vm296, 0.0, %v300
        %v379 = vsel %vm296, 0.0, %v303
        %v380 = vsel %vm296, 0.0, %v306
        %v381 = vsel %vm296, 0.0, %v309
        %v382 = vsel %vm296, 0.0, %v312
        %v383 = vsel %vm296, 0.0, %v315
        %v384 = vsel %vm296, 0.0, %v318
        %v385 = vsel %vm296, 0.0, %v321
        %v386 = vsel %vm296, 0.0, %v324
        %v387 = vsel %vm296, 0.0, %v327
        %v388 = vsel %vm296, 0.0, %v330
        %v389 = vsel %vm296, 0.0, %v333
        %v390 = vsel %vm296, 0.0, %v336
        %v391 = vsel %vm296, 0.0, %v339
        %v392 = vsel %vm296, 0.0, %v342
        %vm393 = vcmask 1046528
        %v394 = vrot.slane %v232, 1
        %v395 = vrot.slane %v233, 1
        %v396 = vsel %vm393, %v394, %v395
        %v397 = vrot.slane %v234, 1
        %v398 = vrot.slane %v235, 1
        %v399 = vsel %vm393, %v397, %v398
        %v400 = vrot.slane %v236, 1
        %v401 = vrot.slane %v237, 1
        %v402 = vsel %vm393, %v400, %v401
        %v403 = vrot.slane %v238, 1
        %v404 = vrot.slane %v239, 1
        %v405 = vsel %vm393, %v403, %v404
        %v406 = vrot.slane %v240, 1
        %v407 = vrot.slane %v241, 1
        %v408 = vsel %vm393, %v406, %v407
        %v409 = vrot.slane %v242, 1
        %v410 = vrot.slane %v243, 1
        %v411 = vsel %vm393, %v409, %v410
        %v412 = vrot.slane %v244, 1
        %v413 = vrot.slane %v245, 1
        %v414 = vsel %vm393, %v412, %v413
        %v415 = vrot.slane %v246, 1
        %v416 = vrot.slane %v247, 1
        %v417 = vsel %vm393, %v415, %v416
        %v418 = vrot.slane %v248, 1
        %v419 = vrot.slane %v249, 1
        %v420 = vsel %vm393, %v418, %v419
        %v421 = vrot.slane %v250, 1
        %v422 = vrot.slane %v251, 1
        %v423 = vsel %vm393, %v421, %v422
        %v424 = vrot.slane %v252, 1
        %v425 = vrot.slane %v253, 1
        %v426 = vsel %vm393, %v424, %v425
        %v427 = vrot.slane %v254, 1
        %v428 = vrot.slane %v255, 1
        %v429 = vsel %vm393, %v427, %v428
        %v430 = vrot.slane %v256, 1
        %v431 = vrot.slane %v257, 1
        %v432 = vsel %vm393, %v430, %v431
        %v433 = vrot.slane %v258, 1
        %v434 = vrot.slane %v259, 1
        %v435 = vsel %vm393, %v433, %v434
        %v436 = vrot.slane %v260, 1
        %v437 = vrot.slane %v261, 1
        %v438 = vsel %vm393, %v436, %v437
        %v439 = vrot.slane %v262, 1
        %v440 = vrot.slane %v263, 1
        %v441 = vsel %vm393, %v439, %v440
        %v474 = vsel %vm393, %v395, 0.0
        %v475 = vsel %vm393, %v398, 0.0
        %v476 = vsel %vm393, %v401, 0.0
        %v477 = vsel %vm393, %v404, 0.0
        %v478 = vsel %vm393, %v407, 0.0
        %v479 = vsel %vm393, %v410, 0.0
        %v480 = vsel %vm393, %v413, 0.0
        %v481 = vsel %vm393, %v416, 0.0
        %v482 = vsel %vm393, %v419, 0.0
        %v483 = vsel %vm393, %v422, 0.0
        %v484 = vsel %vm393, %v425, 0.0
        %v485 = vsel %vm393, %v428, 0.0
        %v486 = vsel %vm393, %v431, 0.0
        %v487 = vsel %vm393, %v434, 0.0
        %v488 = vsel %vm393, %v437, 0.0
        %v489 = vsel %vm393, %v440, 0.0
        %v490 = vpack.c.bf16 0.0, 0.0
        %v491 = vpack.c.bf16 %v299, %v377
        %v492 = vpack.c.bf16 %v233, %v232
        %v493 = vpack.c.bf16 %v474, %v396
        %v494 = vpack.c.bf16 %v302, %v378
        %v495 = vpack.c.bf16 %v235, %v234
        %v496 = vpack.c.bf16 %v475, %v399
        %v497 = vpack.c.bf16 %v305, %v379
        %v498 = vpack.c.bf16 %v237, %v236
        %v499 = vpack.c.bf16 %v476, %v402
        %v500 = vpack.c.bf16 %v308, %v380
        %v501 = vpack.c.bf16 %v239, %v238
        %v502 = vpack.c.bf16 %v477, %v405
        %v503 = vpack.c.bf16 %v311, %v381
        %v504 = vpack.c.bf16 %v241, %v240
        %v505 = vpack.c.bf16 %v478, %v408
        %v506 = vpack.c.bf16 %v314, %v382
        %v507 = vpack.c.bf16 %v243, %v242
        %v508 = vpack.c.bf16 %v479, %v411
        %v509 = vpack.c.bf16 %v317, %v383
        %v510 = vpack.c.bf16 %v245, %v244
        %v511 = vpack.c.bf16 %v480, %v414
        %v512 = vpack.c.bf16 %v320, %v384
        %v513 = vpack.c.bf16 %v247, %v246
        %v514 = vpack.c.bf16 %v481, %v417
        %v515 = vpack.c.bf16 %v323, %v385
        %v516 = vpack.c.bf16 %v249, %v248
        %v517 = vpack.c.bf16 %v482, %v420
        %v518 = vpack.c.bf16 %v326, %v386
        %v519 = vpack.c.bf16 %v251, %v250
        %v520 = vpack.c.bf16 %v483, %v423
        %v521 = vpack.c.bf16 %v329, %v387
        %v522 = vpack.c.bf16 %v253, %v252
        %v523 = vpack.c.bf16 %v484, %v426
        %v524 = vpack.c.bf16 %v332, %v388
        %v525 = vpack.c.bf16 %v255, %v254
        %v526 = vpack.c.bf16 %v485, %v429
        %v527 = vpack.c.bf16 %v335, %v389
        %v528 = vpack.c.bf16 %v257, %v256
        %v529 = vpack.c.bf16 %v486, %v432
        %v530 = vpack.c.bf16 %v338, %v390
        %v531 = vpack.c.bf16 %v259, %v258
        %v532 = vpack.c.bf16 %v487, %v435
        %v533 = vpack.c.bf16 %v341, %v391
        %v534 = vpack.c.bf16 %v261, %v260
        %v535 = vpack.c.bf16 %v488, %v438
        %v536 = vpack.c.bf16 %v344, %v392
        %v537 = vpack.c.bf16 %v263, %v262
        %v538 = vpack.c.bf16 %v489, %v441
        %v539 = vld [vmem:[#allocation5] sm:$0xf]
        %v540 = vld [vmem:[#allocation5 + $0x4] sm:$0xf]
        %v541 = vld [vmem:[#allocation5 + $0x8] sm:$0xf]
        %v542 = vld [vmem:[#allocation5 + $0xc] sm:$0xf]
        %v543 = vld [vmem:[#allocation5 + $0x10] sm:$0xf]
        %v544 = vld [vmem:[#allocation5 + $0x14] sm:$0xf]
        %v545 = vld [vmem:[#allocation5 + $0x18] sm:$0xf]
        %v546 = vld [vmem:[#allocation5 + $0x1c] sm:$0xf]
        %v547 = vld [vmem:[#allocation5 + $0x20] sm:$0xf]
        %v548 = vld [vmem:[#allocation5 + $0x24] sm:$0xf]
        %v549 = vld [vmem:[#allocation5 + $0x28] sm:$0xf]
        %v550 = vld [vmem:[#allocation5 + $0x2c] sm:$0xf]
        %v551 = vld [vmem:[#allocation5 + $0x30] sm:$0xf]
        %v552 = vld [vmem:[#allocation5 + $0x34] sm:$0xf]
        %v553 = vld [vmem:[#allocation5 + $0x38] sm:$0xf]
        %v554 = vld [vmem:[#allocation5 + $0x3c] sm:$0xf]
        %v555 = vld [vmem:[#allocation5 + $0x40] sm:$0xf]
        %v556 = vld [vmem:[#allocation5 + $0x44] sm:$0xf]
        %v557 = vld [vmem:[#allocation5 + $0x48] sm:$0xf]
        %v558 = vld [vmem:[#allocation5 + $0x4c] sm:$0xf]
        %v559 = vld [vmem:[#allocation5 + $0x50] sm:$0xf]
        %v560 = vld [vmem:[#allocation5 + $0x54] sm:$0xf]
        %v561 = vld [vmem:[#allocation5 + $0x58] sm:$0xf]
        %v562 = vld [vmem:[#allocation5 + $0x5c] sm:$0xf]
        %v563 = vld [vmem:[#allocation5 + $0x60] sm:$0xf]
        %v564 = vld [vmem:[#allocation5 + $0x64] sm:$0xf]
        %v565 = vld [vmem:[#allocation5 + $0x68] sm:$0xf]
        %v566 = vld [vmem:[#allocation5 + $0x6c] sm:$0xf]
        %v567 = vld [vmem:[#allocation5 + $0x70] sm:$0xf]
        %v568 = vld [vmem:[#allocation5 + $0x74] sm:$0xf]
        %v569 = vld [vmem:[#allocation5 + $0x78] sm:$0xf]
        %v570 = vld [vmem:[#allocation5 + $0x7c] sm:$0xf]
        %v571 = vld [vmem:[#allocation5 + $0x80] sm:$0xf]
        %v572 = vld [vmem:[#allocation5 + $0x84] sm:$0xf]
        %v573 = vld [vmem:[#allocation5 + $0x88] sm:$0xf]
        %v574 = vld [vmem:[#allocation5 + $0x8c] sm:$0xf]
        %v575 = vld [vmem:[#allocation5 + $0x90] sm:$0xf]
        %v576 = vld [vmem:[#allocation5 + $0x94] sm:$0xf]
        %v577 = vld [vmem:[#allocation5 + $0x98] sm:$0xf]
        %v578 = vld [vmem:[#allocation5 + $0x9c] sm:$0xf]
        %v579 = vld [vmem:[#allocation5 + $0xa0] sm:$0xf]
        %v580 = vld [vmem:[#allocation5 + $0xa4] sm:$0xf]
        %v581 = vld [vmem:[#allocation5 + $0xa8] sm:$0xf]
        %v582 = vld [vmem:[#allocation5 + $0xac] sm:$0xf]
        %v583 = vld [vmem:[#allocation5 + $0xb0] sm:$0xf]
        %v584 = vld [vmem:[#allocation5 + $0xb4] sm:$0xf]
        %v585 = vld [vmem:[#allocation5 + $0xb8] sm:$0xf]
        %v586 = vld [vmem:[#allocation5 + $0xbc] sm:$0xf]
        %v587 = vld [vmem:[#allocation5 + $0xc0] sm:$0xf]
        %v588 = vld [vmem:[#allocation5 + $0xc4] sm:$0xf]
        %v589 = vld [vmem:[#allocation5 + $0xc8] sm:$0xf]
        %v590 = vld [vmem:[#allocation5 + $0xcc] sm:$0xf]
        %v591 = vld [vmem:[#allocation5 + $0xd0] sm:$0xf]
        %v592 = vld [vmem:[#allocation5 + $0xd4] sm:$0xf]
        %v593 = vld [vmem:[#allocation5 + $0xd8] sm:$0xf]
        %v594 = vld [vmem:[#allocation5 + $0xdc] sm:$0xf]
        %v595 = vld [vmem:[#allocation5 + $0xe0] sm:$0xf]
        %v596 = vld [vmem:[#allocation5 + $0xe4] sm:$0xf]
        %v597 = vld [vmem:[#allocation5 + $0xe8] sm:$0xf]
        %v598 = vld [vmem:[#allocation5 + $0xec] sm:$0xf]
        %v599 = vld [vmem:[#allocation5 + $0xf0] sm:$0xf]
        %v600 = vld [vmem:[#allocation5 + $0xf4] sm:$0xf]
        %v601 = vld [vmem:[#allocation5 + $0xf8] sm:$0xf]
        %v602 = vld [vmem:[#allocation5 + $0xfc] sm:$0xf]
        %v603 = vld [vmem:[#allocation5 + $0x100] sm:$0xf]
        %v604 = vld [vmem:[#allocation5 + $0x104] sm:$0xf]
        %v605 = vld [vmem:[#allocation5 + $0x108] sm:$0xf]
        %v606 = vld [vmem:[#allocation5 + $0x10c] sm:$0xf]
        %v607 = vld [vmem:[#allocation5 + $0x110] sm:$0xf]
        %v608 = vld [vmem:[#allocation5 + $0x114] sm:$0xf]
        %v609 = vld [vmem:[#allocation5 + $0x118] sm:$0xf]
        %v610 = vld [vmem:[#allocation5 + $0x11c] sm:$0xf]
        %v611 = vld [vmem:[#allocation5 + $0x120] sm:$0xf]
        %v612 = vld [vmem:[#allocation5 + $0x124] sm:$0xf]
        %v613 = vld [vmem:[#allocation5 + $0x128] sm:$0xf]
        %v614 = vld [vmem:[#allocation5 + $0x12c] sm:$0xf]
        %v615 = vld [vmem:[#allocation5 + $0x130] sm:$0xf]
        %v616 = vld [vmem:[#allocation5 + $0x134] sm:$0xf]
        %v617 = vld [vmem:[#allocation5 + $0x138] sm:$0xf]
        %v618 = vld [vmem:[#allocation5 + $0x13c] sm:$0xf]
        %v619 = vld [vmem:[#allocation5 + $0x140] sm:$0xf]
        %v620 = vld [vmem:[#allocation5 + $0x144] sm:$0xf]
        %v621 = vld [vmem:[#allocation5 + $0x148] sm:$0xf]
        %v622 = vld [vmem:[#allocation5 + $0x14c] sm:$0xf]
        %v623 = vld [vmem:[#allocation5 + $0x150] sm:$0xf]
        %v624 = vld [vmem:[#allocation5 + $0x154] sm:$0xf]
        %v625 = vld [vmem:[#allocation5 + $0x158] sm:$0xf]
        %v626 = vld [vmem:[#allocation5 + $0x15c] sm:$0xf]
        %v627 = vld [vmem:[#allocation5 + $0x160] sm:$0xf]
        %v628 = vld [vmem:[#allocation5 + $0x164] sm:$0xf]
        %v629 = vld [vmem:[#allocation5 + $0x168] sm:$0xf]
        %v630 = vld [vmem:[#allocation5 + $0x16c] sm:$0xf]
        %v631 = vld [vmem:[#allocation5 + $0x170] sm:$0xf]
        %v632 = vld [vmem:[#allocation5 + $0x174] sm:$0xf]
        %v633 = vld [vmem:[#allocation5 + $0x178] sm:$0xf]
        %v634 = vld [vmem:[#allocation5 + $0x17c] sm:$0xf]
        %v635 = vld [vmem:[#allocation5 + $0x180] sm:$0xf]
        %v636 = vld [vmem:[#allocation5 + $0x184] sm:$0xf]
        %v637 = vld [vmem:[#allocation5 + $0x188] sm:$0xf]
        %v638 = vld [vmem:[#allocation5 + $0x18c] sm:$0xf]
        %v639 = vld [vmem:[#allocation5 + $0x190] sm:$0xf]
        %v640 = vld [vmem:[#allocation5 + $0x194] sm:$0xf]
        %v641 = vld [vmem:[#allocation5 + $0x198] sm:$0xf]
        %v642 = vld [vmem:[#allocation5 + $0x19c] sm:$0xf]
        %v643 = vld [vmem:[#allocation5 + $0x1a0] sm:$0xf]
        %v644 = vld [vmem:[#allocation5 + $0x1a4] sm:$0xf]
        %v645 = vld [vmem:[#allocation5 + $0x1a8] sm:$0xf]
        %v646 = vld [vmem:[#allocation5 + $0x1ac] sm:$0xf]
        %v647 = vld [vmem:[#allocation5 + $0x1b0] sm:$0xf]
        %v648 = vld [vmem:[#allocation5 + $0x1b4] sm:$0xf]
        %v649 = vld [vmem:[#allocation5 + $0x1b8] sm:$0xf]
        %v650 = vld [vmem:[#allocation5 + $0x1bc] sm:$0xf]
        %v651 = vld [vmem:[#allocation5 + $0x1c0] sm:$0xf]
        %v652 = vld [vmem:[#allocation5 + $0x1c4] sm:$0xf]
        %v653 = vld [vmem:[#allocation5 + $0x1c8] sm:$0xf]
        %v654 = vld [vmem:[#allocation5 + $0x1cc] sm:$0xf]
        %v655 = vld [vmem:[#allocation5 + $0x1d0] sm:$0xf]
        %v656 = vld [vmem:[#allocation5 + $0x1d4] sm:$0xf]
        %v657 = vld [vmem:[#allocation5 + $0x1d8] sm:$0xf]
        %v658 = vld [vmem:[#allocation5 + $0x1dc] sm:$0xf]
        %v659 = vld [vmem:[#allocation5 + $0x1e0] sm:$0xf]
        %v660 = vld [vmem:[#allocation5 + $0x1e4] sm:$0xf]
        %v661 = vld [vmem:[#allocation5 + $0x1e8] sm:$0xf]
        %v662 = vld [vmem:[#allocation5 + $0x1ec] sm:$0xf]
        %v663 = vld [vmem:[#allocation5 + $0x1f0] sm:$0xf]
        %v664 = vld [vmem:[#allocation5 + $0x1f4] sm:$0xf]
        %v665 = vld [vmem:[#allocation5 + $0x1f8] sm:$0xf]
        %v666 = vld [vmem:[#allocation5 + $0x1fc] sm:$0xf]
        %v667 = vld [vmem:[#allocation5 + $0x200] sm:$0xf]
        %v668 = vld [vmem:[#allocation5 + $0x204] sm:$0xf]
        %v669 = vld [vmem:[#allocation5 + $0x208] sm:$0xf]
        %v670 = vld [vmem:[#allocation5 + $0x20c] sm:$0xf]
        %v671 = vld [vmem:[#allocation5 + $0x210] sm:$0xf]
        %v672 = vld [vmem:[#allocation5 + $0x214] sm:$0xf]
        %v673 = vld [vmem:[#allocation5 + $0x218] sm:$0xf]
        %v674 = vld [vmem:[#allocation5 + $0x21c] sm:$0xf]
        %v675 = vld [vmem:[#allocation5 + $0x220] sm:$0xf]
        %v676 = vld [vmem:[#allocation5 + $0x224] sm:$0xf]
        %v677 = vld [vmem:[#allocation5 + $0x228] sm:$0xf]
        %v678 = vld [vmem:[#allocation5 + $0x22c] sm:$0xf]
        %v679 = vld [vmem:[#allocation5 + $0x230] sm:$0xf]
        %v680 = vld [vmem:[#allocation5 + $0x234] sm:$0xf]
        %v681 = vld [vmem:[#allocation5 + $0x238] sm:$0xf]
        %v682 = vld [vmem:[#allocation5 + $0x23c] sm:$0xf]
        %v827 = vunpack.c.l.b16 %v539
        %v828 = vunpack.c.l.b16 %v540
        %v829 = vunpack.c.l.b16 %v541
        %v830 = vunpack.c.l.b16 %v542
        %v831 = vunpack.c.l.b16 %v543
        %v832 = vunpack.c.l.b16 %v544
        %v833 = vunpack.c.l.b16 %v545
        %v834 = vunpack.c.l.b16 %v546
        %v835 = vunpack.c.l.b16 %v547
        %v836 = vunpack.c.l.b16 %v548
        %v837 = vunpack.c.l.b16 %v549
        %v838 = vunpack.c.l.b16 %v550
        %v839 = vunpack.c.l.b16 %v551
        %v840 = vunpack.c.l.b16 %v552
        %v841 = vunpack.c.l.b16 %v553
        %v842 = vunpack.c.l.b16 %v554
        %v843 = vunpack.c.l.b16 %v555
        %v844 = vunpack.c.l.b16 %v556
        %v845 = vunpack.c.l.b16 %v557
        %v846 = vunpack.c.l.b16 %v558
        %v847 = vunpack.c.l.b16 %v559
        %v848 = vunpack.c.l.b16 %v560
        %v849 = vunpack.c.l.b16 %v561
        %v850 = vunpack.c.l.b16 %v562
        %v851 = vunpack.c.l.b16 %v563
        %v852 = vunpack.c.l.b16 %v564
        %v853 = vunpack.c.l.b16 %v565
        %v854 = vunpack.c.l.b16 %v566
        %v855 = vunpack.c.l.b16 %v567
        %v856 = vunpack.c.l.b16 %v568
        %v857 = vunpack.c.l.b16 %v569
        %v858 = vunpack.c.l.b16 %v570
        %v859 = vunpack.c.l.b16 %v571
        %v860 = vunpack.c.l.b16 %v572
        %v861 = vunpack.c.l.b16 %v573
        %v862 = vunpack.c.l.b16 %v574
        %v863 = vunpack.c.l.b16 %v575
        %v864 = vunpack.c.l.b16 %v576
        %v865 = vunpack.c.l.b16 %v577
        %v866 = vunpack.c.l.b16 %v578
        %v867 = vunpack.c.l.b16 %v579
        %v868 = vunpack.c.l.b16 %v580
        %v869 = vunpack.c.l.b16 %v581
        %v870 = vunpack.c.l.b16 %v582
        %v871 = vunpack.c.l.b16 %v583
        %v872 = vunpack.c.l.b16 %v584
        %v873 = vunpack.c.l.b16 %v585
        %v874 = vunpack.c.l.b16 %v586
        %v875 = vunpack.c.l.b16 %v587
        %v876 = vunpack.c.l.b16 %v588
        %v877 = vunpack.c.l.b16 %v589
        %v878 = vunpack.c.l.b16 %v590
        %v879 = vunpack.c.l.b16 %v591
        %v880 = vunpack.c.l.b16 %v592
        %v881 = vunpack.c.l.b16 %v593
        %v882 = vunpack.c.l.b16 %v594
        %v883 = vunpack.c.l.b16 %v595
        %v884 = vunpack.c.l.b16 %v596
        %v885 = vunpack.c.l.b16 %v597
        %v886 = vunpack.c.l.b16 %v598
        %v887 = vunpack.c.l.b16 %v599
        %v888 = vunpack.c.l.b16 %v600
        %v889 = vunpack.c.l.b16 %v601
        %v890 = vunpack.c.l.b16 %v602
        %v891 = vunpack.c.l.b16 %v603
        %v892 = vunpack.c.l.b16 %v604
        %v893 = vunpack.c.l.b16 %v605
        %v894 = vunpack.c.l.b16 %v606
        %v895 = vunpack.c.l.b16 %v607
        %v896 = vunpack.c.l.b16 %v608
        %v897 = vunpack.c.l.b16 %v609
        %v898 = vunpack.c.l.b16 %v610
        %v899 = vunpack.c.l.b16 %v611
        %v900 = vunpack.c.l.b16 %v612
        %v901 = vunpack.c.l.b16 %v613
        %v902 = vunpack.c.l.b16 %v614
        %v903 = vunpack.c.l.b16 %v615
        %v904 = vunpack.c.l.b16 %v616
        %v905 = vunpack.c.l.b16 %v617
        %v906 = vunpack.c.l.b16 %v618
        %v907 = vunpack.c.l.b16 %v619
        %v908 = vunpack.c.l.b16 %v620
        %v909 = vunpack.c.l.b16 %v621
        %v910 = vunpack.c.l.b16 %v622
        %v911 = vunpack.c.l.b16 %v623
        %v912 = vunpack.c.l.b16 %v624
        %v913 = vunpack.c.l.b16 %v625
        %v914 = vunpack.c.l.b16 %v626
        %v915 = vunpack.c.l.b16 %v627
        %v916 = vunpack.c.l.b16 %v628
        %v917 = vunpack.c.l.b16 %v629
        %v918 = vunpack.c.l.b16 %v630
        %v919 = vunpack.c.l.b16 %v631
        %v920 = vunpack.c.l.b16 %v632
        %v921 = vunpack.c.l.b16 %v633
        %v922 = vunpack.c.l.b16 %v634
        %v923 = vunpack.c.l.b16 %v635
        %v924 = vunpack.c.l.b16 %v636
        %v925 = vunpack.c.l.b16 %v637
        %v926 = vunpack.c.l.b16 %v638
        %v927 = vunpack.c.l.b16 %v639
        %v928 = vunpack.c.l.b16 %v640
        %v929 = vunpack.c.l.b16 %v641
        %v930 = vunpack.c.l.b16 %v642
        %v931 = vunpack.c.l.b16 %v643
        %v932 = vunpack.c.l.b16 %v644
        %v933 = vunpack.c.l.b16 %v645
        %v934 = vunpack.c.l.b16 %v646
        %v935 = vunpack.c.l.b16 %v647
        %v936 = vunpack.c.l.b16 %v648
        %v937 = vunpack.c.l.b16 %v649
        %v938 = vunpack.c.l.b16 %v650
        %v939 = vunpack.c.l.b16 %v651
        %v940 = vunpack.c.l.b16 %v652
        %v941 = vunpack.c.l.b16 %v653
        %v942 = vunpack.c.l.b16 %v654
        %v943 = vunpack.c.l.b16 %v655
        %v944 = vunpack.c.l.b16 %v656
        %v945 = vunpack.c.l.b16 %v657
        %v946 = vunpack.c.l.b16 %v658
        %v947 = vunpack.c.l.b16 %v659
        %v948 = vunpack.c.l.b16 %v660
        %v949 = vunpack.c.l.b16 %v661
        %v950 = vunpack.c.l.b16 %v662
        %v951 = vunpack.c.l.b16 %v663
        %v952 = vunpack.c.l.b16 %v664
        %v953 = vunpack.c.l.b16 %v665
        %v954 = vunpack.c.l.b16 %v666
        %v955 = vunpack.c.l.b16 %v667
        %v956 = vunpack.c.l.b16 %v668
        %v957 = vunpack.c.l.b16 %v669
        %v958 = vunpack.c.l.b16 %v670
        %v959 = vunpack.c.l.b16 %v671
        %v960 = vunpack.c.l.b16 %v672
        %v961 = vunpack.c.l.b16 %v673
        %v962 = vunpack.c.l.b16 %v674
        %v963 = vunpack.c.l.b16 %v675
        %v964 = vunpack.c.l.b16 %v676
        %v965 = vunpack.c.l.b16 %v677
        %v966 = vunpack.c.l.b16 %v678
        %v967 = vunpack.c.l.b16 %v679
        %v968 = vunpack.c.l.b16 %v680
        %v969 = vunpack.c.l.b16 %v681
        %v970 = vunpack.c.l.b16 %v682
        %v971 = vpack.c.b16 %v828, %v827
        %v972 = vpack.c.b16 %v830, %v829
        %v973 = vpack.c.b16 %v832, %v831
        %v974 = vpack.c.b16 %v834, %v833
        %v975 = vpack.c.b16 %v836, %v835
        %v976 = vpack.c.b16 %v838, %v837
        %v977 = vpack.c.b16 %v840, %v839
        %v978 = vpack.c.b16 %v842, %v841
        %v979 = vpack.c.b16 %v844, %v843
        %v980 = vpack.c.b16 %v846, %v845
        %v981 = vpack.c.b16 %v848, %v847
        %v982 = vpack.c.b16 %v850, %v849
        %v983 = vpack.c.b16 %v852, %v851
        %v984 = vpack.c.b16 %v854, %v853
        %v985 = vpack.c.b16 %v856, %v855
        %v986 = vpack.c.b16 %v858, %v857
        %v987 = vpack.c.b16 %v860, %v859
        %v988 = vpack.c.b16 %v862, %v861
        %v989 = vpack.c.b16 %v864, %v863
        %v990 = vpack.c.b16 %v866, %v865
        %v991 = vpack.c.b16 %v868, %v867
        %v992 = vpack.c.b16 %v870, %v869
        %v993 = vpack.c.b16 %v872, %v871
        %v994 = vpack.c.b16 %v874, %v873
        %v995 = vpack.c.b16 %v876, %v875
        %v996 = vpack.c.b16 %v878, %v877
        %v997 = vpack.c.b16 %v880, %v879
        %v998 = vpack.c.b16 %v882, %v881
        %v999 = vpack.c.b16 %v884, %v883
        %v1000 = vpack.c.b16 %v886, %v885
        %v1001 = vpack.c.b16 %v888, %v887
        %v1002 = vpack.c.b16 %v890, %v889
        %v1003 = vpack.c.b16 %v892, %v891
        %v1004 = vpack.c.b16 %v894, %v893
        %v1005 = vpack.c.b16 %v896, %v895
        %v1006 = vpack.c.b16 %v898, %v897
        %v1007 = vpack.c.b16 %v900, %v899
        %v1008 = vpack.c.b16 %v902, %v901
        %v1009 = vpack.c.b16 %v904, %v903
        %v1010 = vpack.c.b16 %v906, %v905
        %v1011 = vpack.c.b16 %v908, %v907
        %v1012 = vpack.c.b16 %v910, %v909
        %v1013 = vpack.c.b16 %v912, %v911
        %v1014 = vpack.c.b16 %v914, %v913
        %v1015 = vpack.c.b16 %v916, %v915
        %v1016 = vpack.c.b16 %v918, %v917
        %v1017 = vpack.c.b16 %v920, %v919
        %v1018 = vpack.c.b16 %v922, %v921
        %v1019 = vpack.c.b16 %v924, %v923
        %v1020 = vpack.c.b16 %v926, %v925
        %v1021 = vpack.c.b16 %v928, %v927
        %v1022 = vpack.c.b16 %v930, %v929
        %v1023 = vpack.c.b16 %v932, %v931
        %v1024 = vpack.c.b16 %v934, %v933
        %v1025 = vpack.c.b16 %v936, %v935
        %v1026 = vpack.c.b16 %v938, %v937
        %v1027 = vpack.c.b16 %v940, %v939
        %v1028 = vpack.c.b16 %v942, %v941
        %v1029 = vpack.c.b16 %v944, %v943
        %v1030 = vpack.c.b16 %v946, %v945
        %v1031 = vpack.c.b16 %v948, %v947
        %v1032 = vpack.c.b16 %v950, %v949
        %v1033 = vpack.c.b16 %v952, %v951
        %v1034 = vpack.c.b16 %v954, %v953
        %v1035 = vpack.c.b16 %v956, %v955
        %v1036 = vpack.c.b16 %v958, %v957
        %v1037 = vpack.c.b16 %v960, %v959
        %v1038 = vpack.c.b16 %v962, %v961
        %v1039 = vpack.c.b16 %v964, %v963
        %v1040 = vpack.c.b16 %v966, %v965
        %v1041 = vpack.c.b16 %v968, %v967
        %v1042 = vpack.c.b16 %v970, %v969
        %1115 = vmatprep.subr.bf16.mxu0 0
        %1116 = vmatpush1.bf16.msra.mxu0 %v978
        %1117 = vmatprep.subr.bf16.mxu0 0
        %1118 = vmatpush1.bf16.msra.mxu0 %v977
        %1119 = vmatprep.subr.bf16.mxu0 0
        %1120 = vmatpush1.bf16.msra.mxu0 %v976
        %1121 = vmatprep.subr.bf16.mxu0 0
        %1122 = vmatpush1.bf16.msra.mxu0 %v975
        %1123 = vmatprep.subr.bf16.mxu0 0
        %1124 = vmatpush1.bf16.msra.mxu0 %v974
        %1125 = vmatprep.subr.bf16.mxu0 0
        %1126 = vmatpush1.bf16.msra.mxu0 %v973
        %1127 = vmatprep.subr.bf16.mxu0 0
        %1128 = vmatpush1.bf16.msra.mxu0 %v972
        %1129 = vmatprep.subr.bf16.mxu0 0
        %1130 = vmatpush1.bf16.msra.mxu0 %v971
        %1131 = vmatprep.subr.bf16.mxu0 0
        %1132 = vmatpush2.bf16.msra.mxu0 %v986
        %1133 = vmatprep.subr.bf16.mxu0 0
        %1134 = vmatpush2.bf16.msra.mxu0 %v985
        %1135 = vmatprep.subr.bf16.mxu0 0
        %1136 = vmatpush2.bf16.msra.mxu0 %v984
        %1137 = vmatprep.subr.bf16.mxu0 0
        %1138 = vmatpush2.bf16.msra.mxu0 %v983
        %1139 = vmatprep.subr.bf16.mxu0 0
        %1140 = vmatpush2.bf16.msra.mxu0 %v982
        %1141 = vmatprep.subr.bf16.mxu0 0
        %1142 = vmatpush2.bf16.msra.mxu0 %v981
        %1143 = vmatprep.subr.bf16.mxu0 0
        %1144 = vmatpush2.bf16.msra.mxu0 %v980
        %1145 = vmatprep.subr.bf16.mxu0 0
        %1146 = vmatpush2.bf16.msra.mxu0 %v979
        %1147 = vmatprep.mubr.bf16.mxu0 %v490
        %1148 = vmatmul.mubr.bf16.gmra.mxu0 %v490
        %v1149 = vpop.f32.mrf.mxu0
        %v1150 = vadd.f32 0.0, %v1149
        %v1151 = vpop.f32.mrf.mxu0
        %v1152 = vpop.f32.mrf.mxu0
        %v1153 = vadd.f32 0.0, %v1152
        %v1154 = vpop.f32.mrf.mxu0
        %1155 = vmatprep.mubr.bf16.mxu0 %v492
        %1156 = vmatmul.mubr.bf16.gmra.mxu0 %v491
        %v1157 = vpop.f32.mrf.mxu0
        %v1158 = vadd.f32 0.0, %v1157
        %v1159 = vpop.f32.mrf.mxu0
        %v1160 = vpop.f32.mrf.mxu0
        %v1161 = vadd.f32 0.0, %v1160
        %v1162 = vpop.f32.mrf.mxu0
        %1163 = vmatprep.mubr.bf16.mxu0 %v495
        %1164 = vmatmul.mubr.bf16.gmra.mxu0 %v494
        %v1165 = vpop.f32.mrf.mxu0
        %v1166 = vadd.f32 0.0, %v1165
        %v1167 = vpop.f32.mrf.mxu0
        %v1168 = vpop.f32.mrf.mxu0
        %v1169 = vadd.f32 0.0, %v1168
        %v1170 = vpop.f32.mrf.mxu0
        %1171 = vmatprep.mubr.bf16.mxu0 %v498
        %1172 = vmatmul.mubr.bf16.gmra.mxu0 %v497
        %v1173 = vpop.f32.mrf.mxu0
        %v1174 = vadd.f32 0.0, %v1173
        %v1175 = vpop.f32.mrf.mxu0
        %v1176 = vpop.f32.mrf.mxu0
        %v1177 = vadd.f32 0.0, %v1176
        %v1178 = vpop.f32.mrf.mxu0
        %1179 = vmatprep.mubr.bf16.mxu0 %v501
        %1180 = vmatmul.mubr.bf16.gmra.mxu0 %v500
        %v1181 = vpop.f32.mrf.mxu0
        %v1182 = vadd.f32 0.0, %v1181
        %v1183 = vpop.f32.mrf.mxu0
        %v1184 = vpop.f32.mrf.mxu0
        %v1185 = vadd.f32 0.0, %v1184
        %v1186 = vpop.f32.mrf.mxu0
        %1187 = vmatprep.mubr.bf16.mxu0 %v504
        %1188 = vmatmul.mubr.bf16.gmra.mxu0 %v503
        %v1189 = vpop.f32.mrf.mxu0
        %v1190 = vadd.f32 0.0, %v1189
        %v1191 = vpop.f32.mrf.mxu0
        %v1192 = vpop.f32.mrf.mxu0
        %v1193 = vadd.f32 0.0, %v1192
        %v1194 = vpop.f32.mrf.mxu0
        %1195 = vmatprep.mubr.bf16.mxu0 %v507
        %1196 = vmatmul.mubr.bf16.gmra.mxu0 %v506
        %v1197 = vpop.f32.mrf.mxu0
        %v1198 = vadd.f32 0.0, %v1197
        %v1199 = vpop.f32.mrf.mxu0
        %v1200 = vpop.f32.mrf.mxu0
        %v1201 = vadd.f32 0.0, %v1200
        %v1202 = vpop.f32.mrf.mxu0
        %1203 = vmatprep.mubr.bf16.mxu0 %v510
        %1204 = vmatmul.mubr.bf16.gmra.mxu0 %v509
        %v1205 = vpop.f32.mrf.mxu0
        %v1206 = vadd.f32 0.0, %v1205
        %v1207 = vpop.f32.mrf.mxu0
        %v1208 = vpop.f32.mrf.mxu0
        %v1209 = vadd.f32 0.0, %v1208
        %v1210 = vpop.f32.mrf.mxu0
        %1211 = vmatprep.mubr.bf16.mxu0 %v513
        %1212 = vmatmul.mubr.bf16.gmra.mxu0 %v512
        %v1213 = vpop.f32.mrf.mxu0
        %v1214 = vadd.f32 0.0, %v1213
        %v1215 = vpop.f32.mrf.mxu0
        %v1216 = vpop.f32.mrf.mxu0
        %v1217 = vadd.f32 0.0, %v1216
        %v1218 = vpop.f32.mrf.mxu0
        %1219 = vmatprep.mubr.bf16.mxu0 %v516
        %1220 = vmatmul.mubr.bf16.gmra.mxu0 %v515
        %v1221 = vpop.f32.mrf.mxu0
        %v1222 = vadd.f32 0.0, %v1221
        %v1223 = vpop.f32.mrf.mxu0
        %v1224 = vpop.f32.mrf.mxu0
        %v1225 = vadd.f32 0.0, %v1224
        %v1226 = vpop.f32.mrf.mxu0
        %1227 = vmatprep.mubr.bf16.mxu0 %v519
        %1228 = vmatmul.mubr.bf16.gmra.mxu0 %v518
        %v1229 = vpop.f32.mrf.mxu0
        %v1230 = vadd.f32 0.0, %v1229
        %v1231 = vpop.f32.mrf.mxu0
        %v1232 = vpop.f32.mrf.mxu0
        %v1233 = vadd.f32 0.0, %v1232
        %v1234 = vpop.f32.mrf.mxu0
        %1235 = vmatprep.mubr.bf16.mxu0 %v522
        %1236 = vmatmul.mubr.bf16.gmra.mxu0 %v521
        %v1237 = vpop.f32.mrf.mxu0
        %v1238 = vadd.f32 0.0, %v1237
        %v1239 = vpop.f32.mrf.mxu0
        %v1240 = vpop.f32.mrf.mxu0
        %v1241 = vadd.f32 0.0, %v1240
        %v1242 = vpop.f32.mrf.mxu0
        %1243 = vmatprep.mubr.bf16.mxu0 %v525
        %1244 = vmatmul.mubr.bf16.gmra.mxu0 %v524
        %v1245 = vpop.f32.mrf.mxu0
        %v1246 = vadd.f32 0.0, %v1245
        %v1247 = vpop.f32.mrf.mxu0
        %v1248 = vpop.f32.mrf.mxu0
        %v1249 = vadd.f32 0.0, %v1248
        %v1250 = vpop.f32.mrf.mxu0
        %1251 = vmatprep.mubr.bf16.mxu0 %v528
        %1252 = vmatmul.mubr.bf16.gmra.mxu0 %v527
        %v1253 = vpop.f32.mrf.mxu0
        %v1254 = vadd.f32 0.0, %v1253
        %v1255 = vpop.f32.mrf.mxu0
        %v1256 = vpop.f32.mrf.mxu0
        %v1257 = vadd.f32 0.0, %v1256
        %v1258 = vpop.f32.mrf.mxu0
        %1259 = vmatprep.mubr.bf16.mxu0 %v531
        %1260 = vmatmul.mubr.bf16.gmra.mxu0 %v530
        %v1261 = vpop.f32.mrf.mxu0
        %v1262 = vadd.f32 0.0, %v1261
        %v1263 = vpop.f32.mrf.mxu0
        %v1264 = vpop.f32.mrf.mxu0
        %v1265 = vadd.f32 0.0, %v1264
        %v1266 = vpop.f32.mrf.mxu0
        %1267 = vmatprep.mubr.bf16.mxu0 %v534
        %1268 = vmatmul.mubr.bf16.gmra.mxu0 %v533
        %v1269 = vpop.f32.mrf.mxu0
        %v1270 = vadd.f32 0.0, %v1269
        %v1271 = vpop.f32.mrf.mxu0
        %v1272 = vpop.f32.mrf.mxu0
        %v1273 = vadd.f32 0.0, %v1272
        %v1274 = vpop.f32.mrf.mxu0
        %1275 = vdwg.mxu0
        %1276 = vmatprep.subr.bf16.mxu0 0
        %1277 = vmatpush1.bf16.msra.mxu0 %v994
        %1278 = vmatprep.subr.bf16.mxu0 0
        %1279 = vmatpush1.bf16.msra.mxu0 %v993
        %1280 = vmatprep.subr.bf16.mxu0 0
        %1281 = vmatpush1.bf16.msra.mxu0 %v992
        %1282 = vmatprep.subr.bf16.mxu0 0
        %1283 = vmatpush1.bf16.msra.mxu0 %v991
        %1284 = vmatprep.subr.bf16.mxu0 0
        %1285 = vmatpush1.bf16.msra.mxu0 %v990
        %1286 = vmatprep.subr.bf16.mxu0 0
        %1287 = vmatpush1.bf16.msra.mxu0 %v989
        %1288 = vmatprep.subr.bf16.mxu0 0
        %1289 = vmatpush1.bf16.msra.mxu0 %v988
        %1290 = vmatprep.subr.bf16.mxu0 0
        %1291 = vmatpush1.bf16.msra.mxu0 %v987
        %1292 = vmatprep.subr.bf16.mxu0 0
        %1293 = vmatpush2.bf16.msra.mxu0 %v1002
        %1294 = vmatprep.subr.bf16.mxu0 0
        %1295 = vmatpush2.bf16.msra.mxu0 %v1001
        %1296 = vmatprep.subr.bf16.mxu0 0
        %1297 = vmatpush2.bf16.msra.mxu0 %v1000
        %1298 = vmatprep.subr.bf16.mxu0 0
        %1299 = vmatpush2.bf16.msra.mxu0 %v999
        %1300 = vmatprep.subr.bf16.mxu0 0
        %1301 = vmatpush2.bf16.msra.mxu0 %v998
        %1302 = vmatprep.subr.bf16.mxu0 0
        %1303 = vmatpush2.bf16.msra.mxu0 %v997
        %1304 = vmatprep.subr.bf16.mxu0 0
        %1305 = vmatpush2.bf16.msra.mxu0 %v996
        %1306 = vmatprep.subr.bf16.mxu0 0
        %1307 = vmatpush2.bf16.msra.mxu0 %v995
        %1308 = vmatprep.mubr.bf16.mxu0 %v491
        %1309 = vmatmul.mubr.bf16.gmra.mxu0 %v490
        %v1310 = vpop.f32.mrf.mxu0
        %v1311 = vadd.f32 %v1150, %v1310
        %v1312 = vpop.f32.mrf.mxu0
        %v1313 = vpop.f32.mrf.mxu0
        %v1314 = vadd.f32 %v1153, %v1313
        %v1315 = vpop.f32.mrf.mxu0
        %1316 = vmatprep.mubr.bf16.mxu0 %v494
        %1317 = vmatmul.mubr.bf16.gmra.mxu0 %v493
        %v1318 = vpop.f32.mrf.mxu0
        %v1319 = vadd.f32 %v1158, %v1318
        %v1320 = vpop.f32.mrf.mxu0
        %v1321 = vpop.f32.mrf.mxu0
        %v1322 = vadd.f32 %v1161, %v1321
        %v1323 = vpop.f32.mrf.mxu0
        %1324 = vmatprep.mubr.bf16.mxu0 %v497
        %1325 = vmatmul.mubr.bf16.gmra.mxu0 %v496
        %v1326 = vpop.f32.mrf.mxu0
        %v1327 = vadd.f32 %v1166, %v1326
        %v1328 = vpop.f32.mrf.mxu0
        %v1329 = vpop.f32.mrf.mxu0
        %v1330 = vadd.f32 %v1169, %v1329
        %v1331 = vpop.f32.mrf.mxu0
        %1332 = vmatprep.mubr.bf16.mxu0 %v500
        %1333 = vmatmul.mubr.bf16.gmra.mxu0 %v499
        %v1334 = vpop.f32.mrf.mxu0
        %v1335 = vadd.f32 %v1174, %v1334
        %v1336 = vpop.f32.mrf.mxu0
        %v1337 = vpop.f32.mrf.mxu0
        %v1338 = vadd.f32 %v1177, %v1337
        %v1339 = vpop.f32.mrf.mxu0
        %1340 = vmatprep.mubr.bf16.mxu0 %v503
        %1341 = vmatmul.mubr.bf16.gmra.mxu0 %v502
        %v1342 = vpop.f32.mrf.mxu0
        %v1343 = vadd.f32 %v1182, %v1342
        %v1344 = vpop.f32.mrf.mxu0
        %v1345 = vpop.f32.mrf.mxu0
        %v1346 = vadd.f32 %v1185, %v1345
        %v1347 = vpop.f32.mrf.mxu0
        %1348 = vmatprep.mubr.bf16.mxu0 %v506
        %1349 = vmatmul.mubr.bf16.gmra.mxu0 %v505
        %v1350 = vpop.f32.mrf.mxu0
        %v1351 = vadd.f32 %v1190, %v1350
        %v1352 = vpop.f32.mrf.mxu0
        %v1353 = vpop.f32.mrf.mxu0
        %v1354 = vadd.f32 %v1193, %v1353
        %v1355 = vpop.f32.mrf.mxu0
        %1356 = vmatprep.mubr.bf16.mxu0 %v509
        %1357 = vmatmul.mubr.bf16.gmra.mxu0 %v508
        %v1358 = vpop.f32.mrf.mxu0
        %v1359 = vadd.f32 %v1198, %v1358
        %v1360 = vpop.f32.mrf.mxu0
        %v1361 = vpop.f32.mrf.mxu0
        %v1362 = vadd.f32 %v1201, %v1361
        %v1363 = vpop.f32.mrf.mxu0
        %1364 = vmatprep.mubr.bf16.mxu0 %v512
        %1365 = vmatmul.mubr.bf16.gmra.mxu0 %v511
        %v1366 = vpop.f32.mrf.mxu0
        %v1367 = vadd.f32 %v1206, %v1366
        %v1368 = vpop.f32.mrf.mxu0
        %v1369 = vpop.f32.mrf.mxu0
        %v1370 = vadd.f32 %v1209, %v1369
        %v1371 = vpop.f32.mrf.mxu0
        %1372 = vmatprep.mubr.bf16.mxu0 %v515
        %1373 = vmatmul.mubr.bf16.gmra.mxu0 %v514
        %v1374 = vpop.f32.mrf.mxu0
        %v1375 = vadd.f32 %v1214, %v1374
        %v1376 = vpop.f32.mrf.mxu0
        %v1377 = vpop.f32.mrf.mxu0
        %v1378 = vadd.f32 %v1217, %v1377
        %v1379 = vpop.f32.mrf.mxu0
        %1380 = vmatprep.mubr.bf16.mxu0 %v518
        %1381 = vmatmul.mubr.bf16.gmra.mxu0 %v517
        %v1382 = vpop.f32.mrf.mxu0
        %v1383 = vadd.f32 %v1222, %v1382
        %v1384 = vpop.f32.mrf.mxu0
        %v1385 = vpop.f32.mrf.mxu0
        %v1386 = vadd.f32 %v1225, %v1385
        %v1387 = vpop.f32.mrf.mxu0
        %1388 = vmatprep.mubr.bf16.mxu0 %v521
        %1389 = vmatmul.mubr.bf16.gmra.mxu0 %v520
        %v1390 = vpop.f32.mrf.mxu0
        %v1391 = vadd.f32 %v1230, %v1390
        %v1392 = vpop.f32.mrf.mxu0
        %v1393 = vpop.f32.mrf.mxu0
        %v1394 = vadd.f32 %v1233, %v1393
        %v1395 = vpop.f32.mrf.mxu0
        %1396 = vmatprep.mubr.bf16.mxu0 %v524
        %1397 = vmatmul.mubr.bf16.gmra.mxu0 %v523
        %v1398 = vpop.f32.mrf.mxu0
        %v1399 = vadd.f32 %v1238, %v1398
        %v1400 = vpop.f32.mrf.mxu0
        %v1401 = vpop.f32.mrf.mxu0
        %v1402 = vadd.f32 %v1241, %v1401
        %v1403 = vpop.f32.mrf.mxu0
        %1404 = vmatprep.mubr.bf16.mxu0 %v527
        %1405 = vmatmul.mubr.bf16.gmra.mxu0 %v526
        %v1406 = vpop.f32.mrf.mxu0
        %v1407 = vadd.f32 %v1246, %v1406
        %v1408 = vpop.f32.mrf.mxu0
        %v1409 = vpop.f32.mrf.mxu0
        %v1410 = vadd.f32 %v1249, %v1409
        %v1411 = vpop.f32.mrf.mxu0
        %1412 = vmatprep.mubr.bf16.mxu0 %v530
        %1413 = vmatmul.mubr.bf16.gmra.mxu0 %v529
        %v1414 = vpop.f32.mrf.mxu0
        %v1415 = vadd.f32 %v1254, %v1414
        %v1416 = vpop.f32.mrf.mxu0
        %v1417 = vpop.f32.mrf.mxu0
        %v1418 = vadd.f32 %v1257, %v1417
        %v1419 = vpop.f32.mrf.mxu0
        %1420 = vmatprep.mubr.bf16.mxu0 %v533
        %1421 = vmatmul.mubr.bf16.gmra.mxu0 %v532
        %v1422 = vpop.f32.mrf.mxu0
        %v1423 = vadd.f32 %v1262, %v1422
        %v1424 = vpop.f32.mrf.mxu0
        %v1425 = vpop.f32.mrf.mxu0
        %v1426 = vadd.f32 %v1265, %v1425
        %v1427 = vpop.f32.mrf.mxu0
        %1428 = vmatprep.mubr.bf16.mxu0 %v536
        %1429 = vmatmul.mubr.bf16.gmra.mxu0 %v535
        %v1430 = vpop.f32.mrf.mxu0
        %v1431 = vadd.f32 %v1270, %v1430
        %v1432 = vpop.f32.mrf.mxu0
        %v1433 = vpop.f32.mrf.mxu0
        %v1434 = vadd.f32 %v1273, %v1433
        %v1435 = vpop.f32.mrf.mxu0
        %1436 = vdwg.mxu0
        %1437 = vmatprep.subr.bf16.mxu0 0
        %1438 = vmatpush1.bf16.msra.mxu0 %v1010
        %1439 = vmatprep.subr.bf16.mxu0 0
        %1440 = vmatpush1.bf16.msra.mxu0 %v1009
        %1441 = vmatprep.subr.bf16.mxu0 0
        %1442 = vmatpush1.bf16.msra.mxu0 %v1008
        %1443 = vmatprep.subr.bf16.mxu0 0
        %1444 = vmatpush1.bf16.msra.mxu0 %v1007
        %1445 = vmatprep.subr.bf16.mxu0 0
        %1446 = vmatpush1.bf16.msra.mxu0 %v1006
        %1447 = vmatprep.subr.bf16.mxu0 0
        %1448 = vmatpush1.bf16.msra.mxu0 %v1005
        %1449 = vmatprep.subr.bf16.mxu0 0
        %1450 = vmatpush1.bf16.msra.mxu0 %v1004
        %1451 = vmatprep.subr.bf16.mxu0 0
        %1452 = vmatpush1.bf16.msra.mxu0 %v1003
        %1453 = vmatprep.subr.bf16.mxu0 0
        %1454 = vmatpush2.bf16.msra.mxu0 %v1018
        %1455 = vmatprep.subr.bf16.mxu0 0
        %1456 = vmatpush2.bf16.msra.mxu0 %v1017
        %1457 = vmatprep.subr.bf16.mxu0 0
        %1458 = vmatpush2.bf16.msra.mxu0 %v1016
        %1459 = vmatprep.subr.bf16.mxu0 0
        %1460 = vmatpush2.bf16.msra.mxu0 %v1015
        %1461 = vmatprep.subr.bf16.mxu0 0
        %1462 = vmatpush2.bf16.msra.mxu0 %v1014
        %1463 = vmatprep.subr.bf16.mxu0 0
        %1464 = vmatpush2.bf16.msra.mxu0 %v1013
        %1465 = vmatprep.subr.bf16.mxu0 0
        %1466 = vmatpush2.bf16.msra.mxu0 %v1012
        %1467 = vmatprep.subr.bf16.mxu0 0
        %1468 = vmatpush2.bf16.msra.mxu0 %v1011
        %1469 = vmatprep.mubr.bf16.mxu0 %v493
        %1470 = vmatmul.mubr.bf16.gmra.mxu0 %v492
        %v1471 = vpop.f32.mrf.mxu0
        %v1472 = vadd.f32 %v1311, %v1471
        %v1473 = vpop.f32.mrf.mxu0
        %v1474 = vpop.f32.mrf.mxu0
        %v1475 = vadd.f32 %v1314, %v1474
        %v1476 = vpop.f32.mrf.mxu0
        %1477 = vmatprep.mubr.bf16.mxu0 %v496
        %1478 = vmatmul.mubr.bf16.gmra.mxu0 %v495
        %v1479 = vpop.f32.mrf.mxu0
        %v1480 = vadd.f32 %v1319, %v1479
        %v1481 = vpop.f32.mrf.mxu0
        %v1482 = vpop.f32.mrf.mxu0
        %v1483 = vadd.f32 %v1322, %v1482
        %v1484 = vpop.f32.mrf.mxu0
        %1485 = vmatprep.mubr.bf16.mxu0 %v499
        %1486 = vmatmul.mubr.bf16.gmra.mxu0 %v498
        %v1487 = vpop.f32.mrf.mxu0
        %v1488 = vadd.f32 %v1327, %v1487
        %v1489 = vpop.f32.mrf.mxu0
        %v1490 = vpop.f32.mrf.mxu0
        %v1491 = vadd.f32 %v1330, %v1490
        %v1492 = vpop.f32.mrf.mxu0
        %1493 = vmatprep.mubr.bf16.mxu0 %v502
        %1494 = vmatmul.mubr.bf16.gmra.mxu0 %v501
        %v1495 = vpop.f32.mrf.mxu0
        %v1496 = vadd.f32 %v1335, %v1495
        %v1497 = vpop.f32.mrf.mxu0
        %v1498 = vpop.f32.mrf.mxu0
        %v1499 = vadd.f32 %v1338, %v1498
        %v1500 = vpop.f32.mrf.mxu0
        %1501 = vmatprep.mubr.bf16.mxu0 %v505
        %1502 = vmatmul.mubr.bf16.gmra.mxu0 %v504
        %v1503 = vpop.f32.mrf.mxu0
        %v1504 = vadd.f32 %v1343, %v1503
        %v1505 = vpop.f32.mrf.mxu0
        %v1506 = vpop.f32.mrf.mxu0
        %v1507 = vadd.f32 %v1346, %v1506
        %v1508 = vpop.f32.mrf.mxu0
        %1509 = vmatprep.mubr.bf16.mxu0 %v508
        %1510 = vmatmul.mubr.bf16.gmra.mxu0 %v507
        %v1511 = vpop.f32.mrf.mxu0
        %v1512 = vadd.f32 %v1351, %v1511
        %v1513 = vpop.f32.mrf.mxu0
        %v1514 = vpop.f32.mrf.mxu0
        %v1515 = vadd.f32 %v1354, %v1514
        %v1516 = vpop.f32.mrf.mxu0
        %1517 = vmatprep.mubr.bf16.mxu0 %v511
        %1518 = vmatmul.mubr.bf16.gmra.mxu0 %v510
        %v1519 = vpop.f32.mrf.mxu0
        %v1520 = vadd.f32 %v1359, %v1519
        %v1521 = vpop.f32.mrf.mxu0
        %v1522 = vpop.f32.mrf.mxu0
        %v1523 = vadd.f32 %v1362, %v1522
        %v1524 = vpop.f32.mrf.mxu0
        %1525 = vmatprep.mubr.bf16.mxu0 %v514
        %1526 = vmatmul.mubr.bf16.gmra.mxu0 %v513
        %v1527 = vpop.f32.mrf.mxu0
        %v1528 = vadd.f32 %v1367, %v1527
        %v1529 = vpop.f32.mrf.mxu0
        %v1530 = vpop.f32.mrf.mxu0
        %v1531 = vadd.f32 %v1370, %v1530
        %v1532 = vpop.f32.mrf.mxu0
        %1533 = vmatprep.mubr.bf16.mxu0 %v517
        %1534 = vmatmul.mubr.bf16.gmra.mxu0 %v516
        %v1535 = vpop.f32.mrf.mxu0
        %v1536 = vadd.f32 %v1375, %v1535
        %v1537 = vpop.f32.mrf.mxu0
        %v1538 = vpop.f32.mrf.mxu0
        %v1539 = vadd.f32 %v1378, %v1538
        %v1540 = vpop.f32.mrf.mxu0
        %1541 = vmatprep.mubr.bf16.mxu0 %v520
        %1542 = vmatmul.mubr.bf16.gmra.mxu0 %v519
        %v1543 = vpop.f32.mrf.mxu0
        %v1544 = vadd.f32 %v1383, %v1543
        %v1545 = vpop.f32.mrf.mxu0
        %v1546 = vpop.f32.mrf.mxu0
        %v1547 = vadd.f32 %v1386, %v1546
        %v1548 = vpop.f32.mrf.mxu0
        %1549 = vmatprep.mubr.bf16.mxu0 %v523
        %1550 = vmatmul.mubr.bf16.gmra.mxu0 %v522
        %v1551 = vpop.f32.mrf.mxu0
        %v1552 = vadd.f32 %v1391, %v1551
        %v1553 = vpop.f32.mrf.mxu0
        %v1554 = vpop.f32.mrf.mxu0
        %v1555 = vadd.f32 %v1394, %v1554
        %v1556 = vpop.f32.mrf.mxu0
        %1557 = vmatprep.mubr.bf16.mxu0 %v526
        %1558 = vmatmul.mubr.bf16.gmra.mxu0 %v525
        %v1559 = vpop.f32.mrf.mxu0
        %v1560 = vadd.f32 %v1399, %v1559
        %v1561 = vpop.f32.mrf.mxu0
        %v1562 = vpop.f32.mrf.mxu0
        %v1563 = vadd.f32 %v1402, %v1562
        %v1564 = vpop.f32.mrf.mxu0
        %1565 = vmatprep.mubr.bf16.mxu0 %v529
        %1566 = vmatmul.mubr.bf16.gmra.mxu0 %v528
        %v1567 = vpop.f32.mrf.mxu0
        %v1568 = vadd.f32 %v1407, %v1567
        %v1569 = vpop.f32.mrf.mxu0
        %v1570 = vpop.f32.mrf.mxu0
        %v1571 = vadd.f32 %v1410, %v1570
        %v1572 = vpop.f32.mrf.mxu0
        %1573 = vmatprep.mubr.bf16.mxu0 %v532
        %1574 = vmatmul.mubr.bf16.gmra.mxu0 %v531
        %v1575 = vpop.f32.mrf.mxu0
        %v1576 = vadd.f32 %v1415, %v1575
        %v1577 = vpop.f32.mrf.mxu0
        %v1578 = vpop.f32.mrf.mxu0
        %v1579 = vadd.f32 %v1418, %v1578
        %v1580 = vpop.f32.mrf.mxu0
        %1581 = vmatprep.mubr.bf16.mxu0 %v535
        %1582 = vmatmul.mubr.bf16.gmra.mxu0 %v534
        %v1583 = vpop.f32.mrf.mxu0
        %v1584 = vadd.f32 %v1423, %v1583
        %v1585 = vpop.f32.mrf.mxu0
        %v1586 = vpop.f32.mrf.mxu0
        %v1587 = vadd.f32 %v1426, %v1586
        %v1588 = vpop.f32.mrf.mxu0
        %1589 = vmatprep.mubr.bf16.mxu0 %v538
        %1590 = vmatmul.mubr.bf16.gmra.mxu0 %v537
        %v1591 = vpop.f32.mrf.mxu0
        %v1592 = vadd.f32 %v1431, %v1591
        %v1593 = vpop.f32.mrf.mxu0
        %v1594 = vpop.f32.mrf.mxu0
        %v1595 = vadd.f32 %v1434, %v1594
        %v1596 = vpop.f32.mrf.mxu0
        %1597 = vdwg.mxu0
        %1598 = vmatprep.subr.bf16.mxu0 0
        %1599 = vmatpush1.bf16.msra.mxu0 %v1026
        %1600 = vmatprep.subr.bf16.mxu0 0
        %1601 = vmatpush1.bf16.msra.mxu0 %v1025
        %1602 = vmatprep.subr.bf16.mxu0 0
        %1603 = vmatpush1.bf16.msra.mxu0 %v1024
        %1604 = vmatprep.subr.bf16.mxu0 0
        %1605 = vmatpush1.bf16.msra.mxu0 %v1023
        %1606 = vmatprep.subr.bf16.mxu0 0
        %1607 = vmatpush1.bf16.msra.mxu0 %v1022
        %1608 = vmatprep.subr.bf16.mxu0 0
        %1609 = vmatpush1.bf16.msra.mxu0 %v1021
        %1610 = vmatprep.subr.bf16.mxu0 0
        %1611 = vmatpush1.bf16.msra.mxu0 %v1020
        %1612 = vmatprep.subr.bf16.mxu0 0
        %1613 = vmatpush1.bf16.msra.mxu0 %v1019
        %1614 = vmatprep.subr.bf16.mxu0 0
        %1615 = vmatpush2.bf16.msra.mxu0 %v1034
        %1616 = vmatprep.subr.bf16.mxu0 0
        %1617 = vmatpush2.bf16.msra.mxu0 %v1033
        %1618 = vmatprep.subr.bf16.mxu0 0
        %1619 = vmatpush2.bf16.msra.mxu0 %v1032
        %1620 = vmatprep.subr.bf16.mxu0 0
        %1621 = vmatpush2.bf16.msra.mxu0 %v1031
        %1622 = vmatprep.subr.bf16.mxu0 0
        %1623 = vmatpush2.bf16.msra.mxu0 %v1030
        %1624 = vmatprep.subr.bf16.mxu0 0
        %1625 = vmatpush2.bf16.msra.mxu0 %v1029
        %1626 = vmatprep.subr.bf16.mxu0 0
        %1627 = vmatpush2.bf16.msra.mxu0 %v1028
        %1628 = vmatprep.subr.bf16.mxu0 0
        %1629 = vmatpush2.bf16.msra.mxu0 %v1027
        %1630 = vmatprep.mubr.bf16.mxu0 %v495
        %1631 = vmatmul.mubr.bf16.gmra.mxu0 %v494
        %v1632 = vpop.f32.mrf.mxu0
        %v1633 = vadd.f32 %v1472, %v1632
        %v1634 = vpop.f32.mrf.mxu0
        %v1635 = vpop.f32.mrf.mxu0
        %v1636 = vadd.f32 %v1475, %v1635
        %v1637 = vpop.f32.mrf.mxu0
        %1638 = vmatprep.mubr.bf16.mxu0 %v498
        %1639 = vmatmul.mubr.bf16.gmra.mxu0 %v497
        %v1640 = vpop.f32.mrf.mxu0
        %v1641 = vadd.f32 %v1480, %v1640
        %v1642 = vpop.f32.mrf.mxu0
        %v1643 = vpop.f32.mrf.mxu0
        %v1644 = vadd.f32 %v1483, %v1643
        %v1645 = vpop.f32.mrf.mxu0
        %1646 = vmatprep.mubr.bf16.mxu0 %v501
        %1647 = vmatmul.mubr.bf16.gmra.mxu0 %v500
        %v1648 = vpop.f32.mrf.mxu0
        %v1649 = vadd.f32 %v1488, %v1648
        %v1650 = vpop.f32.mrf.mxu0
        %v1651 = vpop.f32.mrf.mxu0
        %v1652 = vadd.f32 %v1491, %v1651
        %v1653 = vpop.f32.mrf.mxu0
        %1654 = vmatprep.mubr.bf16.mxu0 %v504
        %1655 = vmatmul.mubr.bf16.gmra.mxu0 %v503
        %v1656 = vpop.f32.mrf.mxu0
        %v1657 = vadd.f32 %v1496, %v1656
        %v1658 = vpop.f32.mrf.mxu0
        %v1659 = vpop.f32.mrf.mxu0
        %v1660 = vadd.f32 %v1499, %v1659
        %v1661 = vpop.f32.mrf.mxu0
        %1662 = vmatprep.mubr.bf16.mxu0 %v507
        %1663 = vmatmul.mubr.bf16.gmra.mxu0 %v506
        %v1664 = vpop.f32.mrf.mxu0
        %v1665 = vadd.f32 %v1504, %v1664
        %v1666 = vpop.f32.mrf.mxu0
        %v1667 = vpop.f32.mrf.mxu0
        %v1668 = vadd.f32 %v1507, %v1667
        %v1669 = vpop.f32.mrf.mxu0
        %1670 = vmatprep.mubr.bf16.mxu0 %v510
        %1671 = vmatmul.mubr.bf16.gmra.mxu0 %v509
        %v1672 = vpop.f32.mrf.mxu0
        %v1673 = vadd.f32 %v1512, %v1672
        %v1674 = vpop.f32.mrf.mxu0
        %v1675 = vpop.f32.mrf.mxu0
        %v1676 = vadd.f32 %v1515, %v1675
        %v1677 = vpop.f32.mrf.mxu0
        %1678 = vmatprep.mubr.bf16.mxu0 %v513
        %1679 = vmatmul.mubr.bf16.gmra.mxu0 %v512
        %v1680 = vpop.f32.mrf.mxu0
        %v1681 = vadd.f32 %v1520, %v1680
        %v1682 = vpop.f32.mrf.mxu0
        %v1683 = vpop.f32.mrf.mxu0
        %v1684 = vadd.f32 %v1523, %v1683
        %v1685 = vpop.f32.mrf.mxu0
        %1686 = vmatprep.mubr.bf16.mxu0 %v516
        %1687 = vmatmul.mubr.bf16.gmra.mxu0 %v515
        %v1688 = vpop.f32.mrf.mxu0
        %v1689 = vadd.f32 %v1528, %v1688
        %v1690 = vpop.f32.mrf.mxu0
        %v1691 = vpop.f32.mrf.mxu0
        %v1692 = vadd.f32 %v1531, %v1691
        %v1693 = vpop.f32.mrf.mxu0
        %1694 = vmatprep.mubr.bf16.mxu0 %v519
        %1695 = vmatmul.mubr.bf16.gmra.mxu0 %v518
        %v1696 = vpop.f32.mrf.mxu0
        %v1697 = vadd.f32 %v1536, %v1696
        %v1698 = vpop.f32.mrf.mxu0
        %v1699 = vpop.f32.mrf.mxu0
        %v1700 = vadd.f32 %v1539, %v1699
        %v1701 = vpop.f32.mrf.mxu0
        %1702 = vmatprep.mubr.bf16.mxu0 %v522
        %1703 = vmatmul.mubr.bf16.gmra.mxu0 %v521
        %v1704 = vpop.f32.mrf.mxu0
        %v1705 = vadd.f32 %v1544, %v1704
        %v1706 = vpop.f32.mrf.mxu0
        %v1707 = vpop.f32.mrf.mxu0
        %v1708 = vadd.f32 %v1547, %v1707
        %v1709 = vpop.f32.mrf.mxu0
        %1710 = vmatprep.mubr.bf16.mxu0 %v525
        %1711 = vmatmul.mubr.bf16.gmra.mxu0 %v524
        %v1712 = vpop.f32.mrf.mxu0
        %v1713 = vadd.f32 %v1552, %v1712
        %v1714 = vpop.f32.mrf.mxu0
        %v1715 = vpop.f32.mrf.mxu0
        %v1716 = vadd.f32 %v1555, %v1715
        %v1717 = vpop.f32.mrf.mxu0
        %1718 = vmatprep.mubr.bf16.mxu0 %v528
        %1719 = vmatmul.mubr.bf16.gmra.mxu0 %v527
        %v1720 = vpop.f32.mrf.mxu0
        %v1721 = vadd.f32 %v1560, %v1720
        %v1722 = vpop.f32.mrf.mxu0
        %v1723 = vpop.f32.mrf.mxu0
        %v1724 = vadd.f32 %v1563, %v1723
        %v1725 = vpop.f32.mrf.mxu0
        %1726 = vmatprep.mubr.bf16.mxu0 %v531
        %1727 = vmatmul.mubr.bf16.gmra.mxu0 %v530
        %v1728 = vpop.f32.mrf.mxu0
        %v1729 = vadd.f32 %v1568, %v1728
        %v1730 = vpop.f32.mrf.mxu0
        %v1731 = vpop.f32.mrf.mxu0
        %v1732 = vadd.f32 %v1571, %v1731
        %v1733 = vpop.f32.mrf.mxu0
        %1734 = vmatprep.mubr.bf16.mxu0 %v534
        %1735 = vmatmul.mubr.bf16.gmra.mxu0 %v533
        %v1736 = vpop.f32.mrf.mxu0
        %v1737 = vadd.f32 %v1576, %v1736
        %v1738 = vpop.f32.mrf.mxu0
        %v1739 = vpop.f32.mrf.mxu0
        %v1740 = vadd.f32 %v1579, %v1739
        %v1741 = vpop.f32.mrf.mxu0
        %1742 = vmatprep.mubr.bf16.mxu0 %v537
        %1743 = vmatmul.mubr.bf16.gmra.mxu0 %v536
        %v1744 = vpop.f32.mrf.mxu0
        %v1745 = vadd.f32 %v1584, %v1744
        %v1746 = vpop.f32.mrf.mxu0
        %v1747 = vpop.f32.mrf.mxu0
        %v1748 = vadd.f32 %v1587, %v1747
        %v1749 = vpop.f32.mrf.mxu0
        %1750 = vmatprep.mubr.bf16.mxu0 %v490
        %1751 = vmatmul.mubr.bf16.gmra.mxu0 %v490
        %v1752 = vpop.f32.mrf.mxu0
        %v1753 = vadd.f32 %v1592, %v1752
        %v1754 = vpop.f32.mrf.mxu0
        %v1755 = vpop.f32.mrf.mxu0
        %v1756 = vadd.f32 %v1595, %v1755
        %v1757 = vpop.f32.mrf.mxu0
        %1758 = vdwg.mxu0
        %1759 = vmatprep.subr.bf16.mxu0 0
        %1760 = vmatpush1.bf16.msra.mxu0 %v1042
        %1761 = vmatprep.subr.bf16.mxu0 0
        %1762 = vmatpush1.bf16.msra.mxu0 %v1041
        %1763 = vmatprep.subr.bf16.mxu0 0
        %1764 = vmatpush1.bf16.msra.mxu0 %v1040
        %1765 = vmatprep.subr.bf16.mxu0 0
        %1766 = vmatpush1.bf16.msra.mxu0 %v1039
        %1767 = vmatprep.subr.bf16.mxu0 0
        %1768 = vmatpush1.bf16.msra.mxu0 %v1038
        %1769 = vmatprep.subr.bf16.mxu0 0
        %1770 = vmatpush1.bf16.msra.mxu0 %v1037
        %1771 = vmatprep.subr.bf16.mxu0 0
        %1772 = vmatpush1.bf16.msra.mxu0 %v1036
        %1773 = vmatprep.subr.bf16.mxu0 0
        %1774 = vmatpush1.bf16.msra.mxu0 %v1035
        %1775 = vmatprep.subr.bf16.mxu0 0
        %1776 = vmatpush2.bf16.msra.mxu0 0
        %1777 = vmatprep.subr.bf16.mxu0 0
        %1778 = vmatpush2.bf16.msra.mxu0 0
        %1779 = vmatprep.subr.bf16.mxu0 0
        %1780 = vmatpush2.bf16.msra.mxu0 0
        %1781 = vmatprep.subr.bf16.mxu0 0
        %1782 = vmatpush2.bf16.msra.mxu0 0
        %1783 = vmatprep.subr.bf16.mxu0 0
        %1784 = vmatpush2.bf16.msra.mxu0 0
        %1785 = vmatprep.subr.bf16.mxu0 0
        %1786 = vmatpush2.bf16.msra.mxu0 0
        %1787 = vmatprep.subr.bf16.mxu0 0
        %1788 = vmatpush2.bf16.msra.mxu0 0
        %1789 = vmatprep.subr.bf16.mxu0 0
        %1790 = vmatpush2.bf16.msra.mxu0 0
        %1791 = vmatprep.mubr.bf16.mxu0 0
        %1792 = vmatmul.mubr.bf16.gmra.mxu0 %v496
        %v1793 = vpop.f32.mrf.mxu0
        %v1794 = vadd.f32 %v1633, %v1793
        %v1795 = vpop.f32.mrf.mxu0
        %v1796 = vpop.f32.mrf.mxu0
        %v1797 = vadd.f32 %v1636, %v1796
        %v1798 = vpop.f32.mrf.mxu0
        %1799 = vmatprep.mubr.bf16.mxu0 0
        %1800 = vmatmul.mubr.bf16.gmra.mxu0 %v499
        %v1801 = vpop.f32.mrf.mxu0
        %v1802 = vadd.f32 %v1641, %v1801
        %v1803 = vpop.f32.mrf.mxu0
        %v1804 = vpop.f32.mrf.mxu0
        %v1805 = vadd.f32 %v1644, %v1804
        %v1806 = vpop.f32.mrf.mxu0
        %1807 = vmatprep.mubr.bf16.mxu0 0
        %1808 = vmatmul.mubr.bf16.gmra.mxu0 %v502
        %v1809 = vpop.f32.mrf.mxu0
        %v1810 = vadd.f32 %v1649, %v1809
        %v1811 = vpop.f32.mrf.mxu0
        %v1812 = vpop.f32.mrf.mxu0
        %v1813 = vadd.f32 %v1652, %v1812
        %v1814 = vpop.f32.mrf.mxu0
        %1815 = vmatprep.mubr.bf16.mxu0 0
        %1816 = vmatmul.mubr.bf16.gmra.mxu0 %v505
        %v1817 = vpop.f32.mrf.mxu0
        %v1818 = vadd.f32 %v1657, %v1817
        %v1819 = vpop.f32.mrf.mxu0
        %v1820 = vpop.f32.mrf.mxu0
        %v1821 = vadd.f32 %v1660, %v1820
        %v1822 = vpop.f32.mrf.mxu0
        %1823 = vmatprep.mubr.bf16.mxu0 0
        %1824 = vmatmul.mubr.bf16.gmra.mxu0 %v508
        %v1825 = vpop.f32.mrf.mxu0
        %v1826 = vadd.f32 %v1665, %v1825
        %v1827 = vpop.f32.mrf.mxu0
        %v1828 = vpop.f32.mrf.mxu0
        %v1829 = vadd.f32 %v1668, %v1828
        %v1830 = vpop.f32.mrf.mxu0
        %1831 = vmatprep.mubr.bf16.mxu0 0
        %1832 = vmatmul.mubr.bf16.gmra.mxu0 %v511
        %v1833 = vpop.f32.mrf.mxu0
        %v1834 = vadd.f32 %v1673, %v1833
        %v1835 = vpop.f32.mrf.mxu0
        %v1836 = vpop.f32.mrf.mxu0
        %v1837 = vadd.f32 %v1676, %v1836
        %v1838 = vpop.f32.mrf.mxu0
        %1839 = vmatprep.mubr.bf16.mxu0 0
        %1840 = vmatmul.mubr.bf16.gmra.mxu0 %v514
        %v1841 = vpop.f32.mrf.mxu0
        %v1842 = vadd.f32 %v1681, %v1841
        %v1843 = vpop.f32.mrf.mxu0
        %v1844 = vpop.f32.mrf.mxu0
        %v1845 = vadd.f32 %v1684, %v1844
        %v1846 = vpop.f32.mrf.mxu0
        %1847 = vmatprep.mubr.bf16.mxu0 0
        %1848 = vmatmul.mubr.bf16.gmra.mxu0 %v517
        %v1849 = vpop.f32.mrf.mxu0
        %v1850 = vadd.f32 %v1689, %v1849
        %v1851 = vpop.f32.mrf.mxu0
        %v1852 = vpop.f32.mrf.mxu0
        %v1853 = vadd.f32 %v1692, %v1852
        %v1854 = vpop.f32.mrf.mxu0
        %1855 = vmatprep.mubr.bf16.mxu0 0
        %1856 = vmatmul.mubr.bf16.gmra.mxu0 %v520
        %v1857 = vpop.f32.mrf.mxu0
        %v1858 = vadd.f32 %v1697, %v1857
        %v1859 = vpop.f32.mrf.mxu0
        %v1860 = vpop.f32.mrf.mxu0
        %v1861 = vadd.f32 %v1700, %v1860
        %v1862 = vpop.f32.mrf.mxu0
        %1863 = vmatprep.mubr.bf16.mxu0 0
        %1864 = vmatmul.mubr.bf16.gmra.mxu0 %v523
        %v1865 = vpop.f32.mrf.mxu0
        %v1866 = vadd.f32 %v1705, %v1865
        %v1867 = vpop.f32.mrf.mxu0
        %v1868 = vpop.f32.mrf.mxu0
        %v1869 = vadd.f32 %v1708, %v1868
        %v1870 = vpop.f32.mrf.mxu0
        %1871 = vmatprep.mubr.bf16.mxu0 0
        %1872 = vmatmul.mubr.bf16.gmra.mxu0 %v526
        %v1873 = vpop.f32.mrf.mxu0
        %v1874 = vadd.f32 %v1713, %v1873
        %v1875 = vpop.f32.mrf.mxu0
        %v1876 = vpop.f32.mrf.mxu0
        %v1877 = vadd.f32 %v1716, %v1876
        %v1878 = vpop.f32.mrf.mxu0
        %1879 = vmatprep.mubr.bf16.mxu0 0
        %1880 = vmatmul.mubr.bf16.gmra.mxu0 %v529
        %v1881 = vpop.f32.mrf.mxu0
        %v1882 = vadd.f32 %v1721, %v1881
        %v1883 = vpop.f32.mrf.mxu0
        %v1884 = vpop.f32.mrf.mxu0
        %v1885 = vadd.f32 %v1724, %v1884
        %v1886 = vpop.f32.mrf.mxu0
        %1887 = vmatprep.mubr.bf16.mxu0 0
        %1888 = vmatmul.mubr.bf16.gmra.mxu0 %v532
        %v1889 = vpop.f32.mrf.mxu0
        %v1890 = vadd.f32 %v1729, %v1889
        %v1891 = vpop.f32.mrf.mxu0
        %v1892 = vpop.f32.mrf.mxu0
        %v1893 = vadd.f32 %v1732, %v1892
        %v1894 = vpop.f32.mrf.mxu0
        %1895 = vmatprep.mubr.bf16.mxu0 0
        %1896 = vmatmul.mubr.bf16.gmra.mxu0 %v535
        %v1897 = vpop.f32.mrf.mxu0
        %v1898 = vadd.f32 %v1737, %v1897
        %v1899 = vpop.f32.mrf.mxu0
        %v1900 = vpop.f32.mrf.mxu0
        %v1901 = vadd.f32 %v1740, %v1900
        %v1902 = vpop.f32.mrf.mxu0
        %1903 = vmatprep.mubr.bf16.mxu0 0
        %1904 = vmatmul.mubr.bf16.gmra.mxu0 %v538
        %v1905 = vpop.f32.mrf.mxu0
        %v1906 = vadd.f32 %v1745, %v1905
        %v1907 = vpop.f32.mrf.mxu0
        %v1908 = vpop.f32.mrf.mxu0
        %v1909 = vadd.f32 %v1748, %v1908
        %v1910 = vpop.f32.mrf.mxu0
        %1911 = vmatprep.mubr.bf16.mxu0 0
        %1912 = vmatmul.mubr.bf16.gmra.mxu0 %v490
        %v1913 = vpop.f32.mrf.mxu0
        %v1914 = vadd.f32 %v1753, %v1913
        %v1915 = vpop.f32.mrf.mxu0
        %v1916 = vpop.f32.mrf.mxu0
        %v1917 = vadd.f32 %v1756, %v1916
        %v1918 = vpop.f32.mrf.mxu0
        %1919 = vdwg.mxu0
        %v1920 = vld [vmem:[%s2] sm:$0x1]
        %v1922 = vlaneseq
        %v1923 = vshrl.u32 %v1922, 7
        %v1924 = vsub.s32 0, %v1923
        %v1925 = vrot.slane %v1920, %v1924
        %v1927 = vmul.f32 %v1794, %v1925
        %v1928 = vmul.f32 %v1797, %v1925
        %v1929 = vmul.f32 %v1802, %v1925
        %v1930 = vmul.f32 %v1805, %v1925
        %v1931 = vmul.f32 %v1810, %v1925
        %v1932 = vmul.f32 %v1813, %v1925
        %v1933 = vmul.f32 %v1818, %v1925
        %v1934 = vmul.f32 %v1821, %v1925
        %v1935 = vmul.f32 %v1826, %v1925
        %v1936 = vmul.f32 %v1829, %v1925
        %v1937 = vmul.f32 %v1834, %v1925
        %v1938 = vmul.f32 %v1837, %v1925
        %v1939 = vmul.f32 %v1842, %v1925
        %v1940 = vmul.f32 %v1845, %v1925
        %v1941 = vmul.f32 %v1850, %v1925
        %v1942 = vmul.f32 %v1853, %v1925
        %v1943 = vmul.f32 %v1858, %v1925
        %v1944 = vmul.f32 %v1861, %v1925
        %v1945 = vmul.f32 %v1866, %v1925
        %v1946 = vmul.f32 %v1869, %v1925
        %v1947 = vmul.f32 %v1874, %v1925
        %v1948 = vmul.f32 %v1877, %v1925
        %v1949 = vmul.f32 %v1882, %v1925
        %v1950 = vmul.f32 %v1885, %v1925
        %v1951 = vmul.f32 %v1890, %v1925
        %v1952 = vmul.f32 %v1893, %v1925
        %v1953 = vmul.f32 %v1898, %v1925
        %v1954 = vmul.f32 %v1901, %v1925
        %v1955 = vmul.f32 %v1906, %v1925
        %v1956 = vmul.f32 %v1909, %v1925
        %v1957 = vmul.f32 %v1914, %v1925
        %v1958 = vmul.f32 %v1917, %v1925
        %v1959 = vld [vmem:[%s3] sm:$0x1]
        %v1961 = vlaneseq
        %v1962 = vshrl.u32 %v1961, 7
        %v1963 = vsub.s32 0, %v1962
        %v1964 = vrot.slane %v1959, %v1963
        %v1966 = vadd.f32 %v1927, %v1964
        %v1967 = vadd.f32 %v1928, %v1964
        %v1968 = vadd.f32 %v1929, %v1964
        %v1969 = vadd.f32 %v1930, %v1964
        %v1970 = vadd.f32 %v1931, %v1964
        %v1971 = vadd.f32 %v1932, %v1964
        %v1972 = vadd.f32 %v1933, %v1964
        %v1973 = vadd.f32 %v1934, %v1964
        %v1974 = vadd.f32 %v1935, %v1964
        %v1975 = vadd.f32 %v1936, %v1964
        %v1976 = vadd.f32 %v1937, %v1964
        %v1977 = vadd.f32 %v1938, %v1964
        %v1978 = vadd.f32 %v1939, %v1964
        %v1979 = vadd.f32 %v1940, %v1964
        %v1980 = vadd.f32 %v1941, %v1964
        %v1981 = vadd.f32 %v1942, %v1964
        %v1982 = vadd.f32 %v1943, %v1964
        %v1983 = vadd.f32 %v1944, %v1964
        %v1984 = vadd.f32 %v1945, %v1964
        %v1985 = vadd.f32 %v1946, %v1964
        %v1986 = vadd.f32 %v1947, %v1964
        %v1987 = vadd.f32 %v1948, %v1964
        %v1988 = vadd.f32 %v1949, %v1964
        %v1989 = vadd.f32 %v1950, %v1964
        %v1990 = vadd.f32 %v1951, %v1964
        %v1991 = vadd.f32 %v1952, %v1964
        %v1992 = vadd.f32 %v1953, %v1964
        %v1993 = vadd.f32 %v1954, %v1964
        %v1994 = vadd.f32 %v1955, %v1964
        %v1995 = vadd.f32 %v1956, %v1964
        %v1996 = vadd.f32 %v1957, %v1964
        %v1997 = vadd.f32 %v1958, %v1964
        %v1998 = vmax.f32 %v1966, 0.0
        %v1999 = vmax.f32 %v1967, 0.0
        %v2000 = vmax.f32 %v1968, 0.0
        %v2001 = vmax.f32 %v1969, 0.0
        %v2002 = vmax.f32 %v1970, 0.0
        %v2003 = vmax.f32 %v1971, 0.0
        %v2004 = vmax.f32 %v1972, 0.0
        %v2005 = vmax.f32 %v1973, 0.0
        %v2006 = vmax.f32 %v1974, 0.0
        %v2007 = vmax.f32 %v1975, 0.0
        %v2008 = vmax.f32 %v1976, 0.0
        %v2009 = vmax.f32 %v1977, 0.0
        %v2010 = vmax.f32 %v1978, 0.0
        %v2011 = vmax.f32 %v1979, 0.0
        %v2012 = vmax.f32 %v1980, 0.0
        %v2013 = vmax.f32 %v1981, 0.0
        %v2014 = vmax.f32 %v1982, 0.0
        %v2015 = vmax.f32 %v1983, 0.0
        %v2016 = vmax.f32 %v1984, 0.0
        %v2017 = vmax.f32 %v1985, 0.0
        %v2018 = vmax.f32 %v1986, 0.0
        %v2019 = vmax.f32 %v1987, 0.0
        %v2020 = vmax.f32 %v1988, 0.0
        %v2021 = vmax.f32 %v1989, 0.0
        %v2022 = vmax.f32 %v1990, 0.0
        %v2023 = vmax.f32 %v1991, 0.0
        %v2024 = vmax.f32 %v1992, 0.0
        %v2025 = vmax.f32 %v1993, 0.0
        %v2026 = vmax.f32 %v1994, 0.0
        %v2027 = vmax.f32 %v1995, 0.0
        %v2028 = vmax.f32 %v1996, 0.0
        %v2029 = vmax.f32 %v1997, 0.0
        %v2062 = vcombine.high %v1998, %v1998
        %v2064 = vunpack.c.l.s4 1983009808
        %v2065 = vunpack.c.0.s8 %v2064
        %v2066 = vlaneseq
        %v2067 = vshrl.u32 %v2066, 7
        %v2068 = vsub.s32 %v2065, %v2067
        %v2069 = vrot.slane %v1998, %v2068
        %v2071 = vunpack.c.l.s4 1983009808
        %v2072 = vunpack.c.0.s8 %v2071
        %v2073 = vlaneseq
        %v2074 = vshrl.u32 %v2073, 7
        %v2075 = vsub.s32 %v2072, %v2074
        %v2076 = vrot.slane %v2062, %v2075
        %v2077 = vcombine.high %v2069, %v2069
        %v2078 = vcombine.high %v2076, %v2076
        %v2079 = vcombine.high %v1999, %v1999
        %v2081 = vunpack.c.l.s4 1983009808
        %v2082 = vunpack.c.0.s8 %v2081
        %v2083 = vlaneseq
        %v2084 = vshrl.u32 %v2083, 7
        %v2085 = vsub.s32 %v2082, %v2084
        %v2086 = vrot.slane %v1999, %v2085
        %v2088 = vunpack.c.l.s4 1983009808
        %v2089 = vunpack.c.0.s8 %v2088
        %v2090 = vlaneseq
        %v2091 = vshrl.u32 %v2090, 7
        %v2092 = vsub.s32 %v2089, %v2091
        %v2093 = vrot.slane %v2079, %v2092
        %v2094 = vcombine.high %v2086, %v2086
        %v2095 = vcombine.high %v2093, %v2093
        %v2096 = vcombine.high %v2000, %v2000
        %v2098 = vunpack.c.l.s4 1983009808
        %v2099 = vunpack.c.0.s8 %v2098
        %v2100 = vlaneseq
        %v2101 = vshrl.u32 %v2100, 7
        %v2102 = vsub.s32 %v2099, %v2101
        %v2103 = vrot.slane %v2000, %v2102
        %v2105 = vunpack.c.l.s4 1983009808
        %v2106 = vunpack.c.0.s8 %v2105
        %v2107 = vlaneseq
        %v2108 = vshrl.u32 %v2107, 7
        %v2109 = vsub.s32 %v2106, %v2108
        %v2110 = vrot.slane %v2096, %v2109
        %v2111 = vcombine.high %v2103, %v2103
        %v2112 = vcombine.high %v2110, %v2110
        %v2113 = vcombine.high %v2001, %v2001
        %v2115 = vunpack.c.l.s4 1983009808
        %v2116 = vunpack.c.0.s8 %v2115
        %v2117 = vlaneseq
        %v2118 = vshrl.u32 %v2117, 7
        %v2119 = vsub.s32 %v2116, %v2118
        %v2120 = vrot.slane %v2001, %v2119
        %v2122 = vunpack.c.l.s4 1983009808
        %v2123 = vunpack.c.0.s8 %v2122
        %v2124 = vlaneseq
        %v2125 = vshrl.u32 %v2124, 7
        %v2126 = vsub.s32 %v2123, %v2125
        %v2127 = vrot.slane %v2113, %v2126
        %v2128 = vcombine.high %v2120, %v2120
        %v2129 = vcombine.high %v2127, %v2127
        %v2130 = vcombine.high %v2002, %v2002
        %v2132 = vunpack.c.l.s4 1983009808
        %v2133 = vunpack.c.0.s8 %v2132
        %v2134 = vlaneseq
        %v2135 = vshrl.u32 %v2134, 7
        %v2136 = vsub.s32 %v2133, %v2135
        %v2137 = vrot.slane %v2002, %v2136
        %v2139 = vunpack.c.l.s4 1983009808
        %v2140 = vunpack.c.0.s8 %v2139
        %v2141 = vlaneseq
        %v2142 = vshrl.u32 %v2141, 7
        %v2143 = vsub.s32 %v2140, %v2142
        %v2144 = vrot.slane %v2130, %v2143
        %v2145 = vcombine.high %v2137, %v2137
        %v2146 = vcombine.high %v2144, %v2144
        %v2147 = vcombine.high %v2003, %v2003
        %v2149 = vunpack.c.l.s4 1983009808
        %v2150 = vunpack.c.0.s8 %v2149
        %v2151 = vlaneseq
        %v2152 = vshrl.u32 %v2151, 7
        %v2153 = vsub.s32 %v2150, %v2152
        %v2154 = vrot.slane %v2003, %v2153
        %v2156 = vunpack.c.l.s4 1983009808
        %v2157 = vunpack.c.0.s8 %v2156
        %v2158 = vlaneseq
        %v2159 = vshrl.u32 %v2158, 7
        %v2160 = vsub.s32 %v2157, %v2159
        %v2161 = vrot.slane %v2147, %v2160
        %v2162 = vcombine.high %v2154, %v2154
        %v2163 = vcombine.high %v2161, %v2161
        %v2164 = vcombine.high %v2004, %v2004
        %v2166 = vunpack.c.l.s4 1983009808
        %v2167 = vunpack.c.0.s8 %v2166
        %v2168 = vlaneseq
        %v2169 = vshrl.u32 %v2168, 7
        %v2170 = vsub.s32 %v2167, %v2169
        %v2171 = vrot.slane %v2004, %v2170
        %v2173 = vunpack.c.l.s4 1983009808
        %v2174 = vunpack.c.0.s8 %v2173
        %v2175 = vlaneseq
        %v2176 = vshrl.u32 %v2175, 7
        %v2177 = vsub.s32 %v2174, %v2176
        %v2178 = vrot.slane %v2164, %v2177
        %v2179 = vcombine.high %v2171, %v2171
        %v2180 = vcombine.high %v2178, %v2178
        %v2181 = vcombine.high %v2005, %v2005
        %v2183 = vunpack.c.l.s4 1983009808
        %v2184 = vunpack.c.0.s8 %v2183
        %v2185 = vlaneseq
        %v2186 = vshrl.u32 %v2185, 7
        %v2187 = vsub.s32 %v2184, %v2186
        %v2188 = vrot.slane %v2005, %v2187
        %v2190 = vunpack.c.l.s4 1983009808
        %v2191 = vunpack.c.0.s8 %v2190
        %v2192 = vlaneseq
        %v2193 = vshrl.u32 %v2192, 7
        %v2194 = vsub.s32 %v2191, %v2193
        %v2195 = vrot.slane %v2181, %v2194
        %v2196 = vcombine.high %v2188, %v2188
        %v2197 = vcombine.high %v2195, %v2195
        %v2198 = vcombine.high %v2006, %v2006
        %v2200 = vunpack.c.l.s4 1983009808
        %v2201 = vunpack.c.0.s8 %v2200
        %v2202 = vlaneseq
        %v2203 = vshrl.u32 %v2202, 7
        %v2204 = vsub.s32 %v2201, %v2203
        %v2205 = vrot.slane %v2006, %v2204
        %v2207 = vunpack.c.l.s4 1983009808
        %v2208 = vunpack.c.0.s8 %v2207
        %v2209 = vlaneseq
        %v2210 = vshrl.u32 %v2209, 7
        %v2211 = vsub.s32 %v2208, %v2210
        %v2212 = vrot.slane %v2198, %v2211
        %v2213 = vcombine.high %v2205, %v2205
        %v2214 = vcombine.high %v2212, %v2212
        %v2215 = vcombine.high %v2007, %v2007
        %v2217 = vunpack.c.l.s4 1983009808
        %v2218 = vunpack.c.0.s8 %v2217
        %v2219 = vlaneseq
        %v2220 = vshrl.u32 %v2219, 7
        %v2221 = vsub.s32 %v2218, %v2220
        %v2222 = vrot.slane %v2007, %v2221
        %v2224 = vunpack.c.l.s4 1983009808
        %v2225 = vunpack.c.0.s8 %v2224
        %v2226 = vlaneseq
        %v2227 = vshrl.u32 %v2226, 7
        %v2228 = vsub.s32 %v2225, %v2227
        %v2229 = vrot.slane %v2215, %v2228
        %v2230 = vcombine.high %v2222, %v2222
        %v2231 = vcombine.high %v2229, %v2229
        %v2232 = vcombine.high %v2008, %v2008
        %v2234 = vunpack.c.l.s4 1983009808
        %v2235 = vunpack.c.0.s8 %v2234
        %v2236 = vlaneseq
        %v2237 = vshrl.u32 %v2236, 7
        %v2238 = vsub.s32 %v2235, %v2237
        %v2239 = vrot.slane %v2008, %v2238
        %v2241 = vunpack.c.l.s4 1983009808
        %v2242 = vunpack.c.0.s8 %v2241
        %v2243 = vlaneseq
        %v2244 = vshrl.u32 %v2243, 7
        %v2245 = vsub.s32 %v2242, %v2244
        %v2246 = vrot.slane %v2232, %v2245
        %v2247 = vcombine.high %v2239, %v2239
        %v2248 = vcombine.high %v2246, %v2246
        %v2249 = vcombine.high %v2009, %v2009
        %v2251 = vunpack.c.l.s4 1983009808
        %v2252 = vunpack.c.0.s8 %v2251
        %v2253 = vlaneseq
        %v2254 = vshrl.u32 %v2253, 7
        %v2255 = vsub.s32 %v2252, %v2254
        %v2256 = vrot.slane %v2009, %v2255
        %v2258 = vunpack.c.l.s4 1983009808
        %v2259 = vunpack.c.0.s8 %v2258
        %v2260 = vlaneseq
        %v2261 = vshrl.u32 %v2260, 7
        %v2262 = vsub.s32 %v2259, %v2261
        %v2263 = vrot.slane %v2249, %v2262
        %v2264 = vcombine.high %v2256, %v2256
        %v2265 = vcombine.high %v2263, %v2263
        %v2266 = vcombine.high %v2010, %v2010
        %v2268 = vunpack.c.l.s4 1983009808
        %v2269 = vunpack.c.0.s8 %v2268
        %v2270 = vlaneseq
        %v2271 = vshrl.u32 %v2270, 7
        %v2272 = vsub.s32 %v2269, %v2271
        %v2273 = vrot.slane %v2010, %v2272
        %v2275 = vunpack.c.l.s4 1983009808
        %v2276 = vunpack.c.0.s8 %v2275
        %v2277 = vlaneseq
        %v2278 = vshrl.u32 %v2277, 7
        %v2279 = vsub.s32 %v2276, %v2278
        %v2280 = vrot.slane %v2266, %v2279
        %v2281 = vcombine.high %v2273, %v2273
        %v2282 = vcombine.high %v2280, %v2280
        %v2283 = vcombine.high %v2011, %v2011
        %v2285 = vunpack.c.l.s4 1983009808
        %v2286 = vunpack.c.0.s8 %v2285
        %v2287 = vlaneseq
        %v2288 = vshrl.u32 %v2287, 7
        %v2289 = vsub.s32 %v2286, %v2288
        %v2290 = vrot.slane %v2011, %v2289
        %v2292 = vunpack.c.l.s4 1983009808
        %v2293 = vunpack.c.0.s8 %v2292
        %v2294 = vlaneseq
        %v2295 = vshrl.u32 %v2294, 7
        %v2296 = vsub.s32 %v2293, %v2295
        %v2297 = vrot.slane %v2283, %v2296
        %v2298 = vcombine.high %v2290, %v2290
        %v2299 = vcombine.high %v2297, %v2297
        %v2300 = vcombine.high %v2012, %v2012
        %v2302 = vunpack.c.l.s4 1983009808
        %v2303 = vunpack.c.0.s8 %v2302
        %v2304 = vlaneseq
        %v2305 = vshrl.u32 %v2304, 7
        %v2306 = vsub.s32 %v2303, %v2305
        %v2307 = vrot.slane %v2012, %v2306
        %v2309 = vunpack.c.l.s4 1983009808
        %v2310 = vunpack.c.0.s8 %v2309
        %v2311 = vlaneseq
        %v2312 = vshrl.u32 %v2311, 7
        %v2313 = vsub.s32 %v2310, %v2312
        %v2314 = vrot.slane %v2300, %v2313
        %v2315 = vcombine.high %v2307, %v2307
        %v2316 = vcombine.high %v2314, %v2314
        %v2317 = vcombine.high %v2013, %v2013
        %v2319 = vunpack.c.l.s4 1983009808
        %v2320 = vunpack.c.0.s8 %v2319
        %v2321 = vlaneseq
        %v2322 = vshrl.u32 %v2321, 7
        %v2323 = vsub.s32 %v2320, %v2322
        %v2324 = vrot.slane %v2013, %v2323
        %v2326 = vunpack.c.l.s4 1983009808
        %v2327 = vunpack.c.0.s8 %v2326
        %v2328 = vlaneseq
        %v2329 = vshrl.u32 %v2328, 7
        %v2330 = vsub.s32 %v2327, %v2329
        %v2331 = vrot.slane %v2317, %v2330
        %v2332 = vcombine.high %v2324, %v2324
        %v2333 = vcombine.high %v2331, %v2331
        %v2334 = vcombine.high %v2014, %v2014
        %v2336 = vunpack.c.l.s4 1983009808
        %v2337 = vunpack.c.0.s8 %v2336
        %v2338 = vlaneseq
        %v2339 = vshrl.u32 %v2338, 7
        %v2340 = vsub.s32 %v2337, %v2339
        %v2341 = vrot.slane %v2014, %v2340
        %v2343 = vunpack.c.l.s4 1983009808
        %v2344 = vunpack.c.0.s8 %v2343
        %v2345 = vlaneseq
        %v2346 = vshrl.u32 %v2345, 7
        %v2347 = vsub.s32 %v2344, %v2346
        %v2348 = vrot.slane %v2334, %v2347
        %v2349 = vcombine.high %v2341, %v2341
        %v2350 = vcombine.high %v2348, %v2348
        %v2351 = vcombine.high %v2015, %v2015
        %v2353 = vunpack.c.l.s4 1983009808
        %v2354 = vunpack.c.0.s8 %v2353
        %v2355 = vlaneseq
        %v2356 = vshrl.u32 %v2355, 7
        %v2357 = vsub.s32 %v2354, %v2356
        %v2358 = vrot.slane %v2015, %v2357
        %v2360 = vunpack.c.l.s4 1983009808
        %v2361 = vunpack.c.0.s8 %v2360
        %v2362 = vlaneseq
        %v2363 = vshrl.u32 %v2362, 7
        %v2364 = vsub.s32 %v2361, %v2363
        %v2365 = vrot.slane %v2351, %v2364
        %v2366 = vcombine.high %v2358, %v2358
        %v2367 = vcombine.high %v2365, %v2365
        %v2368 = vcombine.high %v2016, %v2016
        %v2370 = vunpack.c.l.s4 1983009808
        %v2371 = vunpack.c.0.s8 %v2370
        %v2372 = vlaneseq
        %v2373 = vshrl.u32 %v2372, 7
        %v2374 = vsub.s32 %v2371, %v2373
        %v2375 = vrot.slane %v2016, %v2374
        %v2377 = vunpack.c.l.s4 1983009808
        %v2378 = vunpack.c.0.s8 %v2377
        %v2379 = vlaneseq
        %v2380 = vshrl.u32 %v2379, 7
        %v2381 = vsub.s32 %v2378, %v2380
        %v2382 = vrot.slane %v2368, %v2381
        %v2383 = vcombine.high %v2375, %v2375
        %v2384 = vcombine.high %v2382, %v2382
        %v2385 = vcombine.high %v2017, %v2017
        %v2387 = vunpack.c.l.s4 1983009808
        %v2388 = vunpack.c.0.s8 %v2387
        %v2389 = vlaneseq
        %v2390 = vshrl.u32 %v2389, 7
        %v2391 = vsub.s32 %v2388, %v2390
        %v2392 = vrot.slane %v2017, %v2391
        %v2394 = vunpack.c.l.s4 1983009808
        %v2395 = vunpack.c.0.s8 %v2394
        %v2396 = vlaneseq
        %v2397 = vshrl.u32 %v2396, 7
        %v2398 = vsub.s32 %v2395, %v2397
        %v2399 = vrot.slane %v2385, %v2398
        %v2400 = vcombine.high %v2392, %v2392
        %v2401 = vcombine.high %v2399, %v2399
        %v2402 = vcombine.high %v2018, %v2018
        %v2404 = vunpack.c.l.s4 1983009808
        %v2405 = vunpack.c.0.s8 %v2404
        %v2406 = vlaneseq
        %v2407 = vshrl.u32 %v2406, 7
        %v2408 = vsub.s32 %v2405, %v2407
        %v2409 = vrot.slane %v2018, %v2408
        %v2411 = vunpack.c.l.s4 1983009808
        %v2412 = vunpack.c.0.s8 %v2411
        %v2413 = vlaneseq
        %v2414 = vshrl.u32 %v2413, 7
        %v2415 = vsub.s32 %v2412, %v2414
        %v2416 = vrot.slane %v2402, %v2415
        %v2417 = vcombine.high %v2409, %v2409
        %v2418 = vcombine.high %v2416, %v2416
        %v2419 = vcombine.high %v2019, %v2019
        %v2421 = vunpack.c.l.s4 1983009808
        %v2422 = vunpack.c.0.s8 %v2421
        %v2423 = vlaneseq
        %v2424 = vshrl.u32 %v2423, 7
        %v2425 = vsub.s32 %v2422, %v2424
        %v2426 = vrot.slane %v2019, %v2425
        %v2428 = vunpack.c.l.s4 1983009808
        %v2429 = vunpack.c.0.s8 %v2428
        %v2430 = vlaneseq
        %v2431 = vshrl.u32 %v2430, 7
        %v2432 = vsub.s32 %v2429, %v2431
        %v2433 = vrot.slane %v2419, %v2432
        %v2434 = vcombine.high %v2426, %v2426
        %v2435 = vcombine.high %v2433, %v2433
        %v2436 = vcombine.high %v2020, %v2020
        %v2438 = vunpack.c.l.s4 1983009808
        %v2439 = vunpack.c.0.s8 %v2438
        %v2440 = vlaneseq
        %v2441 = vshrl.u32 %v2440, 7
        %v2442 = vsub.s32 %v2439, %v2441
        %v2443 = vrot.slane %v2020, %v2442
        %v2445 = vunpack.c.l.s4 1983009808
        %v2446 = vunpack.c.0.s8 %v2445
        %v2447 = vlaneseq
        %v2448 = vshrl.u32 %v2447, 7
        %v2449 = vsub.s32 %v2446, %v2448
        %v2450 = vrot.slane %v2436, %v2449
        %v2451 = vcombine.high %v2443, %v2443
        %v2452 = vcombine.high %v2450, %v2450
        %v2453 = vcombine.high %v2021, %v2021
        %v2455 = vunpack.c.l.s4 1983009808
        %v2456 = vunpack.c.0.s8 %v2455
        %v2457 = vlaneseq
        %v2458 = vshrl.u32 %v2457, 7
        %v2459 = vsub.s32 %v2456, %v2458
        %v2460 = vrot.slane %v2021, %v2459
        %v2462 = vunpack.c.l.s4 1983009808
        %v2463 = vunpack.c.0.s8 %v2462
        %v2464 = vlaneseq
        %v2465 = vshrl.u32 %v2464, 7
        %v2466 = vsub.s32 %v2463, %v2465
        %v2467 = vrot.slane %v2453, %v2466
        %v2468 = vcombine.high %v2460, %v2460
        %v2469 = vcombine.high %v2467, %v2467
        %v2470 = vcombine.high %v2022, %v2022
        %v2472 = vunpack.c.l.s4 1983009808
        %v2473 = vunpack.c.0.s8 %v2472
        %v2474 = vlaneseq
        %v2475 = vshrl.u32 %v2474, 7
        %v2476 = vsub.s32 %v2473, %v2475
        %v2477 = vrot.slane %v2022, %v2476
        %v2479 = vunpack.c.l.s4 1983009808
        %v2480 = vunpack.c.0.s8 %v2479
        %v2481 = vlaneseq
        %v2482 = vshrl.u32 %v2481, 7
        %v2483 = vsub.s32 %v2480, %v2482
        %v2484 = vrot.slane %v2470, %v2483
        %v2485 = vcombine.high %v2477, %v2477
        %v2486 = vcombine.high %v2484, %v2484
        %v2487 = vcombine.high %v2023, %v2023
        %v2489 = vunpack.c.l.s4 1983009808
        %v2490 = vunpack.c.0.s8 %v2489
        %v2491 = vlaneseq
        %v2492 = vshrl.u32 %v2491, 7
        %v2493 = vsub.s32 %v2490, %v2492
        %v2494 = vrot.slane %v2023, %v2493
        %v2496 = vunpack.c.l.s4 1983009808
        %v2497 = vunpack.c.0.s8 %v2496
        %v2498 = vlaneseq
        %v2499 = vshrl.u32 %v2498, 7
        %v2500 = vsub.s32 %v2497, %v2499
        %v2501 = vrot.slane %v2487, %v2500
        %v2502 = vcombine.high %v2494, %v2494
        %v2503 = vcombine.high %v2501, %v2501
        %v2504 = vcombine.high %v2024, %v2024
        %v2506 = vunpack.c.l.s4 1983009808
        %v2507 = vunpack.c.0.s8 %v2506
        %v2508 = vlaneseq
        %v2509 = vshrl.u32 %v2508, 7
        %v2510 = vsub.s32 %v2507, %v2509
        %v2511 = vrot.slane %v2024, %v2510
        %v2513 = vunpack.c.l.s4 1983009808
        %v2514 = vunpack.c.0.s8 %v2513
        %v2515 = vlaneseq
        %v2516 = vshrl.u32 %v2515, 7
        %v2517 = vsub.s32 %v2514, %v2516
        %v2518 = vrot.slane %v2504, %v2517
        %v2519 = vcombine.high %v2511, %v2511
        %v2520 = vcombine.high %v2518, %v2518
        %v2521 = vcombine.high %v2025, %v2025
        %v2523 = vunpack.c.l.s4 1983009808
        %v2524 = vunpack.c.0.s8 %v2523
        %v2525 = vlaneseq
        %v2526 = vshrl.u32 %v2525, 7
        %v2527 = vsub.s32 %v2524, %v2526
        %v2528 = vrot.slane %v2025, %v2527
        %v2530 = vunpack.c.l.s4 1983009808
        %v2531 = vunpack.c.0.s8 %v2530
        %v2532 = vlaneseq
        %v2533 = vshrl.u32 %v2532, 7
        %v2534 = vsub.s32 %v2531, %v2533
        %v2535 = vrot.slane %v2521, %v2534
        %v2536 = vcombine.high %v2528, %v2528
        %v2537 = vcombine.high %v2535, %v2535
        %v2538 = vcombine.high %v2026, %v2026
        %v2540 = vunpack.c.l.s4 1983009808
        %v2541 = vunpack.c.0.s8 %v2540
        %v2542 = vlaneseq
        %v2543 = vshrl.u32 %v2542, 7
        %v2544 = vsub.s32 %v2541, %v2543
        %v2545 = vrot.slane %v2026, %v2544
        %v2547 = vunpack.c.l.s4 1983009808
        %v2548 = vunpack.c.0.s8 %v2547
        %v2549 = vlaneseq
        %v2550 = vshrl.u32 %v2549, 7
        %v2551 = vsub.s32 %v2548, %v2550
        %v2552 = vrot.slane %v2538, %v2551
        %v2553 = vcombine.high %v2545, %v2545
        %v2554 = vcombine.high %v2552, %v2552
        %v2555 = vcombine.high %v2027, %v2027
        %v2557 = vunpack.c.l.s4 1983009808
        %v2558 = vunpack.c.0.s8 %v2557
        %v2559 = vlaneseq
        %v2560 = vshrl.u32 %v2559, 7
        %v2561 = vsub.s32 %v2558, %v2560
        %v2562 = vrot.slane %v2027, %v2561
        %v2564 = vunpack.c.l.s4 1983009808
        %v2565 = vunpack.c.0.s8 %v2564
        %v2566 = vlaneseq
        %v2567 = vshrl.u32 %v2566, 7
        %v2568 = vsub.s32 %v2565, %v2567
        %v2569 = vrot.slane %v2555, %v2568
        %v2570 = vcombine.high %v2562, %v2562
        %v2571 = vcombine.high %v2569, %v2569
        %v2572 = vcombine.high %v2028, %v2028
        %v2574 = vunpack.c.l.s4 1983009808
        %v2575 = vunpack.c.0.s8 %v2574
        %v2576 = vlaneseq
        %v2577 = vshrl.u32 %v2576, 7
        %v2578 = vsub.s32 %v2575, %v2577
        %v2579 = vrot.slane %v2028, %v2578
        %v2581 = vunpack.c.l.s4 1983009808
        %v2582 = vunpack.c.0.s8 %v2581
        %v2583 = vlaneseq
        %v2584 = vshrl.u32 %v2583, 7
        %v2585 = vsub.s32 %v2582, %v2584
        %v2586 = vrot.slane %v2572, %v2585
        %v2587 = vcombine.high %v2579, %v2579
        %v2588 = vcombine.high %v2586, %v2586
        %v2589 = vcombine.high %v2029, %v2029
        %v2591 = vunpack.c.l.s4 1983009808
        %v2592 = vunpack.c.0.s8 %v2591
        %v2593 = vlaneseq
        %v2594 = vshrl.u32 %v2593, 7
        %v2595 = vsub.s32 %v2592, %v2594
        %v2596 = vrot.slane %v2029, %v2595
        %v2598 = vunpack.c.l.s4 1983009808
        %v2599 = vunpack.c.0.s8 %v2598
        %v2600 = vlaneseq
        %v2601 = vshrl.u32 %v2600, 7
        %v2602 = vsub.s32 %v2599, %v2601
        %v2603 = vrot.slane %v2589, %v2602
        %v2604 = vcombine.high %v2596, %v2596
        %v2605 = vcombine.high %v2603, %v2603
        %vm2734 = vcmask 1041408
        %v2735 = vsel %vm2734, %v2069, -inf
        %v2736 = vrot.slane %v2735, 4
        %v2737 = vmax.f32 %v2735, %v2736
        %v2738 = vrot.slane %v2737, 2
        %v2739 = vmax.f32 %v2737, %v2738
        %v2740 = vrot.slane %v2739, 1
        %v2741 = vmax.f32 %v2739, %v2740
        %v2742 = vsel %vm2734, %v2077, -inf
        %v2743 = vrot.slane %v2742, 4
        %v2744 = vmax.f32 %v2742, %v2743
        %v2745 = vrot.slane %v2744, 2
        %v2746 = vmax.f32 %v2744, %v2745
        %v2747 = vrot.slane %v2746, 1
        %v2748 = vmax.f32 %v2746, %v2747
        %v2749 = vsel %vm2734, %v2076, -inf
        %v2750 = vrot.slane %v2749, 4
        %v2751 = vmax.f32 %v2749, %v2750
        %v2752 = vrot.slane %v2751, 2
        %v2753 = vmax.f32 %v2751, %v2752
        %v2754 = vrot.slane %v2753, 1
        %v2755 = vmax.f32 %v2753, %v2754
        %v2756 = vsel %vm2734, %v2078, -inf
        %v2757 = vrot.slane %v2756, 4
        %v2758 = vmax.f32 %v2756, %v2757
        %v2759 = vrot.slane %v2758, 2
        %v2760 = vmax.f32 %v2758, %v2759
        %v2761 = vrot.slane %v2760, 1
        %v2762 = vmax.f32 %v2760, %v2761
        %v2763 = vsel %vm2734, %v2086, -inf
        %v2764 = vrot.slane %v2763, 4
        %v2765 = vmax.f32 %v2763, %v2764
        %v2766 = vrot.slane %v2765, 2
        %v2767 = vmax.f32 %v2765, %v2766
        %v2768 = vrot.slane %v2767, 1
        %v2769 = vmax.f32 %v2767, %v2768
        %v2770 = vsel %vm2734, %v2094, -inf
        %v2771 = vrot.slane %v2770, 4
        %v2772 = vmax.f32 %v2770, %v2771
        %v2773 = vrot.slane %v2772, 2
        %v2774 = vmax.f32 %v2772, %v2773
        %v2775 = vrot.slane %v2774, 1
        %v2776 = vmax.f32 %v2774, %v2775
        %v2777 = vsel %vm2734, %v2093, -inf
        %v2778 = vrot.slane %v2777, 4
        %v2779 = vmax.f32 %v2777, %v2778
        %v2780 = vrot.slane %v2779, 2
        %v2781 = vmax.f32 %v2779, %v2780
        %v2782 = vrot.slane %v2781, 1
        %v2783 = vmax.f32 %v2781, %v2782
        %v2784 = vsel %vm2734, %v2095, -inf
        %v2785 = vrot.slane %v2784, 4
        %v2786 = vmax.f32 %v2784, %v2785
        %v2787 = vrot.slane %v2786, 2
        %v2788 = vmax.f32 %v2786, %v2787
        %v2789 = vrot.slane %v2788, 1
        %v2790 = vmax.f32 %v2788, %v2789
        %v2791 = vsel %vm2734, %v2103, -inf
        %v2792 = vrot.slane %v2791, 4
        %v2793 = vmax.f32 %v2791, %v2792
        %v2794 = vrot.slane %v2793, 2
        %v2795 = vmax.f32 %v2793, %v2794
        %v2796 = vrot.slane %v2795, 1
        %v2797 = vmax.f32 %v2795, %v2796
        %v2798 = vsel %vm2734, %v2111, -inf
        %v2799 = vrot.slane %v2798, 4
        %v2800 = vmax.f32 %v2798, %v2799
        %v2801 = vrot.slane %v2800, 2
        %v2802 = vmax.f32 %v2800, %v2801
        %v2803 = vrot.slane %v2802, 1
        %v2804 = vmax.f32 %v2802, %v2803
        %v2805 = vsel %vm2734, %v2110, -inf
        %v2806 = vrot.slane %v2805, 4
        %v2807 = vmax.f32 %v2805, %v2806
        %v2808 = vrot.slane %v2807, 2
        %v2809 = vmax.f32 %v2807, %v2808
        %v2810 = vrot.slane %v2809, 1
        %v2811 = vmax.f32 %v2809, %v2810
        %v2812 = vsel %vm2734, %v2112, -inf
        %v2813 = vrot.slane %v2812, 4
        %v2814 = vmax.f32 %v2812, %v2813
        %v2815 = vrot.slane %v2814, 2
        %v2816 = vmax.f32 %v2814, %v2815
        %v2817 = vrot.slane %v2816, 1
        %v2818 = vmax.f32 %v2816, %v2817
        %v2819 = vsel %vm2734, %v2120, -inf
        %v2820 = vrot.slane %v2819, 4
        %v2821 = vmax.f32 %v2819, %v2820
        %v2822 = vrot.slane %v2821, 2
        %v2823 = vmax.f32 %v2821, %v2822
        %v2824 = vrot.slane %v2823, 1
        %v2825 = vmax.f32 %v2823, %v2824
        %v2826 = vsel %vm2734, %v2128, -inf
        %v2827 = vrot.slane %v2826, 4
        %v2828 = vmax.f32 %v2826, %v2827
        %v2829 = vrot.slane %v2828, 2
        %v2830 = vmax.f32 %v2828, %v2829
        %v2831 = vrot.slane %v2830, 1
        %v2832 = vmax.f32 %v2830, %v2831
        %v2833 = vsel %vm2734, %v2127, -inf
        %v2834 = vrot.slane %v2833, 4
        %v2835 = vmax.f32 %v2833, %v2834
        %v2836 = vrot.slane %v2835, 2
        %v2837 = vmax.f32 %v2835, %v2836
        %v2838 = vrot.slane %v2837, 1
        %v2839 = vmax.f32 %v2837, %v2838
        %v2840 = vsel %vm2734, %v2129, -inf
        %v2841 = vrot.slane %v2840, 4
        %v2842 = vmax.f32 %v2840, %v2841
        %v2843 = vrot.slane %v2842, 2
        %v2844 = vmax.f32 %v2842, %v2843
        %v2845 = vrot.slane %v2844, 1
        %v2846 = vmax.f32 %v2844, %v2845
        %v2847 = vsel %vm2734, %v2137, -inf
        %v2848 = vrot.slane %v2847, 4
        %v2849 = vmax.f32 %v2847, %v2848
        %v2850 = vrot.slane %v2849, 2
        %v2851 = vmax.f32 %v2849, %v2850
        %v2852 = vrot.slane %v2851, 1
        %v2853 = vmax.f32 %v2851, %v2852
        %v2854 = vsel %vm2734, %v2145, -inf
        %v2855 = vrot.slane %v2854, 4
        %v2856 = vmax.f32 %v2854, %v2855
        %v2857 = vrot.slane %v2856, 2
        %v2858 = vmax.f32 %v2856, %v2857
        %v2859 = vrot.slane %v2858, 1
        %v2860 = vmax.f32 %v2858, %v2859
        %v2861 = vsel %vm2734, %v2144, -inf
        %v2862 = vrot.slane %v2861, 4
        %v2863 = vmax.f32 %v2861, %v2862
        %v2864 = vrot.slane %v2863, 2
        %v2865 = vmax.f32 %v2863, %v2864
        %v2866 = vrot.slane %v2865, 1
        %v2867 = vmax.f32 %v2865, %v2866
        %v2868 = vsel %vm2734, %v2146, -inf
        %v2869 = vrot.slane %v2868, 4
        %v2870 = vmax.f32 %v2868, %v2869
        %v2871 = vrot.slane %v2870, 2
        %v2872 = vmax.f32 %v2870, %v2871
        %v2873 = vrot.slane %v2872, 1
        %v2874 = vmax.f32 %v2872, %v2873
        %v2875 = vsel %vm2734, %v2154, -inf
        %v2876 = vrot.slane %v2875, 4
        %v2877 = vmax.f32 %v2875, %v2876
        %v2878 = vrot.slane %v2877, 2
        %v2879 = vmax.f32 %v2877, %v2878
        %v2880 = vrot.slane %v2879, 1
        %v2881 = vmax.f32 %v2879, %v2880
        %v2882 = vsel %vm2734, %v2162, -inf
        %v2883 = vrot.slane %v2882, 4
        %v2884 = vmax.f32 %v2882, %v2883
        %v2885 = vrot.slane %v2884, 2
        %v2886 = vmax.f32 %v2884, %v2885
        %v2887 = vrot.slane %v2886, 1
        %v2888 = vmax.f32 %v2886, %v2887
        %v2889 = vsel %vm2734, %v2161, -inf
        %v2890 = vrot.slane %v2889, 4
        %v2891 = vmax.f32 %v2889, %v2890
        %v2892 = vrot.slane %v2891, 2
        %v2893 = vmax.f32 %v2891, %v2892
        %v2894 = vrot.slane %v2893, 1
        %v2895 = vmax.f32 %v2893, %v2894
        %v2896 = vsel %vm2734, %v2163, -inf
        %v2897 = vrot.slane %v2896, 4
        %v2898 = vmax.f32 %v2896, %v2897
        %v2899 = vrot.slane %v2898, 2
        %v2900 = vmax.f32 %v2898, %v2899
        %v2901 = vrot.slane %v2900, 1
        %v2902 = vmax.f32 %v2900, %v2901
        %v2903 = vsel %vm2734, %v2171, -inf
        %v2904 = vrot.slane %v2903, 4
        %v2905 = vmax.f32 %v2903, %v2904
        %v2906 = vrot.slane %v2905, 2
        %v2907 = vmax.f32 %v2905, %v2906
        %v2908 = vrot.slane %v2907, 1
        %v2909 = vmax.f32 %v2907, %v2908
        %v2910 = vsel %vm2734, %v2179, -inf
        %v2911 = vrot.slane %v2910, 4
        %v2912 = vmax.f32 %v2910, %v2911
        %v2913 = vrot.slane %v2912, 2
        %v2914 = vmax.f32 %v2912, %v2913
        %v2915 = vrot.slane %v2914, 1
        %v2916 = vmax.f32 %v2914, %v2915
        %v2917 = vsel %vm2734, %v2178, -inf
        %v2918 = vrot.slane %v2917, 4
        %v2919 = vmax.f32 %v2917, %v2918
        %v2920 = vrot.slane %v2919, 2
        %v2921 = vmax.f32 %v2919, %v2920
        %v2922 = vrot.slane %v2921, 1
        %v2923 = vmax.f32 %v2921, %v2922
        %v2924 = vsel %vm2734, %v2180, -inf
        %v2925 = vrot.slane %v2924, 4
        %v2926 = vmax.f32 %v2924, %v2925
        %v2927 = vrot.slane %v2926, 2
        %v2928 = vmax.f32 %v2926, %v2927
        %v2929 = vrot.slane %v2928, 1
        %v2930 = vmax.f32 %v2928, %v2929
        %v2931 = vsel %vm2734, %v2188, -inf
        %v2932 = vrot.slane %v2931, 4
        %v2933 = vmax.f32 %v2931, %v2932
        %v2934 = vrot.slane %v2933, 2
        %v2935 = vmax.f32 %v2933, %v2934
        %v2936 = vrot.slane %v2935, 1
        %v2937 = vmax.f32 %v2935, %v2936
        %v2938 = vsel %vm2734, %v2196, -inf
        %v2939 = vrot.slane %v2938, 4
        %v2940 = vmax.f32 %v2938, %v2939
        %v2941 = vrot.slane %v2940, 2
        %v2942 = vmax.f32 %v2940, %v2941
        %v2943 = vrot.slane %v2942, 1
        %v2944 = vmax.f32 %v2942, %v2943
        %v2945 = vsel %vm2734, %v2195, -inf
        %v2946 = vrot.slane %v2945, 4
        %v2947 = vmax.f32 %v2945, %v2946
        %v2948 = vrot.slane %v2947, 2
        %v2949 = vmax.f32 %v2947, %v2948
        %v2950 = vrot.slane %v2949, 1
        %v2951 = vmax.f32 %v2949, %v2950
        %v2952 = vsel %vm2734, %v2197, -inf
        %v2953 = vrot.slane %v2952, 4
        %v2954 = vmax.f32 %v2952, %v2953
        %v2955 = vrot.slane %v2954, 2
        %v2956 = vmax.f32 %v2954, %v2955
        %v2957 = vrot.slane %v2956, 1
        %v2958 = vmax.f32 %v2956, %v2957
        %v2959 = vsel %vm2734, %v2205, -inf
        %v2960 = vrot.slane %v2959, 4
        %v2961 = vmax.f32 %v2959, %v2960
        %v2962 = vrot.slane %v2961, 2
        %v2963 = vmax.f32 %v2961, %v2962
        %v2964 = vrot.slane %v2963, 1
        %v2965 = vmax.f32 %v2963, %v2964
        %v2966 = vsel %vm2734, %v2213, -inf
        %v2967 = vrot.slane %v2966, 4
        %v2968 = vmax.f32 %v2966, %v2967
        %v2969 = vrot.slane %v2968, 2
        %v2970 = vmax.f32 %v2968, %v2969
        %v2971 = vrot.slane %v2970, 1
        %v2972 = vmax.f32 %v2970, %v2971
        %v2973 = vsel %vm2734, %v2212, -inf
        %v2974 = vrot.slane %v2973, 4
        %v2975 = vmax.f32 %v2973, %v2974
        %v2976 = vrot.slane %v2975, 2
        %v2977 = vmax.f32 %v2975, %v2976
        %v2978 = vrot.slane %v2977, 1
        %v2979 = vmax.f32 %v2977, %v2978
        %v2980 = vsel %vm2734, %v2214, -inf
        %v2981 = vrot.slane %v2980, 4
        %v2982 = vmax.f32 %v2980, %v2981
        %v2983 = vrot.slane %v2982, 2
        %v2984 = vmax.f32 %v2982, %v2983
        %v2985 = vrot.slane %v2984, 1
        %v2986 = vmax.f32 %v2984, %v2985
        %v2987 = vsel %vm2734, %v2222, -inf
        %v2988 = vrot.slane %v2987, 4
        %v2989 = vmax.f32 %v2987, %v2988
        %v2990 = vrot.slane %v2989, 2
        %v2991 = vmax.f32 %v2989, %v2990
        %v2992 = vrot.slane %v2991, 1
        %v2993 = vmax.f32 %v2991, %v2992
        %v2994 = vsel %vm2734, %v2230, -inf
        %v2995 = vrot.slane %v2994, 4
        %v2996 = vmax.f32 %v2994, %v2995
        %v2997 = vrot.slane %v2996, 2
        %v2998 = vmax.f32 %v2996, %v2997
        %v2999 = vrot.slane %v2998, 1
        %v3000 = vmax.f32 %v2998, %v2999
        %v3001 = vsel %vm2734, %v2229, -inf
        %v3002 = vrot.slane %v3001, 4
        %v3003 = vmax.f32 %v3001, %v3002
        %v3004 = vrot.slane %v3003, 2
        %v3005 = vmax.f32 %v3003, %v3004
        %v3006 = vrot.slane %v3005, 1
        %v3007 = vmax.f32 %v3005, %v3006
        %v3008 = vsel %vm2734, %v2231, -inf
        %v3009 = vrot.slane %v3008, 4
        %v3010 = vmax.f32 %v3008, %v3009
        %v3011 = vrot.slane %v3010, 2
        %v3012 = vmax.f32 %v3010, %v3011
        %v3013 = vrot.slane %v3012, 1
        %v3014 = vmax.f32 %v3012, %v3013
        %v3015 = vsel %vm2734, %v2239, -inf
        %v3016 = vrot.slane %v3015, 4
        %v3017 = vmax.f32 %v3015, %v3016
        %v3018 = vrot.slane %v3017, 2
        %v3019 = vmax.f32 %v3017, %v3018
        %v3020 = vrot.slane %v3019, 1
        %v3021 = vmax.f32 %v3019, %v3020
        %v3022 = vsel %vm2734, %v2247, -inf
        %v3023 = vrot.slane %v3022, 4
        %v3024 = vmax.f32 %v3022, %v3023
        %v3025 = vrot.slane %v3024, 2
        %v3026 = vmax.f32 %v3024, %v3025
        %v3027 = vrot.slane %v3026, 1
        %v3028 = vmax.f32 %v3026, %v3027
        %v3029 = vsel %vm2734, %v2246, -inf
        %v3030 = vrot.slane %v3029, 4
        %v3031 = vmax.f32 %v3029, %v3030
        %v3032 = vrot.slane %v3031, 2
        %v3033 = vmax.f32 %v3031, %v3032
        %v3034 = vrot.slane %v3033, 1
        %v3035 = vmax.f32 %v3033, %v3034
        %v3036 = vsel %vm2734, %v2248, -inf
        %v3037 = vrot.slane %v3036, 4
        %v3038 = vmax.f32 %v3036, %v3037
        %v3039 = vrot.slane %v3038, 2
        %v3040 = vmax.f32 %v3038, %v3039
        %v3041 = vrot.slane %v3040, 1
        %v3042 = vmax.f32 %v3040, %v3041
        %v3043 = vsel %vm2734, %v2256, -inf
        %v3044 = vrot.slane %v3043, 4
        %v3045 = vmax.f32 %v3043, %v3044
        %v3046 = vrot.slane %v3045, 2
        %v3047 = vmax.f32 %v3045, %v3046
        %v3048 = vrot.slane %v3047, 1
        %v3049 = vmax.f32 %v3047, %v3048
        %v3050 = vsel %vm2734, %v2264, -inf
        %v3051 = vrot.slane %v3050, 4
        %v3052 = vmax.f32 %v3050, %v3051
        %v3053 = vrot.slane %v3052, 2
        %v3054 = vmax.f32 %v3052, %v3053
        %v3055 = vrot.slane %v3054, 1
        %v3056 = vmax.f32 %v3054, %v3055
        %v3057 = vsel %vm2734, %v2263, -inf
        %v3058 = vrot.slane %v3057, 4
        %v3059 = vmax.f32 %v3057, %v3058
        %v3060 = vrot.slane %v3059, 2
        %v3061 = vmax.f32 %v3059, %v3060
        %v3062 = vrot.slane %v3061, 1
        %v3063 = vmax.f32 %v3061, %v3062
        %v3064 = vsel %vm2734, %v2265, -inf
        %v3065 = vrot.slane %v3064, 4
        %v3066 = vmax.f32 %v3064, %v3065
        %v3067 = vrot.slane %v3066, 2
        %v3068 = vmax.f32 %v3066, %v3067
        %v3069 = vrot.slane %v3068, 1
        %v3070 = vmax.f32 %v3068, %v3069
        %v3071 = vsel %vm2734, %v2273, -inf
        %v3072 = vrot.slane %v3071, 4
        %v3073 = vmax.f32 %v3071, %v3072
        %v3074 = vrot.slane %v3073, 2
        %v3075 = vmax.f32 %v3073, %v3074
        %v3076 = vrot.slane %v3075, 1
        %v3077 = vmax.f32 %v3075, %v3076
        %v3078 = vsel %vm2734, %v2281, -inf
        %v3079 = vrot.slane %v3078, 4
        %v3080 = vmax.f32 %v3078, %v3079
        %v3081 = vrot.slane %v3080, 2
        %v3082 = vmax.f32 %v3080, %v3081
        %v3083 = vrot.slane %v3082, 1
        %v3084 = vmax.f32 %v3082, %v3083
        %v3085 = vsel %vm2734, %v2280, -inf
        %v3086 = vrot.slane %v3085, 4
        %v3087 = vmax.f32 %v3085, %v3086
        %v3088 = vrot.slane %v3087, 2
        %v3089 = vmax.f32 %v3087, %v3088
        %v3090 = vrot.slane %v3089, 1
        %v3091 = vmax.f32 %v3089, %v3090
        %v3092 = vsel %vm2734, %v2282, -inf
        %v3093 = vrot.slane %v3092, 4
        %v3094 = vmax.f32 %v3092, %v3093
        %v3095 = vrot.slane %v3094, 2
        %v3096 = vmax.f32 %v3094, %v3095
        %v3097 = vrot.slane %v3096, 1
        %v3098 = vmax.f32 %v3096, %v3097
        %v3099 = vsel %vm2734, %v2290, -inf
        %v3100 = vrot.slane %v3099, 4
        %v3101 = vmax.f32 %v3099, %v3100
        %v3102 = vrot.slane %v3101, 2
        %v3103 = vmax.f32 %v3101, %v3102
        %v3104 = vrot.slane %v3103, 1
        %v3105 = vmax.f32 %v3103, %v3104
        %v3106 = vsel %vm2734, %v2298, -inf
        %v3107 = vrot.slane %v3106, 4
        %v3108 = vmax.f32 %v3106, %v3107
        %v3109 = vrot.slane %v3108, 2
        %v3110 = vmax.f32 %v3108, %v3109
        %v3111 = vrot.slane %v3110, 1
        %v3112 = vmax.f32 %v3110, %v3111
        %v3113 = vsel %vm2734, %v2297, -inf
        %v3114 = vrot.slane %v3113, 4
        %v3115 = vmax.f32 %v3113, %v3114
        %v3116 = vrot.slane %v3115, 2
        %v3117 = vmax.f32 %v3115, %v3116
        %v3118 = vrot.slane %v3117, 1
        %v3119 = vmax.f32 %v3117, %v3118
        %v3120 = vsel %vm2734, %v2299, -inf
        %v3121 = vrot.slane %v3120, 4
        %v3122 = vmax.f32 %v3120, %v3121
        %v3123 = vrot.slane %v3122, 2
        %v3124 = vmax.f32 %v3122, %v3123
        %v3125 = vrot.slane %v3124, 1
        %v3126 = vmax.f32 %v3124, %v3125
        %v3127 = vsel %vm2734, %v2307, -inf
        %v3128 = vrot.slane %v3127, 4
        %v3129 = vmax.f32 %v3127, %v3128
        %v3130 = vrot.slane %v3129, 2
        %v3131 = vmax.f32 %v3129, %v3130
        %v3132 = vrot.slane %v3131, 1
        %v3133 = vmax.f32 %v3131, %v3132
        %v3134 = vsel %vm2734, %v2315, -inf
        %v3135 = vrot.slane %v3134, 4
        %v3136 = vmax.f32 %v3134, %v3135
        %v3137 = vrot.slane %v3136, 2
        %v3138 = vmax.f32 %v3136, %v3137
        %v3139 = vrot.slane %v3138, 1
        %v3140 = vmax.f32 %v3138, %v3139
        %v3141 = vsel %vm2734, %v2314, -inf
        %v3142 = vrot.slane %v3141, 4
        %v3143 = vmax.f32 %v3141, %v3142
        %v3144 = vrot.slane %v3143, 2
        %v3145 = vmax.f32 %v3143, %v3144
        %v3146 = vrot.slane %v3145, 1
        %v3147 = vmax.f32 %v3145, %v3146
        %v3148 = vsel %vm2734, %v2316, -inf
        %v3149 = vrot.slane %v3148, 4
        %v3150 = vmax.f32 %v3148, %v3149
        %v3151 = vrot.slane %v3150, 2
        %v3152 = vmax.f32 %v3150, %v3151
        %v3153 = vrot.slane %v3152, 1
        %v3154 = vmax.f32 %v3152, %v3153
        %v3155 = vsel %vm2734, %v2324, -inf
        %v3156 = vrot.slane %v3155, 4
        %v3157 = vmax.f32 %v3155, %v3156
        %v3158 = vrot.slane %v3157, 2
        %v3159 = vmax.f32 %v3157, %v3158
        %v3160 = vrot.slane %v3159, 1
        %v3161 = vmax.f32 %v3159, %v3160
        %v3162 = vsel %vm2734, %v2332, -inf
        %v3163 = vrot.slane %v3162, 4
        %v3164 = vmax.f32 %v3162, %v3163
        %v3165 = vrot.slane %v3164, 2
        %v3166 = vmax.f32 %v3164, %v3165
        %v3167 = vrot.slane %v3166, 1
        %v3168 = vmax.f32 %v3166, %v3167
        %v3169 = vsel %vm2734, %v2331, -inf
        %v3170 = vrot.slane %v3169, 4
        %v3171 = vmax.f32 %v3169, %v3170
        %v3172 = vrot.slane %v3171, 2
        %v3173 = vmax.f32 %v3171, %v3172
        %v3174 = vrot.slane %v3173, 1
        %v3175 = vmax.f32 %v3173, %v3174
        %v3176 = vsel %vm2734, %v2333, -inf
        %v3177 = vrot.slane %v3176, 4
        %v3178 = vmax.f32 %v3176, %v3177
        %v3179 = vrot.slane %v3178, 2
        %v3180 = vmax.f32 %v3178, %v3179
        %v3181 = vrot.slane %v3180, 1
        %v3182 = vmax.f32 %v3180, %v3181
        %v3183 = vsel %vm2734, %v2341, -inf
        %v3184 = vrot.slane %v3183, 4
        %v3185 = vmax.f32 %v3183, %v3184
        %v3186 = vrot.slane %v3185, 2
        %v3187 = vmax.f32 %v3185, %v3186
        %v3188 = vrot.slane %v3187, 1
        %v3189 = vmax.f32 %v3187, %v3188
        %v3190 = vsel %vm2734, %v2349, -inf
        %v3191 = vrot.slane %v3190, 4
        %v3192 = vmax.f32 %v3190, %v3191
        %v3193 = vrot.slane %v3192, 2
        %v3194 = vmax.f32 %v3192, %v3193
        %v3195 = vrot.slane %v3194, 1
        %v3196 = vmax.f32 %v3194, %v3195
        %v3197 = vsel %vm2734, %v2348, -inf
        %v3198 = vrot.slane %v3197, 4
        %v3199 = vmax.f32 %v3197, %v3198
        %v3200 = vrot.slane %v3199, 2
        %v3201 = vmax.f32 %v3199, %v3200
        %v3202 = vrot.slane %v3201, 1
        %v3203 = vmax.f32 %v3201, %v3202
        %v3204 = vsel %vm2734, %v2350, -inf
        %v3205 = vrot.slane %v3204, 4
        %v3206 = vmax.f32 %v3204, %v3205
        %v3207 = vrot.slane %v3206, 2
        %v3208 = vmax.f32 %v3206, %v3207
        %v3209 = vrot.slane %v3208, 1
        %v3210 = vmax.f32 %v3208, %v3209
        %v3211 = vsel %vm2734, %v2358, -inf
        %v3212 = vrot.slane %v3211, 4
        %v3213 = vmax.f32 %v3211, %v3212
        %v3214 = vrot.slane %v3213, 2
        %v3215 = vmax.f32 %v3213, %v3214
        %v3216 = vrot.slane %v3215, 1
        %v3217 = vmax.f32 %v3215, %v3216
        %v3218 = vsel %vm2734, %v2366, -inf
        %v3219 = vrot.slane %v3218, 4
        %v3220 = vmax.f32 %v3218, %v3219
        %v3221 = vrot.slane %v3220, 2
        %v3222 = vmax.f32 %v3220, %v3221
        %v3223 = vrot.slane %v3222, 1
        %v3224 = vmax.f32 %v3222, %v3223
        %v3225 = vsel %vm2734, %v2365, -inf
        %v3226 = vrot.slane %v3225, 4
        %v3227 = vmax.f32 %v3225, %v3226
        %v3228 = vrot.slane %v3227, 2
        %v3229 = vmax.f32 %v3227, %v3228
        %v3230 = vrot.slane %v3229, 1
        %v3231 = vmax.f32 %v3229, %v3230
        %v3232 = vsel %vm2734, %v2367, -inf
        %v3233 = vrot.slane %v3232, 4
        %v3234 = vmax.f32 %v3232, %v3233
        %v3235 = vrot.slane %v3234, 2
        %v3236 = vmax.f32 %v3234, %v3235
        %v3237 = vrot.slane %v3236, 1
        %v3238 = vmax.f32 %v3236, %v3237
        %v3239 = vsel %vm2734, %v2375, -inf
        %v3240 = vrot.slane %v3239, 4
        %v3241 = vmax.f32 %v3239, %v3240
        %v3242 = vrot.slane %v3241, 2
        %v3243 = vmax.f32 %v3241, %v3242
        %v3244 = vrot.slane %v3243, 1
        %v3245 = vmax.f32 %v3243, %v3244
        %v3246 = vsel %vm2734, %v2383, -inf
        %v3247 = vrot.slane %v3246, 4
        %v3248 = vmax.f32 %v3246, %v3247
        %v3249 = vrot.slane %v3248, 2
        %v3250 = vmax.f32 %v3248, %v3249
        %v3251 = vrot.slane %v3250, 1
        %v3252 = vmax.f32 %v3250, %v3251
        %v3253 = vsel %vm2734, %v2382, -inf
        %v3254 = vrot.slane %v3253, 4
        %v3255 = vmax.f32 %v3253, %v3254
        %v3256 = vrot.slane %v3255, 2
        %v3257 = vmax.f32 %v3255, %v3256
        %v3258 = vrot.slane %v3257, 1
        %v3259 = vmax.f32 %v3257, %v3258
        %v3260 = vsel %vm2734, %v2384, -inf
        %v3261 = vrot.slane %v3260, 4
        %v3262 = vmax.f32 %v3260, %v3261
        %v3263 = vrot.slane %v3262, 2
        %v3264 = vmax.f32 %v3262, %v3263
        %v3265 = vrot.slane %v3264, 1
        %v3266 = vmax.f32 %v3264, %v3265
        %v3267 = vsel %vm2734, %v2392, -inf
        %v3268 = vrot.slane %v3267, 4
        %v3269 = vmax.f32 %v3267, %v3268
        %v3270 = vrot.slane %v3269, 2
        %v3271 = vmax.f32 %v3269, %v3270
        %v3272 = vrot.slane %v3271, 1
        %v3273 = vmax.f32 %v3271, %v3272
        %v3274 = vsel %vm2734, %v2400, -inf
        %v3275 = vrot.slane %v3274, 4
        %v3276 = vmax.f32 %v3274, %v3275
        %v3277 = vrot.slane %v3276, 2
        %v3278 = vmax.f32 %v3276, %v3277
        %v3279 = vrot.slane %v3278, 1
        %v3280 = vmax.f32 %v3278, %v3279
        %v3281 = vsel %vm2734, %v2399, -inf
        %v3282 = vrot.slane %v3281, 4
        %v3283 = vmax.f32 %v3281, %v3282
        %v3284 = vrot.slane %v3283, 2
        %v3285 = vmax.f32 %v3283, %v3284
        %v3286 = vrot.slane %v3285, 1
        %v3287 = vmax.f32 %v3285, %v3286
        %v3288 = vsel %vm2734, %v2401, -inf
        %v3289 = vrot.slane %v3288, 4
        %v3290 = vmax.f32 %v3288, %v3289
        %v3291 = vrot.slane %v3290, 2
        %v3292 = vmax.f32 %v3290, %v3291
        %v3293 = vrot.slane %v3292, 1
        %v3294 = vmax.f32 %v3292, %v3293
        %v3295 = vsel %vm2734, %v2409, -inf
        %v3296 = vrot.slane %v3295, 4
        %v3297 = vmax.f32 %v3295, %v3296
        %v3298 = vrot.slane %v3297, 2
        %v3299 = vmax.f32 %v3297, %v3298
        %v3300 = vrot.slane %v3299, 1
        %v3301 = vmax.f32 %v3299, %v3300
        %v3302 = vsel %vm2734, %v2417, -inf
        %v3303 = vrot.slane %v3302, 4
        %v3304 = vmax.f32 %v3302, %v3303
        %v3305 = vrot.slane %v3304, 2
        %v3306 = vmax.f32 %v3304, %v3305
        %v3307 = vrot.slane %v3306, 1
        %v3308 = vmax.f32 %v3306, %v3307
        %v3309 = vsel %vm2734, %v2416, -inf
        %v3310 = vrot.slane %v3309, 4
        %v3311 = vmax.f32 %v3309, %v3310
        %v3312 = vrot.slane %v3311, 2
        %v3313 = vmax.f32 %v3311, %v3312
        %v3314 = vrot.slane %v3313, 1
        %v3315 = vmax.f32 %v3313, %v3314
        %v3316 = vsel %vm2734, %v2418, -inf
        %v3317 = vrot.slane %v3316, 4
        %v3318 = vmax.f32 %v3316, %v3317
        %v3319 = vrot.slane %v3318, 2
        %v3320 = vmax.f32 %v3318, %v3319
        %v3321 = vrot.slane %v3320, 1
        %v3322 = vmax.f32 %v3320, %v3321
        %v3323 = vsel %vm2734, %v2426, -inf
        %v3324 = vrot.slane %v3323, 4
        %v3325 = vmax.f32 %v3323, %v3324
        %v3326 = vrot.slane %v3325, 2
        %v3327 = vmax.f32 %v3325, %v3326
        %v3328 = vrot.slane %v3327, 1
        %v3329 = vmax.f32 %v3327, %v3328
        %v3330 = vsel %vm2734, %v2434, -inf
        %v3331 = vrot.slane %v3330, 4
        %v3332 = vmax.f32 %v3330, %v3331
        %v3333 = vrot.slane %v3332, 2
        %v3334 = vmax.f32 %v3332, %v3333
        %v3335 = vrot.slane %v3334, 1
        %v3336 = vmax.f32 %v3334, %v3335
        %v3337 = vsel %vm2734, %v2433, -inf
        %v3338 = vrot.slane %v3337, 4
        %v3339 = vmax.f32 %v3337, %v3338
        %v3340 = vrot.slane %v3339, 2
        %v3341 = vmax.f32 %v3339, %v3340
        %v3342 = vrot.slane %v3341, 1
        %v3343 = vmax.f32 %v3341, %v3342
        %v3344 = vsel %vm2734, %v2435, -inf
        %v3345 = vrot.slane %v3344, 4
        %v3346 = vmax.f32 %v3344, %v3345
        %v3347 = vrot.slane %v3346, 2
        %v3348 = vmax.f32 %v3346, %v3347
        %v3349 = vrot.slane %v3348, 1
        %v3350 = vmax.f32 %v3348, %v3349
        %v3351 = vsel %vm2734, %v2443, -inf
        %v3352 = vrot.slane %v3351, 4
        %v3353 = vmax.f32 %v3351, %v3352
        %v3354 = vrot.slane %v3353, 2
        %v3355 = vmax.f32 %v3353, %v3354
        %v3356 = vrot.slane %v3355, 1
        %v3357 = vmax.f32 %v3355, %v3356
        %v3358 = vsel %vm2734, %v2451, -inf
        %v3359 = vrot.slane %v3358, 4
        %v3360 = vmax.f32 %v3358, %v3359
        %v3361 = vrot.slane %v3360, 2
        %v3362 = vmax.f32 %v3360, %v3361
        %v3363 = vrot.slane %v3362, 1
        %v3364 = vmax.f32 %v3362, %v3363
        %v3365 = vsel %vm2734, %v2450, -inf
        %v3366 = vrot.slane %v3365, 4
        %v3367 = vmax.f32 %v3365, %v3366
        %v3368 = vrot.slane %v3367, 2
        %v3369 = vmax.f32 %v3367, %v3368
        %v3370 = vrot.slane %v3369, 1
        %v3371 = vmax.f32 %v3369, %v3370
        %v3372 = vsel %vm2734, %v2452, -inf
        %v3373 = vrot.slane %v3372, 4
        %v3374 = vmax.f32 %v3372, %v3373
        %v3375 = vrot.slane %v3374, 2
        %v3376 = vmax.f32 %v3374, %v3375
        %v3377 = vrot.slane %v3376, 1
        %v3378 = vmax.f32 %v3376, %v3377
        %v3379 = vsel %vm2734, %v2460, -inf
        %v3380 = vrot.slane %v3379, 4
        %v3381 = vmax.f32 %v3379, %v3380
        %v3382 = vrot.slane %v3381, 2
        %v3383 = vmax.f32 %v3381, %v3382
        %v3384 = vrot.slane %v3383, 1
        %v3385 = vmax.f32 %v3383, %v3384
        %v3386 = vsel %vm2734, %v2468, -inf
        %v3387 = vrot.slane %v3386, 4
        %v3388 = vmax.f32 %v3386, %v3387
        %v3389 = vrot.slane %v3388, 2
        %v3390 = vmax.f32 %v3388, %v3389
        %v3391 = vrot.slane %v3390, 1
        %v3392 = vmax.f32 %v3390, %v3391
        %v3393 = vsel %vm2734, %v2467, -inf
        %v3394 = vrot.slane %v3393, 4
        %v3395 = vmax.f32 %v3393, %v3394
        %v3396 = vrot.slane %v3395, 2
        %v3397 = vmax.f32 %v3395, %v3396
        %v3398 = vrot.slane %v3397, 1
        %v3399 = vmax.f32 %v3397, %v3398
        %v3400 = vsel %vm2734, %v2469, -inf
        %v3401 = vrot.slane %v3400, 4
        %v3402 = vmax.f32 %v3400, %v3401
        %v3403 = vrot.slane %v3402, 2
        %v3404 = vmax.f32 %v3402, %v3403
        %v3405 = vrot.slane %v3404, 1
        %v3406 = vmax.f32 %v3404, %v3405
        %v3407 = vsel %vm2734, %v2477, -inf
        %v3408 = vrot.slane %v3407, 4
        %v3409 = vmax.f32 %v3407, %v3408
        %v3410 = vrot.slane %v3409, 2
        %v3411 = vmax.f32 %v3409, %v3410
        %v3412 = vrot.slane %v3411, 1
        %v3413 = vmax.f32 %v3411, %v3412
        %v3414 = vsel %vm2734, %v2485, -inf
        %v3415 = vrot.slane %v3414, 4
        %v3416 = vmax.f32 %v3414, %v3415
        %v3417 = vrot.slane %v3416, 2
        %v3418 = vmax.f32 %v3416, %v3417
        %v3419 = vrot.slane %v3418, 1
        %v3420 = vmax.f32 %v3418, %v3419
        %v3421 = vsel %vm2734, %v2484, -inf
        %v3422 = vrot.slane %v3421, 4
        %v3423 = vmax.f32 %v3421, %v3422
        %v3424 = vrot.slane %v3423, 2
        %v3425 = vmax.f32 %v3423, %v3424
        %v3426 = vrot.slane %v3425, 1
        %v3427 = vmax.f32 %v3425, %v3426
        %v3428 = vsel %vm2734, %v2486, -inf
        %v3429 = vrot.slane %v3428, 4
        %v3430 = vmax.f32 %v3428, %v3429
        %v3431 = vrot.slane %v3430, 2
        %v3432 = vmax.f32 %v3430, %v3431
        %v3433 = vrot.slane %v3432, 1
        %v3434 = vmax.f32 %v3432, %v3433
        %v3435 = vsel %vm2734, %v2494, -inf
        %v3436 = vrot.slane %v3435, 4
        %v3437 = vmax.f32 %v3435, %v3436
        %v3438 = vrot.slane %v3437, 2
        %v3439 = vmax.f32 %v3437, %v3438
        %v3440 = vrot.slane %v3439, 1
        %v3441 = vmax.f32 %v3439, %v3440
        %v3442 = vsel %vm2734, %v2502, -inf
        %v3443 = vrot.slane %v3442, 4
        %v3444 = vmax.f32 %v3442, %v3443
        %v3445 = vrot.slane %v3444, 2
        %v3446 = vmax.f32 %v3444, %v3445
        %v3447 = vrot.slane %v3446, 1
        %v3448 = vmax.f32 %v3446, %v3447
        %v3449 = vsel %vm2734, %v2501, -inf
        %v3450 = vrot.slane %v3449, 4
        %v3451 = vmax.f32 %v3449, %v3450
        %v3452 = vrot.slane %v3451, 2
        %v3453 = vmax.f32 %v3451, %v3452
        %v3454 = vrot.slane %v3453, 1
        %v3455 = vmax.f32 %v3453, %v3454
        %v3456 = vsel %vm2734, %v2503, -inf
        %v3457 = vrot.slane %v3456, 4
        %v3458 = vmax.f32 %v3456, %v3457
        %v3459 = vrot.slane %v3458, 2
        %v3460 = vmax.f32 %v3458, %v3459
        %v3461 = vrot.slane %v3460, 1
        %v3462 = vmax.f32 %v3460, %v3461
        %v3463 = vsel %vm2734, %v2511, -inf
        %v3464 = vrot.slane %v3463, 4
        %v3465 = vmax.f32 %v3463, %v3464
        %v3466 = vrot.slane %v3465, 2
        %v3467 = vmax.f32 %v3465, %v3466
        %v3468 = vrot.slane %v3467, 1
        %v3469 = vmax.f32 %v3467, %v3468
        %v3470 = vsel %vm2734, %v2519, -inf
        %v3471 = vrot.slane %v3470, 4
        %v3472 = vmax.f32 %v3470, %v3471
        %v3473 = vrot.slane %v3472, 2
        %v3474 = vmax.f32 %v3472, %v3473
        %v3475 = vrot.slane %v3474, 1
        %v3476 = vmax.f32 %v3474, %v3475
        %v3477 = vsel %vm2734, %v2518, -inf
        %v3478 = vrot.slane %v3477, 4
        %v3479 = vmax.f32 %v3477, %v3478
        %v3480 = vrot.slane %v3479, 2
        %v3481 = vmax.f32 %v3479, %v3480
        %v3482 = vrot.slane %v3481, 1
        %v3483 = vmax.f32 %v3481, %v3482
        %v3484 = vsel %vm2734, %v2520, -inf
        %v3485 = vrot.slane %v3484, 4
        %v3486 = vmax.f32 %v3484, %v3485
        %v3487 = vrot.slane %v3486, 2
        %v3488 = vmax.f32 %v3486, %v3487
        %v3489 = vrot.slane %v3488, 1
        %v3490 = vmax.f32 %v3488, %v3489
        %v3491 = vsel %vm2734, %v2528, -inf
        %v3492 = vrot.slane %v3491, 4
        %v3493 = vmax.f32 %v3491, %v3492
        %v3494 = vrot.slane %v3493, 2
        %v3495 = vmax.f32 %v3493, %v3494
        %v3496 = vrot.slane %v3495, 1
        %v3497 = vmax.f32 %v3495, %v3496
        %v3498 = vsel %vm2734, %v2536, -inf
        %v3499 = vrot.slane %v3498, 4
        %v3500 = vmax.f32 %v3498, %v3499
        %v3501 = vrot.slane %v3500, 2
        %v3502 = vmax.f32 %v3500, %v3501
        %v3503 = vrot.slane %v3502, 1
        %v3504 = vmax.f32 %v3502, %v3503
        %v3505 = vsel %vm2734, %v2535, -inf
        %v3506 = vrot.slane %v3505, 4
        %v3507 = vmax.f32 %v3505, %v3506
        %v3508 = vrot.slane %v3507, 2
        %v3509 = vmax.f32 %v3507, %v3508
        %v3510 = vrot.slane %v3509, 1
        %v3511 = vmax.f32 %v3509, %v3510
        %v3512 = vsel %vm2734, %v2537, -inf
        %v3513 = vrot.slane %v3512, 4
        %v3514 = vmax.f32 %v3512, %v3513
        %v3515 = vrot.slane %v3514, 2
        %v3516 = vmax.f32 %v3514, %v3515
        %v3517 = vrot.slane %v3516, 1
        %v3518 = vmax.f32 %v3516, %v3517
        %v3519 = vsel %vm2734, %v2545, -inf
        %v3520 = vrot.slane %v3519, 4
        %v3521 = vmax.f32 %v3519, %v3520
        %v3522 = vrot.slane %v3521, 2
        %v3523 = vmax.f32 %v3521, %v3522
        %v3524 = vrot.slane %v3523, 1
        %v3525 = vmax.f32 %v3523, %v3524
        %v3526 = vsel %vm2734, %v2553, -inf
        %v3527 = vrot.slane %v3526, 4
        %v3528 = vmax.f32 %v3526, %v3527
        %v3529 = vrot.slane %v3528, 2
        %v3530 = vmax.f32 %v3528, %v3529
        %v3531 = vrot.slane %v3530, 1
        %v3532 = vmax.f32 %v3530, %v3531
        %v3533 = vsel %vm2734, %v2552, -inf
        %v3534 = vrot.slane %v3533, 4
        %v3535 = vmax.f32 %v3533, %v3534
        %v3536 = vrot.slane %v3535, 2
        %v3537 = vmax.f32 %v3535, %v3536
        %v3538 = vrot.slane %v3537, 1
        %v3539 = vmax.f32 %v3537, %v3538
        %v3540 = vsel %vm2734, %v2554, -inf
        %v3541 = vrot.slane %v3540, 4
        %v3542 = vmax.f32 %v3540, %v3541
        %v3543 = vrot.slane %v3542, 2
        %v3544 = vmax.f32 %v3542, %v3543
        %v3545 = vrot.slane %v3544, 1
        %v3546 = vmax.f32 %v3544, %v3545
        %v3547 = vsel %vm2734, %v2562, -inf
        %v3548 = vrot.slane %v3547, 4
        %v3549 = vmax.f32 %v3547, %v3548
        %v3550 = vrot.slane %v3549, 2
        %v3551 = vmax.f32 %v3549, %v3550
        %v3552 = vrot.slane %v3551, 1
        %v3553 = vmax.f32 %v3551, %v3552
        %v3554 = vsel %vm2734, %v2570, -inf
        %v3555 = vrot.slane %v3554, 4
        %v3556 = vmax.f32 %v3554, %v3555
        %v3557 = vrot.slane %v3556, 2
        %v3558 = vmax.f32 %v3556, %v3557
        %v3559 = vrot.slane %v3558, 1
        %v3560 = vmax.f32 %v3558, %v3559
        %v3561 = vsel %vm2734, %v2569, -inf
        %v3562 = vrot.slane %v3561, 4
        %v3563 = vmax.f32 %v3561, %v3562
        %v3564 = vrot.slane %v3563, 2
        %v3565 = vmax.f32 %v3563, %v3564
        %v3566 = vrot.slane %v3565, 1
        %v3567 = vmax.f32 %v3565, %v3566
        %v3568 = vsel %vm2734, %v2571, -inf
        %v3569 = vrot.slane %v3568, 4
        %v3570 = vmax.f32 %v3568, %v3569
        %v3571 = vrot.slane %v3570, 2
        %v3572 = vmax.f32 %v3570, %v3571
        %v3573 = vrot.slane %v3572, 1
        %v3574 = vmax.f32 %v3572, %v3573
        %v3575 = vsel %vm2734, %v2579, -inf
        %v3576 = vrot.slane %v3575, 4
        %v3577 = vmax.f32 %v3575, %v3576
        %v3578 = vrot.slane %v3577, 2
        %v3579 = vmax.f32 %v3577, %v3578
        %v3580 = vrot.slane %v3579, 1
        %v3581 = vmax.f32 %v3579, %v3580
        %v3582 = vsel %vm2734, %v2587, -inf
        %v3583 = vrot.slane %v3582, 4
        %v3584 = vmax.f32 %v3582, %v3583
        %v3585 = vrot.slane %v3584, 2
        %v3586 = vmax.f32 %v3584, %v3585
        %v3587 = vrot.slane %v3586, 1
        %v3588 = vmax.f32 %v3586, %v3587
        %v3589 = vsel %vm2734, %v2586, -inf
        %v3590 = vrot.slane %v3589, 4
        %v3591 = vmax.f32 %v3589, %v3590
        %v3592 = vrot.slane %v3591, 2
        %v3593 = vmax.f32 %v3591, %v3592
        %v3594 = vrot.slane %v3593, 1
        %v3595 = vmax.f32 %v3593, %v3594
        %v3596 = vsel %vm2734, %v2588, -inf
        %v3597 = vrot.slane %v3596, 4
        %v3598 = vmax.f32 %v3596, %v3597
        %v3599 = vrot.slane %v3598, 2
        %v3600 = vmax.f32 %v3598, %v3599
        %v3601 = vrot.slane %v3600, 1
        %v3602 = vmax.f32 %v3600, %v3601
        %v3603 = vsel %vm2734, %v2596, -inf
        %v3604 = vrot.slane %v3603, 4
        %v3605 = vmax.f32 %v3603, %v3604
        %v3606 = vrot.slane %v3605, 2
        %v3607 = vmax.f32 %v3605, %v3606
        %v3608 = vrot.slane %v3607, 1
        %v3609 = vmax.f32 %v3607, %v3608
        %v3610 = vsel %vm2734, %v2604, -inf
        %v3611 = vrot.slane %v3610, 4
        %v3612 = vmax.f32 %v3610, %v3611
        %v3613 = vrot.slane %v3612, 2
        %v3614 = vmax.f32 %v3612, %v3613
        %v3615 = vrot.slane %v3614, 1
        %v3616 = vmax.f32 %v3614, %v3615
        %v3617 = vsel %vm2734, %v2603, -inf
        %v3618 = vrot.slane %v3617, 4
        %v3619 = vmax.f32 %v3617, %v3618
        %v3620 = vrot.slane %v3619, 2
        %v3621 = vmax.f32 %v3619, %v3620
        %v3622 = vrot.slane %v3621, 1
        %v3623 = vmax.f32 %v3621, %v3622
        %v3624 = vsel %vm2734, %v2605, -inf
        %v3625 = vrot.slane %v3624, 4
        %v3626 = vmax.f32 %v3624, %v3625
        %v3627 = vrot.slane %v3626, 2
        %v3628 = vmax.f32 %v3626, %v3627
        %v3629 = vrot.slane %v3628, 1
        %v3630 = vmax.f32 %v3628, %v3629
        %v3631 = vmax.f32 %v2741, %v2797
        %v3632 = vmax.f32 %v2748, %v2804
        %v3633 = vmax.f32 %v2755, %v2811
        %v3634 = vmax.f32 %v2762, %v2818
        %v3635 = vmax.f32 %v2769, %v2825
        %v3636 = vmax.f32 %v2776, %v2832
        %v3637 = vmax.f32 %v2783, %v2839
        %v3638 = vmax.f32 %v2790, %v2846
        %v3639 = vmax.f32 %v2853, %v2909
        %v3640 = vmax.f32 %v2860, %v2916
        %v3641 = vmax.f32 %v2867, %v2923
        %v3642 = vmax.f32 %v2874, %v2930
        %v3643 = vmax.f32 %v2881, %v2937
        %v3644 = vmax.f32 %v2888, %v2944
        %v3645 = vmax.f32 %v2895, %v2951
        %v3646 = vmax.f32 %v2902, %v2958
        %v3647 = vmax.f32 %v2965, %v3021
        %v3648 = vmax.f32 %v2972, %v3028
        %v3649 = vmax.f32 %v2979, %v3035
        %v3650 = vmax.f32 %v2986, %v3042
        %v3651 = vmax.f32 %v2993, %v3049
        %v3652 = vmax.f32 %v3000, %v3056
        %v3653 = vmax.f32 %v3007, %v3063
        %v3654 = vmax.f32 %v3014, %v3070
        %v3655 = vmax.f32 %v3077, %v3133
        %v3656 = vmax.f32 %v3084, %v3140
        %v3657 = vmax.f32 %v3091, %v3147
        %v3658 = vmax.f32 %v3098, %v3154
        %v3659 = vmax.f32 %v3105, %v3161
        %v3660 = vmax.f32 %v3112, %v3168
        %v3661 = vmax.f32 %v3119, %v3175
        %v3662 = vmax.f32 %v3126, %v3182
        %v3663 = vmax.f32 %v3189, %v3245
        %v3664 = vmax.f32 %v3196, %v3252
        %v3665 = vmax.f32 %v3203, %v3259
        %v3666 = vmax.f32 %v3210, %v3266
        %v3667 = vmax.f32 %v3217, %v3273
        %v3668 = vmax.f32 %v3224, %v3280
        %v3669 = vmax.f32 %v3231, %v3287
        %v3670 = vmax.f32 %v3238, %v3294
        %v3671 = vmax.f32 %v3301, %v3357
        %v3672 = vmax.f32 %v3308, %v3364
        %v3673 = vmax.f32 %v3315, %v3371
        %v3674 = vmax.f32 %v3322, %v3378
        %v3675 = vmax.f32 %v3329, %v3385
        %v3676 = vmax.f32 %v3336, %v3392
        %v3677 = vmax.f32 %v3343, %v3399
        %v3678 = vmax.f32 %v3350, %v3406
        %v3679 = vmax.f32 %v3413, %v3469
        %v3680 = vmax.f32 %v3420, %v3476
        %v3681 = vmax.f32 %v3427, %v3483
        %v3682 = vmax.f32 %v3434, %v3490
        %v3683 = vmax.f32 %v3441, %v3497
        %v3684 = vmax.f32 %v3448, %v3504
        %v3685 = vmax.f32 %v3455, %v3511
        %v3686 = vmax.f32 %v3462, %v3518
        %v3687 = vmax.f32 %v3525, %v3581
        %v3688 = vmax.f32 %v3532, %v3588
        %v3689 = vmax.f32 %v3539, %v3595
        %v3690 = vmax.f32 %v3546, %v3602
        %v3691 = vmax.f32 %v3553, %v3609
        %v3692 = vmax.f32 %v3560, %v3616
        %v3693 = vmax.f32 %v3567, %v3623
        %v3694 = vmax.f32 %v3574, %v3630
        %vm3759 = vcmask 1041409
        %v3760 = vsel %vm3759, %v3632, %v3631
        %vm3761 = vcmask 1042434
        %v3762 = vsel %vm3761, %v3633, %v3760
        %vm3763 = vcmask 1043459
        %v3764 = vsel %vm3763, %v3634, %v3762
        %vm3765 = vcmask 1044484
        %v3766 = vsel %vm3765, %v3635, %v3764
        %vm3767 = vcmask 1045509
        %v3768 = vsel %vm3767, %v3636, %v3766
        %vm3769 = vcmask 1046534
        %v3770 = vsel %vm3769, %v3637, %v3768
        %vm3771 = vcmask 1047559
        %v3772 = vsel %vm3771, %v3638, %v3770
        %v3773 = vsel %vm3759, %v3640, %v3639
        %v3774 = vsel %vm3761, %v3641, %v3773
        %v3775 = vsel %vm3763, %v3642, %v3774
        %v3776 = vsel %vm3765, %v3643, %v3775
        %v3777 = vsel %vm3767, %v3644, %v3776
        %v3778 = vsel %vm3769, %v3645, %v3777
        %v3779 = vsel %vm3771, %v3646, %v3778
        %v3780 = vsel %vm3759, %v3648, %v3647
        %v3781 = vsel %vm3761, %v3649, %v3780
        %v3782 = vsel %vm3763, %v3650, %v3781
        %v3783 = vsel %vm3765, %v3651, %v3782
        %v3784 = vsel %vm3767, %v3652, %v3783
        %v3785 = vsel %vm3769, %v3653, %v3784
        %v3786 = vsel %vm3771, %v3654, %v3785
        %v3787 = vsel %vm3759, %v3656, %v3655
        %v3788 = vsel %vm3761, %v3657, %v3787
        %v3789 = vsel %vm3763, %v3658, %v3788
        %v3790 = vsel %vm3765, %v3659, %v3789
        %v3791 = vsel %vm3767, %v3660, %v3790
        %v3792 = vsel %vm3769, %v3661, %v3791
        %v3793 = vsel %vm3771, %v3662, %v3792
        %v3794 = vsel %vm3759, %v3664, %v3663
        %v3795 = vsel %vm3761, %v3665, %v3794
        %v3796 = vsel %vm3763, %v3666, %v3795
        %v3797 = vsel %vm3765, %v3667, %v3796
        %v3798 = vsel %vm3767, %v3668, %v3797
        %v3799 = vsel %vm3769, %v3669, %v3798
        %v3800 = vsel %vm3771, %v3670, %v3799
        %v3801 = vsel %vm3759, %v3672, %v3671
        %v3802 = vsel %vm3761, %v3673, %v3801
        %v3803 = vsel %vm3763, %v3674, %v3802
        %v3804 = vsel %vm3765, %v3675, %v3803
        %v3805 = vsel %vm3767, %v3676, %v3804
        %v3806 = vsel %vm3769, %v3677, %v3805
        %v3807 = vsel %vm3771, %v3678, %v3806
        %v3808 = vsel %vm3759, %v3680, %v3679
        %v3809 = vsel %vm3761, %v3681, %v3808
        %v3810 = vsel %vm3763, %v3682, %v3809
        %v3811 = vsel %vm3765, %v3683, %v3810
        %v3812 = vsel %vm3767, %v3684, %v3811
        %v3813 = vsel %vm3769, %v3685, %v3812
        %v3814 = vsel %vm3771, %v3686, %v3813
        %v3815 = vsel %vm3759, %v3688, %v3687
        %v3816 = vsel %vm3761, %v3689, %v3815
        %v3817 = vsel %vm3763, %v3690, %v3816
        %v3818 = vsel %vm3765, %v3691, %v3817
        %v3819 = vsel %vm3767, %v3692, %v3818
        %v3820 = vsel %vm3769, %v3693, %v3819
        %v3821 = vsel %vm3771, %v3694, %v3820
        %3830 = vst [vmem:[%s230] sm:$0xff] %v3772
        %3831 = vst [vmem:[%s230 + $0x8] sm:$0xff] %v3779
        %3832 = vst [vmem:[%s230 + $0x10] sm:$0xff] %v3786
        %3833 = vst [vmem:[%s230 + $0x18] sm:$0xff] %v3793
        %3834 = vst [vmem:[%s230 + $0x20] sm:$0xff] %v3800
        %3835 = vst [vmem:[%s230 + $0x28] sm:$0xff] %v3807
        %3836 = vst [vmem:[%s230 + $0x30] sm:$0xff] %v3814
        %3837 = vst [vmem:[%s230 + $0x38] sm:$0xff] %v3821
        %s3838 = sand.u32 %s119, 1
        %s3839 = scalar_lea.sflag [#allocation4], %s3838
        %s3840 = sand.u32 %s119, 1
        %s3841 = smul.addr %s3840, 64
        %s3842 = scalar_lea.vmem [#allocation7], %s3841
        // Predicated region
        $region45: #{tpu_custom_call.1} parent=35 // pred_check
          %p3843 = pneg %p129
        $region46: #{tpu_custom_call.1} parent=35 // pred_check_branch
          %3845 = sbr.rel (%p3843) target = $region48
        $region47: #{tpu_custom_call.1} parent=35 // pred_region
          %s3847 = ssub.s32 1024, 1024
          %3848 = vsyncadd %s3839, %s3847
          %s3849 = smul.addr %s22, 8
          %s3850 = smul.addr %s3849, 128
          %s3851 = scalar_lea.hbm %s4, %s3850
          %s3852 = sshll.u32 %s3842, 4
          %s3853 = int_to_ptr.vmem [resolvable:$true] %s3852
          %3858 = dma.vmem_to_hbm [thread:$0]  %s3853, 1024, %s3851, %s3839, 128, 128, 8
        $region48: #{tpu_custom_call.1} parent=35 // pred_fallthru
          _
      $region36: #{tpu_custom_call.1} parent=5 // pred_fallthru
        _
      %p3859 = scmp.le.s32.totalorder 2, %s17
      // Predicated region
      $region49: #{tpu_custom_call.1} parent=5 // pred_check
        %p3860 = pneg %p3859
      $region50: #{tpu_custom_call.1} parent=5 // pred_check_branch
        %3862 = sbr.rel (%p3860) target = $region52
      $region51: #{tpu_custom_call.1} parent=5 // pred_region
        %s3863 = ssub.s32 %s17, 2
        // Predicated region
        $region53: #{tpu_custom_call.1} parent=51 // pred_check
          %p3864 = pneg %p135
        $region54: #{tpu_custom_call.1} parent=51 // pred_check_branch
          %3866 = sbr.rel (%p3864) target = $region56
        $region55: #{tpu_custom_call.1} parent=51 // pred_region
          %s3867 = sand.u32 %s120, 1
          %s3868 = scalar_lea.sflag [#allocation4], %s3867
          %s3869 = sand.u32 %s120, 1
          %s3870 = smul.addr %s3869, 64
          %s3871 = scalar_lea.vmem [#allocation7], %s3870
          %3872 = dma.done %s3868, 1024
        $region56: #{tpu_custom_call.1} parent=51 // pred_fallthru
          _
      $region52: #{tpu_custom_call.1} parent=5 // pred_fallthru
        _
    $region6: #{tpu_custom_call.1} parent=1 // loop_footer
      %s21 = sadd.s32 1, %s17
    $region7: #{tpu_custom_call.1} parent=1 // loop_footer_branch
      %16 = sbr.rel target = $region3
    $region8: #{tpu_custom_call.1} parent=1 // loop_exit
      _
    %3873 = vsyncpa [#allocation3], 1
    %s3874 = scalar_lea.sflag [#allocation3], 1
    %3875 = vsyncpa %s3874, 1
    %3876 = vsyncpa [#allocation6], 1
    %3877 = vsyncpa [#allocation4], 1
    %s3878 = scalar_lea.sflag [#allocation4], 1
    %3879 = vsyncpa %s3878, 1

</llo_original>
